<compile_context>
chip_gen: v7x
topology: tpu7x:2x2x1
jax: 0.10.0
libtpu: 0.0.40
codegen_flags: <defaults>
</compile_context>

<pallas_src>
import numpy as np

import jax
import jax.numpy as jnp
from jax.experimental import pallas as pl
from jax.experimental.pallas import tpu as pltpu


# ----------------------------------------------------------------------------
# One-time (prepare-time) construction of folded linear operators
# ----------------------------------------------------------------------------
def _build_selection(h_in, w_in, stride, pad, up):
    """9 x [H_in*W_in, H_out*W_out] 0/1 matrices.

    Column (ho, wo) of tap (kh, kw) selects the input pixel a 3x3 conv reads,
    folding zero padding, stride and nearest-`up`x upsampling.  A zero column
    encodes a padded (zero) read.
    """
    h_up, w_up = h_in * up, w_in * up
    h_out = (h_up + 2 * pad - 3) // stride + 1
    w_out = (w_up + 2 * pad - 3) // stride + 1
    sel = np.zeros((9, h_in * w_in, h_out * w_out), np.float32)
    for kh in range(3):
        for kw in range(3):
            t = kh * 3 + kw
            for ho in range(h_out):
                hu = ho * stride + kh - pad
                if not 0 <= hu < h_up:
                    continue
                hi = hu // up
                for wo in range(w_out):
                    wu = wo * stride + kw - pad
                    if not 0 <= wu < w_up:
                        continue
                    wi = wu // up
                    sel[t, hi * w_in + wi, ho * w_out + wo] = 1.0
    return sel


def fold_bn(gamma, beta, running_mean, running_var, eps=1e-5):
    """Eval-mode BatchNorm folded into per-channel scale/shift."""
    scale = gamma / jnp.sqrt(running_var + eps)
    shift = beta - running_mean * scale
    return scale, shift


def prepare_operands(p, spatial=16):
    """Fold every conv into a dense matrix on NCHW-flattened activations.

    Runs ONCE (outside the jitted forward).  Returns a tuple of device arrays
    in the exact order the kernel expects.
    """
    hh = spatial
    h1, h2 = hh // 2, hh // 4
    bf16 = jnp.bfloat16

    def conv_mat(w, h_in, stride, pad, up):
        # w: [cout, cin, 3, 3] -> M[ci*HWi + i, co*HWo + o]
        cout, cin = int(w.shape[0]), int(w.shape[1])
        sel = jnp.asarray(_build_selection(h_in, h_in, stride, pad, up))
        hw_i, hw_o = int(sel.shape[1]), int(sel.shape[2])
        wt = w.reshape(cout, cin, 9)                       # tap = kh*3 + kw
        m = jnp.einsum("act,tio->ciao", wt, sel)           # [cin, hwi, cout, hwo]
        return m.reshape(cin * hw_i, cout * hw_o).astype(bf16), hw_o

    def row(v, reps):                                      # per-channel -> per-feature row
        return jnp.repeat(v, reps)[None, :].astype(jnp.float32)

    m1, o1 = conv_mat(p["enc_w1"], hh, 2, 1, 1)            # 16x16 -> 8x8
    m2, o2 = conv_mat(p["enc_w2"], h1, 2, 1, 1)            # 8x8   -> 4x4
    m3, o3 = conv_mat(p["dec_w1"], h2, 1, 1, 2)            # up2x  -> 8x8
    m4, o4 = conv_mat(p["dec_w2"], h1, 1, 1, 2)            # up2x  -> 16x16

    sc1, sh1 = fold_bn(p["enc_bn1_g"], p["enc_bn1_b"], p["enc_bn1_m"], p["enc_bn1_v"])
    sc2, sh2 = fold_bn(p["enc_bn2_g"], p["enc_bn2_b"], p["enc_bn2_m"], p["enc_bn2_v"])
    sc3, sh3 = fold_bn(p["dec_bn1_g"], p["dec_bn1_b"], p["dec_bn1_m"], p["dec_bn1_v"])

    b1, g1, t1 = row(p["enc_b1"], o1), row(sc1, o1), row(sh1, o1)
    b2, g2, t2 = row(p["enc_b2"], o2), row(sc2, o2), row(sh2, o2)
    b3, g3, t3 = row(p["dec_b1"], o3), row(sc3, o3), row(sh3, o3)
    b4 = row(p["dec_b2"], o4)

    # merged (mu | logvar) head; fc weights already index NCHW-flat activations
    wfc = jnp.concatenate([p["fc_mu_w"], p["fc_lv_w"]], axis=1).astype(bf16)
    bfc = jnp.concatenate([p["fc_mu_b"], p["fc_lv_b"]])[None, :].astype(jnp.float32)
    wdf = p["dec_fc_w"].astype(bf16)
    bdf = p["dec_fc_b"][None, :].astype(jnp.float32)

    return (m1, b1, g1, t1,
            m2, b2, g2, t2,
            wfc, bfc,
            wdf, bdf,
            m3, b3, g3, t3,
            m4, b4)


# ----------------------------------------------------------------------------
# The fused Pallas kernel: whole VAE forward, everything VMEM-resident
# ----------------------------------------------------------------------------
def _vae_kernel(x_ref, eps_ref,
                m1_ref, b1_ref, g1_ref, t1_ref,
                m2_ref, b2_ref, g2_ref, t2_ref,
                wfc_ref, bfc_ref,
                wdf_ref, bdf_ref,
                m3_ref, b3_ref, g3_ref, t3_ref,
                m4_ref, b4_ref,
                dec_ref, lat_ref):
    latent = eps_ref.shape[-1]

    def mm(a, w_ref):                     # bf16 MXU matmul, f32 accumulation
        return jnp.dot(a.astype(jnp.bfloat16), w_ref[...],
                       preferred_element_type=jnp.float32)

    def conv_block(a, m_ref, b_ref, g_ref, t_ref):
        y = jnp.maximum(mm(a, m_ref) + b_ref[...], 0.0)    # conv + bias + ReLU
        return y * g_ref[...] + t_ref[...]                 # eval-mode BN after ReLU

    x = x_ref[0]                          # [bm, Cin*H*W]   (flat NCHW, lanes)
    eps = eps_ref[0]                      # [bm, latent]

    # ---------------- encoder ----------------
    a1 = conv_block(x, m1_ref, b1_ref, g1_ref, t1_ref)
    a2 = conv_block(a1, m2_ref, b2_ref, g2_ref, t2_ref)

    ml = mm(a2, wfc_ref) + bfc_ref[...]   # [bm, 2*latent]  (mu | logvar)
    mu = ml[:, :latent]
    logvar = ml[:, latent:]
    z = mu + jnp.exp(0.5 * logvar) * eps  # reparameterize
    lat_ref[0] = jnp.concatenate([z, mu, logvar], axis=-1)  # packed [bm, 3*latent]

    # ---------------- decoder ----------------
    h = jnp.maximum(mm(z, wdf_ref) + bdf_ref[...], 0.0)     # fc + ReLU
    d1 = conv_block(h, m3_ref, b3_ref, g3_ref, t3_ref)      # up2x conv ReLU BN
    dec_ref[0] = jax.nn.sigmoid(mm(d1, m4_ref) + b4_ref[...])  # up2x conv sigmoid


# ----------------------------------------------------------------------------
# VAE forward: one pallas_call, batch on a "parallel" grid axis
# ----------------------------------------------------------------------------
def _pick_block_rows(n):
    # Keep >=2 grid programs so v7x's second TensorCore gets work.
    for bm in (8, 4, 2):
        if n % bm == 0 and n // bm >= 2:
            return bm
    return 1


@jax.jit
def vae_forward(prepared, x, eps):
    """Mirrors VAE.forward: returns (decoded, z, mu, logvar)."""
    (m1, b1, g1, t1, m2, b2, g2, t2, wfc, bfc, wdf, bdf,
     m3, b3, g3, t3, m4, b4) = prepared
    n, cin, hh, ww = x.shape
    latent = eps.shape[-1]
    fin = cin * hh * ww
    fout = m4.shape[1]
    outc = fout // (hh * ww)

    bm = _pick_block_rows(n)
    gb = n // bm

    x3 = x.reshape(gb, bm, fin).astype(jnp.float32)        # NCHW flatten, lanes
    eps3 = eps.reshape(gb, bm, latent).astype(jnp.float32)

    def row_spec(f):
        return pl.BlockSpec((1, bm, f), lambda i: (i, 0, 0))

    def full_spec(a):
        return pl.BlockSpec(a.shape, lambda i: (0, 0))      # constant -> DMA'd once

    dec3, lat3 = pl.pallas_call(
        _vae_kernel,
        grid=(gb,),
        in_specs=[row_spec(fin), row_spec(latent)] + [full_spec(a) for a in prepared],
        out_specs=(row_spec(fout), row_spec(3 * latent)),
        out_shape=(
            jax.ShapeDtypeStruct((gb, bm, fout), jnp.float32),      # decoded (lane-dense)
            jax.ShapeDtypeStruct((gb, bm, 3 * latent), jnp.float32),  # z|mu|logvar packed
        ),
        compiler_params=pltpu.CompilerParams(
            dimension_semantics=("parallel",)),
    )(x3, eps3, *prepared)

    decoded = dec3.reshape(n, outc, hh, ww)                 # NCHW
    lat = lat3.reshape(n, 3 * latent)
    z = lat[:, :latent]
    mu = lat[:, latent:2 * latent]
    logvar = lat[:, 2 * latent:]
    return decoded, z, mu, logvar


# ----------------------------------------------------------------------------
# Parameters (same deterministic construction / shapes as before)
# ----------------------------------------------------------------------------
def make_params(key):
    ks = jax.random.split(key, 16)
    p = {}

    def w(k, shape, fan_in):
        return jax.random.normal(k, shape, jnp.float32) / jnp.sqrt(fan_in)

    # encoder: Conv(4->8, s2) ReLU BN ; Conv(8->16, s2) ReLU BN ; fc_mu/fc_logvar
    p["enc_w1"] = w(ks[0], (8, 4, 3, 3), 4 * 9)
    p["enc_b1"] = jnp.zeros((8,), jnp.float32)
    p["enc_bn1_g"] = jnp.ones((8,), jnp.float32) * 1.1
    p["enc_bn1_b"] = jnp.ones((8,), jnp.float32) * 0.05
    p["enc_bn1_m"] = jnp.zeros((8,), jnp.float32)
    p["enc_bn1_v"] = jnp.ones((8,), jnp.float32)

    p["enc_w2"] = w(ks[1], (16, 8, 3, 3), 8 * 9)
    p["enc_b2"] = jnp.zeros((16,), jnp.float32)
    p["enc_bn2_g"] = jnp.ones((16,), jnp.float32) * 0.9
    p["enc_bn2_b"] = jnp.ones((16,), jnp.float32) * -0.05
    p["enc_bn2_m"] = jnp.zeros((16,), jnp.float32)
    p["enc_bn2_v"] = jnp.ones((16,), jnp.float32)

    flat = 16 * 4 * 4  # 256
    latent = 32
    p["fc_mu_w"] = w(ks[2], (flat, latent), flat)
    p["fc_mu_b"] = jnp.zeros((latent,), jnp.float32)
    p["fc_lv_w"] = w(ks[3], (flat, latent), flat)
    p["fc_lv_b"] = jnp.zeros((latent,), jnp.float32)

    # decoder: fc(32->256) ReLU ; up2x Conv(16->8) ReLU BN ; up2x Conv(8->4) Sigmoid
    p["dec_fc_w"] = w(ks[4], (latent, flat), latent)
    p["dec_fc_b"] = jnp.zeros((flat,), jnp.float32)

    p["dec_w1"] = w(ks[5], (8, 16, 3, 3), 16 * 9)
    p["dec_b1"] = jnp.zeros((8,), jnp.float32)
    p["dec_bn1_g"] = jnp.ones((8,), jnp.float32) * 1.05
    p["dec_bn1_b"] = jnp.ones((8,), jnp.float32) * 0.02
    p["dec_bn1_m"] = jnp.zeros((8,), jnp.float32)
    p["dec_bn1_v"] = jnp.ones((8,), jnp.float32)

    p["dec_w2"] = w(ks[6], (4, 8, 3, 3), 8 * 9)
    p["dec_b2"] = jnp.zeros((4,), jnp.float32)
    return p


if __name__ == "__main__":
    key = jax.random.PRNGKey(0)
    k_x, k_eps, k_p = jax.random.split(key, 3)

    batch, channels, spatial, latent = 2, 4, 16, 32
    x = jax.random.normal(k_x, (batch, channels, spatial, spatial), jnp.float32)
    eps = jax.random.normal(k_eps, (batch, latent), jnp.float32)
    params = make_params(k_p)

    # One-time weight preprocessing (hoisted out of the per-call jit).
    prepared = prepare_operands(params, spatial=spatial)
    jax.block_until_ready(prepared)

    decoded, z, mu, logvar = vae_forward(prepared, x, eps)
    jax.block_until_ready((decoded, z, mu, logvar))

    assert decoded.shape == (batch, channels, spatial, spatial)
    assert z.shape == (batch, latent)
    assert mu.shape == (batch, latent)
    assert logvar.shape == (batch, latent)
    assert bool(jnp.isfinite(decoded).all())
    assert bool(jnp.isfinite(z).all())
    assert bool(jnp.isfinite(mu).all())
    assert bool(jnp.isfinite(logvar).all())
    # internal consistency of the reparameterization done in-kernel
    z_check = mu + jnp.exp(0.5 * logvar) * eps
    assert bool(jnp.allclose(z, z_check, atol=1e-3, rtol=1e-3))
    print("KERNEL_OK")
</pallas_src>

<mosaic_0001>
module attributes {stable_mosaic.version = 11 : i64} {
  func.func @_vae_kernel(%arg0: i32, %arg1: memref<1x1x1024xf32, #tpu.memory_space<vmem>>, %arg2: memref<1x1x32xf32, #tpu.memory_space<vmem>>, %arg3: memref<1024x512xbf16, #tpu.memory_space<vmem>>, %arg4: memref<1x512xf32, #tpu.memory_space<vmem>>, %arg5: memref<1x512xf32, #tpu.memory_space<vmem>>, %arg6: memref<1x512xf32, #tpu.memory_space<vmem>>, %arg7: memref<512x256xbf16, #tpu.memory_space<vmem>>, %arg8: memref<1x256xf32, #tpu.memory_space<vmem>>, %arg9: memref<1x256xf32, #tpu.memory_space<vmem>>, %arg10: memref<1x256xf32, #tpu.memory_space<vmem>>, %arg11: memref<256x64xbf16, #tpu.memory_space<vmem>>, %arg12: memref<1x64xf32, #tpu.memory_space<vmem>>, %arg13: memref<32x256xbf16, #tpu.memory_space<vmem>>, %arg14: memref<1x256xf32, #tpu.memory_space<vmem>>, %arg15: memref<256x512xbf16, #tpu.memory_space<vmem>>, %arg16: memref<1x512xf32, #tpu.memory_space<vmem>>, %arg17: memref<1x512xf32, #tpu.memory_space<vmem>>, %arg18: memref<1x512xf32, #tpu.memory_space<vmem>>, %arg19: memref<512x1024xbf16, #tpu.memory_space<vmem>>, %arg20: memref<1x1024xf32, #tpu.memory_space<vmem>>, %arg21: memref<1x1x1024xf32, #tpu.memory_space<vmem>>, %arg22: memref<1x1x96xf32, #tpu.memory_space<vmem>>) attributes {dimension_semantics = [#tpu.dimension_semantics<parallel>], iteration_bounds = array<i64: 2>, scalar_prefetch = 0 : i64, scratch_operands = 0 : i64, tpu.core_type = #tpu.core_type<tc>, window_params = [{transform_indices = @transform_0, window_bounds = array<i64: 1, 1, 1024>}, {transform_indices = @transform_1, window_bounds = array<i64: 1, 1, 32>}, {pipeline_mode = #tpu.pipeline_mode<synchronous>, transform_indices = @transform_2, window_bounds = array<i64: 1024, 512>}, {pipeline_mode = #tpu.pipeline_mode<synchronous>, transform_indices = @transform_3, window_bounds = array<i64: 1, 512>}, {pipeline_mode = #tpu.pipeline_mode<synchronous>, transform_indices = @transform_4, window_bounds = array<i64: 1, 512>}, {pipeline_mode = #tpu.pipeline_mode<synchronous>, transform_indices = @transform_5, window_bounds = array<i64: 1, 512>}, {pipeline_mode = #tpu.pipeline_mode<synchronous>, transform_indices = @transform_6, window_bounds = array<i64: 512, 256>}, {pipeline_mode = #tpu.pipeline_mode<synchronous>, transform_indices = @transform_7, window_bounds = array<i64: 1, 256>}, {pipeline_mode = #tpu.pipeline_mode<synchronous>, transform_indices = @transform_8, window_bounds = array<i64: 1, 256>}, {pipeline_mode = #tpu.pipeline_mode<synchronous>, transform_indices = @transform_9, window_bounds = array<i64: 1, 256>}, {pipeline_mode = #tpu.pipeline_mode<synchronous>, transform_indices = @transform_10, window_bounds = array<i64: 256, 64>}, {pipeline_mode = #tpu.pipeline_mode<synchronous>, transform_indices = @transform_11, window_bounds = array<i64: 1, 64>}, {pipeline_mode = #tpu.pipeline_mode<synchronous>, transform_indices = @transform_12, window_bounds = array<i64: 32, 256>}, {pipeline_mode = #tpu.pipeline_mode<synchronous>, transform_indices = @transform_13, window_bounds = array<i64: 1, 256>}, {pipeline_mode = #tpu.pipeline_mode<synchronous>, transform_indices = @transform_14, window_bounds = array<i64: 256, 512>}, {pipeline_mode = #tpu.pipeline_mode<synchronous>, transform_indices = @transform_15, window_bounds = array<i64: 1, 512>}, {pipeline_mode = #tpu.pipeline_mode<synchronous>, transform_indices = @transform_16, window_bounds = array<i64: 1, 512>}, {pipeline_mode = #tpu.pipeline_mode<synchronous>, transform_indices = @transform_17, window_bounds = array<i64: 1, 512>}, {pipeline_mode = #tpu.pipeline_mode<synchronous>, transform_indices = @transform_18, window_bounds = array<i64: 512, 1024>}, {pipeline_mode = #tpu.pipeline_mode<synchronous>, transform_indices = @transform_19, window_bounds = array<i64: 1, 1024>}, {transform_indices = @transform_20, window_bounds = array<i64: 1, 1, 1024>}, {transform_indices = @transform_21, window_bounds = array<i64: 1, 1, 96>}]} {
    %c0 = arith.constant 0 : index
    %c0_0 = arith.constant 0 : index
    %c0_1 = arith.constant 0 : index
    %0 = vector.load %arg1[%c0, %c0_0, %c0_1] : memref<1x1x1024xf32, #tpu.memory_space<vmem>>, vector<1x1x1024xf32>
    %1 = vector.shape_cast %0 : vector<1x1x1024xf32> to vector<1x1024xf32>
    %c0_2 = arith.constant 0 : index
    %c0_3 = arith.constant 0 : index
    %c0_4 = arith.constant 0 : index
    %2 = vector.load %arg2[%c0_2, %c0_3, %c0_4] : memref<1x1x32xf32, #tpu.memory_space<vmem>>, vector<1x1x32xf32>
    %3 = vector.shape_cast %2 : vector<1x1x32xf32> to vector<1x32xf32>
    %4 = arith.truncf %1 : vector<1x1024xf32> to vector<1x1024xbf16>
    %c0_5 = arith.constant 0 : index
    %c0_6 = arith.constant 0 : index
    %5 = vector.load %arg3[%c0_5, %c0_6] : memref<1024x512xbf16, #tpu.memory_space<vmem>>, vector<1024x512xbf16>
    %cst = arith.constant dense<0.000000e+00> : vector<1x512xf32>
    %6 = tpu.matmul %4, %5, %cst {dimension_numbers = #tpu.dot_dimension_numbers<[1], [0], [0], [1], [0, 0, 1, 1], [], []>} : vector<1x1024xbf16>, vector<1024x512xbf16>, vector<1x512xf32> -> vector<1x512xf32>
    %c0_7 = arith.constant 0 : index
    %c0_8 = arith.constant 0 : index
    %7 = vector.load %arg4[%c0_7, %c0_8] : memref<1x512xf32, #tpu.memory_space<vmem>>, vector<1x512xf32>
    %8 = arith.addf %6, %7 : vector<1x512xf32>
    %cst_9 = arith.constant 0.000000e+00 : f32
    %9 = vector.broadcast %cst_9 : f32 to vector<1x512xf32>
    %10 = arith.maximumf %8, %9 : vector<1x512xf32>
    %c0_10 = arith.constant 0 : index
    %c0_11 = arith.constant 0 : index
    %11 = vector.load %arg5[%c0_10, %c0_11] : memref<1x512xf32, #tpu.memory_space<vmem>>, vector<1x512xf32>
    %12 = arith.mulf %10, %11 : vector<1x512xf32>
    %c0_12 = arith.constant 0 : index
    %c0_13 = arith.constant 0 : index
    %13 = vector.load %arg6[%c0_12, %c0_13] : memref<1x512xf32, #tpu.memory_space<vmem>>, vector<1x512xf32>
    %14 = arith.addf %12, %13 : vector<1x512xf32>
    %15 = arith.truncf %14 : vector<1x512xf32> to vector<1x512xbf16>
    %c0_14 = arith.constant 0 : index
    %c0_15 = arith.constant 0 : index
    %16 = vector.load %arg7[%c0_14, %c0_15] : memref<512x256xbf16, #tpu.memory_space<vmem>>, vector<512x256xbf16>
    %cst_16 = arith.constant dense<0.000000e+00> : vector<1x256xf32>
    %17 = tpu.matmul %15, %16, %cst_16 {dimension_numbers = #tpu.dot_dimension_numbers<[1], [0], [0], [1], [0, 0, 1, 1], [], []>} : vector<1x512xbf16>, vector<512x256xbf16>, vector<1x256xf32> -> vector<1x256xf32>
    %c0_17 = arith.constant 0 : index
    %c0_18 = arith.constant 0 : index
    %18 = vector.load %arg8[%c0_17, %c0_18] : memref<1x256xf32, #tpu.memory_space<vmem>>, vector<1x256xf32>
    %19 = arith.addf %17, %18 : vector<1x256xf32>
    %cst_19 = arith.constant 0.000000e+00 : f32
    %20 = vector.broadcast %cst_19 : f32 to vector<1x256xf32>
    %21 = arith.maximumf %19, %20 : vector<1x256xf32>
    %c0_20 = arith.constant 0 : index
    %c0_21 = arith.constant 0 : index
    %22 = vector.load %arg9[%c0_20, %c0_21] : memref<1x256xf32, #tpu.memory_space<vmem>>, vector<1x256xf32>
    %23 = arith.mulf %21, %22 : vector<1x256xf32>
    %c0_22 = arith.constant 0 : index
    %c0_23 = arith.constant 0 : index
    %24 = vector.load %arg10[%c0_22, %c0_23] : memref<1x256xf32, #tpu.memory_space<vmem>>, vector<1x256xf32>
    %25 = arith.addf %23, %24 : vector<1x256xf32>
    %26 = arith.truncf %25 : vector<1x256xf32> to vector<1x256xbf16>
    %c0_24 = arith.constant 0 : index
    %c0_25 = arith.constant 0 : index
    %27 = vector.load %arg11[%c0_24, %c0_25] : memref<256x64xbf16, #tpu.memory_space<vmem>>, vector<256x64xbf16>
    %cst_26 = arith.constant dense<0.000000e+00> : vector<1x64xf32>
    %28 = tpu.matmul %26, %27, %cst_26 {dimension_numbers = #tpu.dot_dimension_numbers<[1], [0], [0], [1], [0, 0, 1, 1], [], []>} : vector<1x256xbf16>, vector<256x64xbf16>, vector<1x64xf32> -> vector<1x64xf32>
    %c0_27 = arith.constant 0 : index
    %c0_28 = arith.constant 0 : index
    %29 = vector.load %arg12[%c0_27, %c0_28] : memref<1x64xf32, #tpu.memory_space<vmem>>, vector<1x64xf32>
    %30 = arith.addf %28, %29 : vector<1x64xf32>
    %31 = vector.extract_strided_slice %30 {offsets = [0, 0], sizes = [1, 32], strides = [1, 1]} : vector<1x64xf32> to vector<1x32xf32>
    %32 = vector.extract_strided_slice %30 {offsets = [0, 32], sizes = [1, 32], strides = [1, 1]} : vector<1x64xf32> to vector<1x32xf32>
    %cst_29 = arith.constant 5.000000e-01 : f32
    %33 = vector.broadcast %cst_29 : f32 to vector<1x32xf32>
    %34 = arith.mulf %33, %32 : vector<1x32xf32>
    %35 = math.exp %34 : vector<1x32xf32>
    %36 = arith.mulf %35, %3 : vector<1x32xf32>
    %37 = arith.addf %31, %36 : vector<1x32xf32>
    %38 = tpu.concatenate %37, %31, %32 in 1 : vector<1x32xf32>, vector<1x32xf32>, vector<1x32xf32> -> vector<1x96xf32>
    %c0_30 = arith.constant 0 : index
    %c0_31 = arith.constant 0 : index
    %c0_32 = arith.constant 0 : index
    %39 = vector.load %arg22[%c0_30, %c0_31, %c0_32] : memref<1x1x96xf32, #tpu.memory_space<vmem>>, vector<1x1x96xf32>
    %40 = vector.shape_cast %39 : vector<1x1x96xf32> to vector<1x96xf32>
    %41 = vector.shape_cast %38 : vector<1x96xf32> to vector<1x1x96xf32>
    tpu.vector_store %arg22[%c0_30, %c0_31, %c0_32], %41 {strides = array<i32>} : memref<1x1x96xf32, #tpu.memory_space<vmem>>, vector<1x1x96xf32>,
    %42 = arith.truncf %37 : vector<1x32xf32> to vector<1x32xbf16>
    %c0_33 = arith.constant 0 : index
    %c0_34 = arith.constant 0 : index
    %43 = vector.load %arg13[%c0_33, %c0_34] : memref<32x256xbf16, #tpu.memory_space<vmem>>, vector<32x256xbf16>
    %cst_35 = arith.constant dense<0.000000e+00> : vector<1x256xf32>
    %44 = tpu.matmul %42, %43, %cst_35 {dimension_numbers = #tpu.dot_dimension_numbers<[1], [0], [0], [1], [0, 0, 1, 1], [], []>} : vector<1x32xbf16>, vector<32x256xbf16>, vector<1x256xf32> -> vector<1x256xf32>
    %c0_36 = arith.constant 0 : index
    %c0_37 = arith.constant 0 : index
    %45 = vector.load %arg14[%c0_36, %c0_37] : memref<1x256xf32, #tpu.memory_space<vmem>>, vector<1x256xf32>
    %46 = arith.addf %44, %45 : vector<1x256xf32>
    %cst_38 = arith.constant 0.000000e+00 : f32
    %47 = vector.broadcast %cst_38 : f32 to vector<1x256xf32>
    %48 = arith.maximumf %46, %47 : vector<1x256xf32>
    %49 = arith.truncf %48 : vector<1x256xf32> to vector<1x256xbf16>
    %c0_39 = arith.constant 0 : index
    %c0_40 = arith.constant 0 : index
    %50 = vector.load %arg15[%c0_39, %c0_40] : memref<256x512xbf16, #tpu.memory_space<vmem>>, vector<256x512xbf16>
    %cst_41 = arith.constant dense<0.000000e+00> : vector<1x512xf32>
    %51 = tpu.matmul %49, %50, %cst_41 {dimension_numbers = #tpu.dot_dimension_numbers<[1], [0], [0], [1], [0, 0, 1, 1], [], []>} : vector<1x256xbf16>, vector<256x512xbf16>, vector<1x512xf32> -> vector<1x512xf32>
    %c0_42 = arith.constant 0 : index
    %c0_43 = arith.constant 0 : index
    %52 = vector.load %arg16[%c0_42, %c0_43] : memref<1x512xf32, #tpu.memory_space<vmem>>, vector<1x512xf32>
    %53 = arith.addf %51, %52 : vector<1x512xf32>
    %cst_44 = arith.constant 0.000000e+00 : f32
    %54 = vector.broadcast %cst_44 : f32 to vector<1x512xf32>
    %55 = arith.maximumf %53, %54 : vector<1x512xf32>
    %c0_45 = arith.constant 0 : index
    %c0_46 = arith.constant 0 : index
    %56 = vector.load %arg17[%c0_45, %c0_46] : memref<1x512xf32, #tpu.memory_space<vmem>>, vector<1x512xf32>
    %57 = arith.mulf %55, %56 : vector<1x512xf32>
    %c0_47 = arith.constant 0 : index
    %c0_48 = arith.constant 0 : index
    %58 = vector.load %arg18[%c0_47, %c0_48] : memref<1x512xf32, #tpu.memory_space<vmem>>, vector<1x512xf32>
    %59 = arith.addf %57, %58 : vector<1x512xf32>
    %60 = arith.truncf %59 : vector<1x512xf32> to vector<1x512xbf16>
    %c0_49 = arith.constant 0 : index
    %c0_50 = arith.constant 0 : index
    %61 = vector.load %arg19[%c0_49, %c0_50] : memref<512x1024xbf16, #tpu.memory_space<vmem>>, vector<512x1024xbf16>
    %cst_51 = arith.constant dense<0.000000e+00> : vector<1x1024xf32>
    %62 = tpu.matmul %60, %61, %cst_51 {dimension_numbers = #tpu.dot_dimension_numbers<[1], [0], [0], [1], [0, 0, 1, 1], [], []>} : vector<1x512xbf16>, vector<512x1024xbf16>, vector<1x1024xf32> -> vector<1x1024xf32>
    %c0_52 = arith.constant 0 : index
    %c0_53 = arith.constant 0 : index
    %63 = vector.load %arg20[%c0_52, %c0_53] : memref<1x1024xf32, #tpu.memory_space<vmem>>, vector<1x1024xf32>
    %64 = arith.addf %62, %63 : vector<1x1024xf32>
    %65 = arith.negf %64 : vector<1x1024xf32>
    %66 = math.exp %65 : vector<1x1024xf32>
    %cst_54 = arith.constant 1.000000e+00 : f32
    %67 = vector.broadcast %cst_54 : f32 to vector<1x1024xf32>
    %68 = arith.addf %67, %66 : vector<1x1024xf32>
    %69 = arith.divf %67, %68 : vector<1x1024xf32>
    %c0_55 = arith.constant 0 : index
    %c0_56 = arith.constant 0 : index
    %c0_57 = arith.constant 0 : index
    %70 = vector.load %arg21[%c0_55, %c0_56, %c0_57] : memref<1x1x1024xf32, #tpu.memory_space<vmem>>, vector<1x1x1024xf32>
    %71 = vector.shape_cast %70 : vector<1x1x1024xf32> to vector<1x1024xf32>
    %72 = vector.shape_cast %69 : vector<1x1024xf32> to vector<1x1x1024xf32>
    tpu.vector_store %arg21[%c0_55, %c0_56, %c0_57], %72 {strides = array<i32>} : memref<1x1x1024xf32, #tpu.memory_space<vmem>>, vector<1x1x1024xf32>,
    return
  }
  func.func @transform_0(%arg0: i32) -> (i32, i32, i32) {
    %c0_i32 = arith.constant 0 : i32
    %c0_i32_0 = arith.constant 0 : i32
    %c0_i32_1 = arith.constant 0 : i32
    return %arg0, %c0_i32, %c0_i32_0 : i32, i32, i32
  }
  func.func @transform_1(%arg0: i32) -> (i32, i32, i32) {
    %c0_i32 = arith.constant 0 : i32
    %c0_i32_0 = arith.constant 0 : i32
    %c0_i32_1 = arith.constant 0 : i32
    return %arg0, %c0_i32, %c0_i32_0 : i32, i32, i32
  }
  func.func @transform_2(%arg0: i32) -> (i32, i32) {
    %c0_i32 = arith.constant 0 : i32
    %c0_i32_0 = arith.constant 0 : i32
    %c0_i32_1 = arith.constant 0 : i32
    return %c0_i32, %c0_i32_0 : i32, i32
  }
  func.func @transform_3(%arg0: i32) -> (i32, i32) {
    %c0_i32 = arith.constant 0 : i32
    %c0_i32_0 = arith.constant 0 : i32
    %c0_i32_1 = arith.constant 0 : i32
    return %c0_i32, %c0_i32_0 : i32, i32
  }
  func.func @transform_4(%arg0: i32) -> (i32, i32) {
    %c0_i32 = arith.constant 0 : i32
    %c0_i32_0 = arith.constant 0 : i32
    %c0_i32_1 = arith.constant 0 : i32
    return %c0_i32, %c0_i32_0 : i32, i32
  }
  func.func @transform_5(%arg0: i32) -> (i32, i32) {
    %c0_i32 = arith.constant 0 : i32
    %c0_i32_0 = arith.constant 0 : i32
    %c0_i32_1 = arith.constant 0 : i32
    return %c0_i32, %c0_i32_0 : i32, i32
  }
  func.func @transform_6(%arg0: i32) -> (i32, i32) {
    %c0_i32 = arith.constant 0 : i32
    %c0_i32_0 = arith.constant 0 : i32
    %c0_i32_1 = arith.constant 0 : i32
    return %c0_i32, %c0_i32_0 : i32, i32
  }
  func.func @transform_7(%arg0: i32) -> (i32, i32) {
    %c0_i32 = arith.constant 0 : i32
    %c0_i32_0 = arith.constant 0 : i32
    %c0_i32_1 = arith.constant 0 : i32
    return %c0_i32, %c0_i32_0 : i32, i32
  }
  func.func @transform_8(%arg0: i32) -> (i32, i32) {
    %c0_i32 = arith.constant 0 : i32
    %c0_i32_0 = arith.constant 0 : i32
    %c0_i32_1 = arith.constant 0 : i32
    return %c0_i32, %c0_i32_0 : i32, i32
  }
  func.func @transform_9(%arg0: i32) -> (i32, i32) {
    %c0_i32 = arith.constant 0 : i32
    %c0_i32_0 = arith.constant 0 : i32
    %c0_i32_1 = arith.constant 0 : i32
    return %c0_i32, %c0_i32_0 : i32, i32
  }
  func.func @transform_10(%arg0: i32) -> (i32, i32) {
    %c0_i32 = arith.constant 0 : i32
    %c0_i32_0 = arith.constant 0 : i32
    %c0_i32_1 = arith.constant 0 : i32
    return %c0_i32, %c0_i32_0 : i32, i32
  }
  func.func @transform_11(%arg0: i32) -> (i32, i32) {
    %c0_i32 = arith.constant 0 : i32
    %c0_i32_0 = arith.constant 0 : i32
    %c0_i32_1 = arith.constant 0 : i32
    return %c0_i32, %c0_i32_0 : i32, i32
  }
  func.func @transform_12(%arg0: i32) -> (i32, i32) {
    %c0_i32 = arith.constant 0 : i32
    %c0_i32_0 = arith.constant 0 : i32
    %c0_i32_1 = arith.constant 0 : i32
    return %c0_i32, %c0_i32_0 : i32, i32
  }
  func.func @transform_13(%arg0: i32) -> (i32, i32) {
    %c0_i32 = arith.constant 0 : i32
    %c0_i32_0 = arith.constant 0 : i32
    %c0_i32_1 = arith.constant 0 : i32
    return %c0_i32, %c0_i32_0 : i32, i32
  }
  func.func @transform_14(%arg0: i32) -> (i32, i32) {
    %c0_i32 = arith.constant 0 : i32
    %c0_i32_0 = arith.constant 0 : i32
    %c0_i32_1 = arith.constant 0 : i32
    return %c0_i32, %c0_i32_0 : i32, i32
  }
  func.func @transform_15(%arg0: i32) -> (i32, i32) {
    %c0_i32 = arith.constant 0 : i32
    %c0_i32_0 = arith.constant 0 : i32
    %c0_i32_1 = arith.constant 0 : i32
    return %c0_i32, %c0_i32_0 : i32, i32
  }
  func.func @transform_16(%arg0: i32) -> (i32, i32) {
    %c0_i32 = arith.constant 0 : i32
    %c0_i32_0 = arith.constant 0 : i32
    %c0_i32_1 = arith.constant 0 : i32
    return %c0_i32, %c0_i32_0 : i32, i32
  }
  func.func @transform_17(%arg0: i32) -> (i32, i32) {
    %c0_i32 = arith.constant 0 : i32
    %c0_i32_0 = arith.constant 0 : i32
    %c0_i32_1 = arith.constant 0 : i32
    return %c0_i32, %c0_i32_0 : i32, i32
  }
  func.func @transform_18(%arg0: i32) -> (i32, i32) {
    %c0_i32 = arith.constant 0 : i32
    %c0_i32_0 = arith.constant 0 : i32
    %c0_i32_1 = arith.constant 0 : i32
    return %c0_i32, %c0_i32_0 : i32, i32
  }
  func.func @transform_19(%arg0: i32) -> (i32, i32) {
    %c0_i32 = arith.constant 0 : i32
    %c0_i32_0 = arith.constant 0 : i32
    %c0_i32_1 = arith.constant 0 : i32
    return %c0_i32, %c0_i32_0 : i32, i32
  }
  func.func @transform_20(%arg0: i32) -> (i32, i32, i32) {
    %c0_i32 = arith.constant 0 : i32
    %c0_i32_0 = arith.constant 0 : i32
    %c0_i32_1 = arith.constant 0 : i32
    return %arg0, %c0_i32, %c0_i32_0 : i32, i32, i32
  }
  func.func @transform_21(%arg0: i32) -> (i32, i32, i32) {
    %c0_i32 = arith.constant 0 : i32
    %c0_i32_0 = arith.constant 0 : i32
    %c0_i32_1 = arith.constant 0 : i32
    return %arg0, %c0_i32, %c0_i32_0 : i32, i32, i32
  }
}

</mosaic_0001>

<llo_original>
// kernel: vae_forward.1
$region0: #{vae_forward.1}
  #allocation0 [shape = 'u32[]', space=smem, size = 0x4, offset = 0x4, fixed_abs, tag = 'smem constant byte address 0x4 - core index']
  #allocation1 [shape = 'u32[144,128]{1,0:T(1,128)}', space=vmem, size = 0x12000, scoped, tag = 'internal scratch']
  %s0 = inlined_call_operand.vmem [shape: f32[2,1,1024], index: 0, kind: input, shape index: {}]
  %s1 = inlined_call_operand.vmem [shape: f32[2,1,32], index: 1, kind: input, shape index: {}]
  %s2 = inlined_call_operand.hbm [shape: bf16[1024,512], index: 2, kind: input, shape index: {}]
  %s3 = inlined_call_operand.vmem [shape: f32[1,512], index: 3, kind: input, shape index: {}]
  %s4 = inlined_call_operand.vmem [shape: f32[1,512], index: 4, kind: input, shape index: {}]
  %s5 = inlined_call_operand.vmem [shape: f32[1,512], index: 5, kind: input, shape index: {}]
  %s6 = inlined_call_operand.hbm [shape: bf16[512,256], index: 6, kind: input, shape index: {}]
  %s7 = inlined_call_operand.vmem [shape: f32[1,256], index: 7, kind: input, shape index: {}]
  %s8 = inlined_call_operand.vmem [shape: f32[1,256], index: 8, kind: input, shape index: {}]
  %s9 = inlined_call_operand.vmem [shape: f32[1,256], index: 9, kind: input, shape index: {}]
  %s10 = inlined_call_operand.vmem [shape: bf16[256,64], index: 10, kind: input, shape index: {}]
  %s11 = inlined_call_operand.vmem [shape: f32[1,64], index: 11, kind: input, shape index: {}]
  %s12 = inlined_call_operand.vmem [shape: bf16[32,256], index: 12, kind: input, shape index: {}]
  %s13 = inlined_call_operand.vmem [shape: f32[1,256], index: 13, kind: input, shape index: {}]
  %s14 = inlined_call_operand.hbm [shape: bf16[256,512], index: 14, kind: input, shape index: {}]
  %s15 = inlined_call_operand.vmem [shape: f32[1,512], index: 15, kind: input, shape index: {}]
  %s16 = inlined_call_operand.vmem [shape: f32[1,512], index: 16, kind: input, shape index: {}]
  %s17 = inlined_call_operand.vmem [shape: f32[1,512], index: 17, kind: input, shape index: {}]
  %s18 = inlined_call_operand.hbm [shape: bf16[512,1024], index: 18, kind: input, shape index: {}]
  %s19 = inlined_call_operand.vmem [shape: f32[1,1024], index: 19, kind: input, shape index: {}]
  %s20 = inlined_call_operand.vmem [shape: f32[2,1,1024], index: 20, kind: output, shape index: {0}]
  %s21 = inlined_call_operand.vmem [shape: f32[2,1,96], index: 21, kind: output, shape index: {1}]
  %22 = xla_tuple %s20, %s21
  %s23 = sld [smem:[#allocation0]]
  $region137: #{vae_forward.1} parent=0
    _
  %s25 = ssub.s32 1, %s23
  %s26 = scalar_select 0, %s25, %s23
  $region1: #{vae_forward.1} parent=0
    #allocation2 [shape = 'u8[1048576]{0}', space=vmem, size = 0x100000, scoped, tag = 'input window, operand 2, single buffered']
    #allocation3 [shape = 's32[2]{0}', space=sflag, size = 0x8, scoped, tag = 'scoped memory for vae_forward.1']
    #allocation4 [shape = 'u8[262144]{0}', space=vmem, size = 0x40000, scoped, tag = 'input window, operand 6, single buffered']
    #allocation5 [shape = 's32[1]{0}', space=sflag, size = 0x4, scoped, tag = 'scoped memory for vae_forward.1']
    #allocation6 [shape = 'u8[262144]{0}', space=vmem, size = 0x40000, scoped, tag = 'input window, operand 14, single buffered']
    #allocation7 [shape = 'u8[1048576]{0}', space=vmem, size = 0x100000, scoped, tag = 'input window, operand 18, single buffered']
    #allocation8 [shape = 's32[1]{0}', space=sflag, size = 0x4, scoped, tag = 'scoped memory for vae_forward.1']
    %27 = vsyncpa [#allocation3], 0
    %28 = vsyncpa [#allocation5], 0
    %29 = vsyncpa [#allocation8], 0
    loop: start=0, step=1, limit=4
    $region2: #{vae_forward.1} parent=1 // loop_pre_header
      _
    $region3: #{vae_forward.1} parent=1 // loop_header
      %s31 = sphi 0, %s35
      %p32 = scmp.ge.s32.totalorder %s31, 4
      %s41 = sphi 0, %s43
      %s44 = sphi 0, %s41
      %s45 = sphi 0, %s44
      %s61 = sphi 0, %s45
      %s67 = sphi 0, %s69
      %s70 = sphi 0, %s67
      %s71 = sphi 0, %s70
      %s87 = sphi 0, %s71
      %s91 = sphi 0, %s91
      %s93 = sphi 0, %s91
      %s94 = sphi 0, %s93
      %s108 = sphi 0, %s94
      %s112 = sphi 0, %s112
      %s114 = sphi 0, %s112
      %s115 = sphi 0, %s114
      %s129 = sphi 0, %s115
      %s133 = sphi 0, %s133
      %s135 = sphi 0, %s133
      %s136 = sphi 0, %s135
      %s150 = sphi 0, %s136
      %s154 = sphi 0, %s154
      %s156 = sphi 0, %s154
      %s157 = sphi 0, %s156
      %s171 = sphi 0, %s157
      %s175 = sphi 0, %s175
      %s177 = sphi 0, %s175
      %s178 = sphi 0, %s177
      %s192 = sphi 0, %s178
      %s196 = sphi 0, %s196
      %s198 = sphi 0, %s196
      %s199 = sphi 0, %s198
      %s213 = sphi 0, %s199
      %s217 = sphi 0, %s217
      %s219 = sphi 0, %s217
      %s220 = sphi 0, %s219
      %s234 = sphi 0, %s220
      %s238 = sphi 0, %s238
      %s240 = sphi 0, %s238
      %s241 = sphi 0, %s240
      %s255 = sphi 0, %s241
      %s259 = sphi 0, %s259
      %s261 = sphi 0, %s259
      %s262 = sphi 0, %s261
      %s276 = sphi 0, %s262
      %s280 = sphi 0, %s280
      %s282 = sphi 0, %s280
      %s283 = sphi 0, %s282
      %s297 = sphi 0, %s283
      %s301 = sphi 0, %s301
      %s303 = sphi 0, %s301
      %s304 = sphi 0, %s303
      %s318 = sphi 0, %s304
      %s322 = sphi 0, %s322
      %s324 = sphi 0, %s322
      %s325 = sphi 0, %s324
      %s339 = sphi 0, %s325
      %s343 = sphi 0, %s343
      %s345 = sphi 0, %s343
      %s346 = sphi 0, %s345
      %s360 = sphi 0, %s346
      %s364 = sphi 0, %s364
      %s366 = sphi 0, %s364
      %s367 = sphi 0, %s366
      %s381 = sphi 0, %s367
      %s385 = sphi 0, %s385
      %s387 = sphi 0, %s385
      %s388 = sphi 0, %s387
      %s402 = sphi 0, %s388
      %s406 = sphi 0, %s406
      %s408 = sphi 0, %s406
      %s409 = sphi 0, %s408
      %s423 = sphi 0, %s409
      %s427 = sphi 0, %s427
      %s429 = sphi 0, %s427
      %s430 = sphi 0, %s429
      %s444 = sphi 0, %s430
      %s448 = sphi 0, %s448
      %s450 = sphi 0, %s448
      %s451 = sphi 0, %s450
      %s465 = sphi 0, %s451
      %s471 = sphi 0, %s473
      %s474 = sphi 0, %s471
      %s475 = sphi 0, %s474
      %s491 = sphi 0, %s475
      %s497 = sphi 0, %s499
      %s500 = sphi 0, %s497
      %s501 = sphi 0, %s500
      %s517 = sphi 0, %s501
    $region4: #{vae_forward.1} parent=1 // loop_header_branch
      %34 = sbr.rel (%p32) target = $region8
    $region5: #{vae_forward.1} parent=1 // loop_body
      %s36 = ssub.s32 %s31, 1
      %s37 = ssub.s32 %s31, 2
      %s38 = sadd.s32 %s31, 1
      %s39 = ssub.s32 %s31, %s38
      %p40 = scmp.eq.s32.totalorder %s39, 0
      %s42 = sadd.s32 %s41, 1
      %s43 = scalar_select %p40, %s41, %s42
      %p46 = pneg %p40
      %p47 = scmp.eq.s32.totalorder %s31, 1
      %p48 = por %p46, %p47
      %p49 = scmp.ne.s32.totalorder %s41, %s44
      %p50 = scmp.eq.s32.totalorder %s31, 0
      %p51 = por %p49, %p50
      %p52 = scmp.ne.s32.totalorder %s41, %s44
      %p53 = scmp.eq.s32.totalorder %s36, 1
      %p54 = por %p52, %p53
      %p55 = scmp.ne.s32.totalorder %s44, %s45
      %p56 = scmp.eq.s32.totalorder %s36, 0
      %p57 = por %p55, %p56
      %p58 = scmp.ne.s32.totalorder %s44, %s45
      %p59 = scmp.eq.s32.totalorder %s37, 1
      %p60 = por %p58, %p59
      %p62 = scmp.ne.s32.totalorder %s45, %s61
      %p63 = scmp.eq.s32.totalorder %s37, 0
      %p64 = por %p62, %p63
      %s65 = ssub.s32 %s31, %s38
      %p66 = scmp.eq.s32.totalorder %s65, 0
      %s68 = sadd.s32 %s67, 1
      %s69 = scalar_select %p66, %s67, %s68
      %p72 = pneg %p66
      %p73 = scmp.eq.s32.totalorder %s31, 1
      %p74 = por %p72, %p73
      %p75 = scmp.ne.s32.totalorder %s67, %s70
      %p76 = scmp.eq.s32.totalorder %s31, 0
      %p77 = por %p75, %p76
      %p78 = scmp.ne.s32.totalorder %s67, %s70
      %p79 = scmp.eq.s32.totalorder %s36, 1
      %p80 = por %p78, %p79
      %p81 = scmp.ne.s32.totalorder %s70, %s71
      %p82 = scmp.eq.s32.totalorder %s36, 0
      %p83 = por %p81, %p82
      %p84 = scmp.ne.s32.totalorder %s70, %s71
      %p85 = scmp.eq.s32.totalorder %s37, 1
      %p86 = por %p84, %p85
      %p88 = scmp.ne.s32.totalorder %s71, %s87
      %p89 = scmp.eq.s32.totalorder %s37, 0
      %p90 = por %p88, %p89
      %s92 = sadd.s32 %s91, 1
      %p95 = scmp.eq.s32.totalorder %s31, 1
      %p96 = scmp.ne.s32.totalorder %s91, %s93
      %p97 = scmp.eq.s32.totalorder %s31, 0
      %p98 = por %p96, %p97
      %p99 = scmp.ne.s32.totalorder %s91, %s93
      %p100 = scmp.eq.s32.totalorder %s36, 1
      %p101 = por %p99, %p100
      %p102 = scmp.ne.s32.totalorder %s93, %s94
      %p103 = scmp.eq.s32.totalorder %s36, 0
      %p104 = por %p102, %p103
      %p105 = scmp.ne.s32.totalorder %s93, %s94
      %p106 = scmp.eq.s32.totalorder %s37, 1
      %p107 = por %p105, %p106
      %p109 = scmp.ne.s32.totalorder %s94, %s108
      %p110 = scmp.eq.s32.totalorder %s37, 0
      %p111 = por %p109, %p110
      %s113 = sadd.s32 %s112, 1
      %p116 = scmp.eq.s32.totalorder %s31, 1
      %p117 = scmp.ne.s32.totalorder %s112, %s114
      %p118 = scmp.eq.s32.totalorder %s31, 0
      %p119 = por %p117, %p118
      %p120 = scmp.ne.s32.totalorder %s112, %s114
      %p121 = scmp.eq.s32.totalorder %s36, 1
      %p122 = por %p120, %p121
      %p123 = scmp.ne.s32.totalorder %s114, %s115
      %p124 = scmp.eq.s32.totalorder %s36, 0
      %p125 = por %p123, %p124
      %p126 = scmp.ne.s32.totalorder %s114, %s115
      %p127 = scmp.eq.s32.totalorder %s37, 1
      %p128 = por %p126, %p127
      %p130 = scmp.ne.s32.totalorder %s115, %s129
      %p131 = scmp.eq.s32.totalorder %s37, 0
      %p132 = por %p130, %p131
      %s134 = sadd.s32 %s133, 1
      %p137 = scmp.eq.s32.totalorder %s31, 1
      %p138 = scmp.ne.s32.totalorder %s133, %s135
      %p139 = scmp.eq.s32.totalorder %s31, 0
      %p140 = por %p138, %p139
      %p141 = scmp.ne.s32.totalorder %s133, %s135
      %p142 = scmp.eq.s32.totalorder %s36, 1
      %p143 = por %p141, %p142
      %p144 = scmp.ne.s32.totalorder %s135, %s136
      %p145 = scmp.eq.s32.totalorder %s36, 0
      %p146 = por %p144, %p145
      %p147 = scmp.ne.s32.totalorder %s135, %s136
      %p148 = scmp.eq.s32.totalorder %s37, 1
      %p149 = por %p147, %p148
      %p151 = scmp.ne.s32.totalorder %s136, %s150
      %p152 = scmp.eq.s32.totalorder %s37, 0
      %p153 = por %p151, %p152
      %s155 = sadd.s32 %s154, 1
      %p158 = scmp.eq.s32.totalorder %s31, 1
      %p159 = scmp.ne.s32.totalorder %s154, %s156
      %p160 = scmp.eq.s32.totalorder %s31, 0
      %p161 = por %p159, %p160
      %p162 = scmp.ne.s32.totalorder %s154, %s156
      %p163 = scmp.eq.s32.totalorder %s36, 1
      %p164 = por %p162, %p163
      %p165 = scmp.ne.s32.totalorder %s156, %s157
      %p166 = scmp.eq.s32.totalorder %s36, 0
      %p167 = por %p165, %p166
      %p168 = scmp.ne.s32.totalorder %s156, %s157
      %p169 = scmp.eq.s32.totalorder %s37, 1
      %p170 = por %p168, %p169
      %p172 = scmp.ne.s32.totalorder %s157, %s171
      %p173 = scmp.eq.s32.totalorder %s37, 0
      %p174 = por %p172, %p173
      %s176 = sadd.s32 %s175, 1
      %p179 = scmp.eq.s32.totalorder %s31, 1
      %p180 = scmp.ne.s32.totalorder %s175, %s177
      %p181 = scmp.eq.s32.totalorder %s31, 0
      %p182 = por %p180, %p181
      %p183 = scmp.ne.s32.totalorder %s175, %s177
      %p184 = scmp.eq.s32.totalorder %s36, 1
      %p185 = por %p183, %p184
      %p186 = scmp.ne.s32.totalorder %s177, %s178
      %p187 = scmp.eq.s32.totalorder %s36, 0
      %p188 = por %p186, %p187
      %p189 = scmp.ne.s32.totalorder %s177, %s178
      %p190 = scmp.eq.s32.totalorder %s37, 1
      %p191 = por %p189, %p190
      %p193 = scmp.ne.s32.totalorder %s178, %s192
      %p194 = scmp.eq.s32.totalorder %s37, 0
      %p195 = por %p193, %p194
      %s197 = sadd.s32 %s196, 1
      %p200 = scmp.eq.s32.totalorder %s31, 1
      %p201 = scmp.ne.s32.totalorder %s196, %s198
      %p202 = scmp.eq.s32.totalorder %s31, 0
      %p203 = por %p201, %p202
      %p204 = scmp.ne.s32.totalorder %s196, %s198
      %p205 = scmp.eq.s32.totalorder %s36, 1
      %p206 = por %p204, %p205
      %p207 = scmp.ne.s32.totalorder %s198, %s199
      %p208 = scmp.eq.s32.totalorder %s36, 0
      %p209 = por %p207, %p208
      %p210 = scmp.ne.s32.totalorder %s198, %s199
      %p211 = scmp.eq.s32.totalorder %s37, 1
      %p212 = por %p210, %p211
      %p214 = scmp.ne.s32.totalorder %s199, %s213
      %p215 = scmp.eq.s32.totalorder %s37, 0
      %p216 = por %p214, %p215
      %s218 = sadd.s32 %s217, 1
      %p221 = scmp.eq.s32.totalorder %s31, 1
      %p222 = scmp.ne.s32.totalorder %s217, %s219
      %p223 = scmp.eq.s32.totalorder %s31, 0
      %p224 = por %p222, %p223
      %p225 = scmp.ne.s32.totalorder %s217, %s219
      %p226 = scmp.eq.s32.totalorder %s36, 1
      %p227 = por %p225, %p226
      %p228 = scmp.ne.s32.totalorder %s219, %s220
      %p229 = scmp.eq.s32.totalorder %s36, 0
      %p230 = por %p228, %p229
      %p231 = scmp.ne.s32.totalorder %s219, %s220
      %p232 = scmp.eq.s32.totalorder %s37, 1
      %p233 = por %p231, %p232
      %p235 = scmp.ne.s32.totalorder %s220, %s234
      %p236 = scmp.eq.s32.totalorder %s37, 0
      %p237 = por %p235, %p236
      %s239 = sadd.s32 %s238, 1
      %p242 = scmp.eq.s32.totalorder %s31, 1
      %p243 = scmp.ne.s32.totalorder %s238, %s240
      %p244 = scmp.eq.s32.totalorder %s31, 0
      %p245 = por %p243, %p244
      %p246 = scmp.ne.s32.totalorder %s238, %s240
      %p247 = scmp.eq.s32.totalorder %s36, 1
      %p248 = por %p246, %p247
      %p249 = scmp.ne.s32.totalorder %s240, %s241
      %p250 = scmp.eq.s32.totalorder %s36, 0
      %p251 = por %p249, %p250
      %p252 = scmp.ne.s32.totalorder %s240, %s241
      %p253 = scmp.eq.s32.totalorder %s37, 1
      %p254 = por %p252, %p253
      %p256 = scmp.ne.s32.totalorder %s241, %s255
      %p257 = scmp.eq.s32.totalorder %s37, 0
      %p258 = por %p256, %p257
      %s260 = sadd.s32 %s259, 1
      %p263 = scmp.eq.s32.totalorder %s31, 1
      %p264 = scmp.ne.s32.totalorder %s259, %s261
      %p265 = scmp.eq.s32.totalorder %s31, 0
      %p266 = por %p264, %p265
      %p267 = scmp.ne.s32.totalorder %s259, %s261
      %p268 = scmp.eq.s32.totalorder %s36, 1
      %p269 = por %p267, %p268
      %p270 = scmp.ne.s32.totalorder %s261, %s262
      %p271 = scmp.eq.s32.totalorder %s36, 0
      %p272 = por %p270, %p271
      %p273 = scmp.ne.s32.totalorder %s261, %s262
      %p274 = scmp.eq.s32.totalorder %s37, 1
      %p275 = por %p273, %p274
      %p277 = scmp.ne.s32.totalorder %s262, %s276
      %p278 = scmp.eq.s32.totalorder %s37, 0
      %p279 = por %p277, %p278
      %s281 = sadd.s32 %s280, 1
      %p284 = scmp.eq.s32.totalorder %s31, 1
      %p285 = scmp.ne.s32.totalorder %s280, %s282
      %p286 = scmp.eq.s32.totalorder %s31, 0
      %p287 = por %p285, %p286
      %p288 = scmp.ne.s32.totalorder %s280, %s282
      %p289 = scmp.eq.s32.totalorder %s36, 1
      %p290 = por %p288, %p289
      %p291 = scmp.ne.s32.totalorder %s282, %s283
      %p292 = scmp.eq.s32.totalorder %s36, 0
      %p293 = por %p291, %p292
      %p294 = scmp.ne.s32.totalorder %s282, %s283
      %p295 = scmp.eq.s32.totalorder %s37, 1
      %p296 = por %p294, %p295
      %p298 = scmp.ne.s32.totalorder %s283, %s297
      %p299 = scmp.eq.s32.totalorder %s37, 0
      %p300 = por %p298, %p299
      %s302 = sadd.s32 %s301, 1
      %p305 = scmp.eq.s32.totalorder %s31, 1
      %p306 = scmp.ne.s32.totalorder %s301, %s303
      %p307 = scmp.eq.s32.totalorder %s31, 0
      %p308 = por %p306, %p307
      %p309 = scmp.ne.s32.totalorder %s301, %s303
      %p310 = scmp.eq.s32.totalorder %s36, 1
      %p311 = por %p309, %p310
      %p312 = scmp.ne.s32.totalorder %s303, %s304
      %p313 = scmp.eq.s32.totalorder %s36, 0
      %p314 = por %p312, %p313
      %p315 = scmp.ne.s32.totalorder %s303, %s304
      %p316 = scmp.eq.s32.totalorder %s37, 1
      %p317 = por %p315, %p316
      %p319 = scmp.ne.s32.totalorder %s304, %s318
      %p320 = scmp.eq.s32.totalorder %s37, 0
      %p321 = por %p319, %p320
      %s323 = sadd.s32 %s322, 1
      %p326 = scmp.eq.s32.totalorder %s31, 1
      %p327 = scmp.ne.s32.totalorder %s322, %s324
      %p328 = scmp.eq.s32.totalorder %s31, 0
      %p329 = por %p327, %p328
      %p330 = scmp.ne.s32.totalorder %s322, %s324
      %p331 = scmp.eq.s32.totalorder %s36, 1
      %p332 = por %p330, %p331
      %p333 = scmp.ne.s32.totalorder %s324, %s325
      %p334 = scmp.eq.s32.totalorder %s36, 0
      %p335 = por %p333, %p334
      %p336 = scmp.ne.s32.totalorder %s324, %s325
      %p337 = scmp.eq.s32.totalorder %s37, 1
      %p338 = por %p336, %p337
      %p340 = scmp.ne.s32.totalorder %s325, %s339
      %p341 = scmp.eq.s32.totalorder %s37, 0
      %p342 = por %p340, %p341
      %s344 = sadd.s32 %s343, 1
      %p347 = scmp.eq.s32.totalorder %s31, 1
      %p348 = scmp.ne.s32.totalorder %s343, %s345
      %p349 = scmp.eq.s32.totalorder %s31, 0
      %p350 = por %p348, %p349
      %p351 = scmp.ne.s32.totalorder %s343, %s345
      %p352 = scmp.eq.s32.totalorder %s36, 1
      %p353 = por %p351, %p352
      %p354 = scmp.ne.s32.totalorder %s345, %s346
      %p355 = scmp.eq.s32.totalorder %s36, 0
      %p356 = por %p354, %p355
      %p357 = scmp.ne.s32.totalorder %s345, %s346
      %p358 = scmp.eq.s32.totalorder %s37, 1
      %p359 = por %p357, %p358
      %p361 = scmp.ne.s32.totalorder %s346, %s360
      %p362 = scmp.eq.s32.totalorder %s37, 0
      %p363 = por %p361, %p362
      %s365 = sadd.s32 %s364, 1
      %p368 = scmp.eq.s32.totalorder %s31, 1
      %p369 = scmp.ne.s32.totalorder %s364, %s366
      %p370 = scmp.eq.s32.totalorder %s31, 0
      %p371 = por %p369, %p370
      %p372 = scmp.ne.s32.totalorder %s364, %s366
      %p373 = scmp.eq.s32.totalorder %s36, 1
      %p374 = por %p372, %p373
      %p375 = scmp.ne.s32.totalorder %s366, %s367
      %p376 = scmp.eq.s32.totalorder %s36, 0
      %p377 = por %p375, %p376
      %p378 = scmp.ne.s32.totalorder %s366, %s367
      %p379 = scmp.eq.s32.totalorder %s37, 1
      %p380 = por %p378, %p379
      %p382 = scmp.ne.s32.totalorder %s367, %s381
      %p383 = scmp.eq.s32.totalorder %s37, 0
      %p384 = por %p382, %p383
      %s386 = sadd.s32 %s385, 1
      %p389 = scmp.eq.s32.totalorder %s31, 1
      %p390 = scmp.ne.s32.totalorder %s385, %s387
      %p391 = scmp.eq.s32.totalorder %s31, 0
      %p392 = por %p390, %p391
      %p393 = scmp.ne.s32.totalorder %s385, %s387
      %p394 = scmp.eq.s32.totalorder %s36, 1
      %p395 = por %p393, %p394
      %p396 = scmp.ne.s32.totalorder %s387, %s388
      %p397 = scmp.eq.s32.totalorder %s36, 0
      %p398 = por %p396, %p397
      %p399 = scmp.ne.s32.totalorder %s387, %s388
      %p400 = scmp.eq.s32.totalorder %s37, 1
      %p401 = por %p399, %p400
      %p403 = scmp.ne.s32.totalorder %s388, %s402
      %p404 = scmp.eq.s32.totalorder %s37, 0
      %p405 = por %p403, %p404
      %s407 = sadd.s32 %s406, 1
      %p410 = scmp.eq.s32.totalorder %s31, 1
      %p411 = scmp.ne.s32.totalorder %s406, %s408
      %p412 = scmp.eq.s32.totalorder %s31, 0
      %p413 = por %p411, %p412
      %p414 = scmp.ne.s32.totalorder %s406, %s408
      %p415 = scmp.eq.s32.totalorder %s36, 1
      %p416 = por %p414, %p415
      %p417 = scmp.ne.s32.totalorder %s408, %s409
      %p418 = scmp.eq.s32.totalorder %s36, 0
      %p419 = por %p417, %p418
      %p420 = scmp.ne.s32.totalorder %s408, %s409
      %p421 = scmp.eq.s32.totalorder %s37, 1
      %p422 = por %p420, %p421
      %p424 = scmp.ne.s32.totalorder %s409, %s423
      %p425 = scmp.eq.s32.totalorder %s37, 0
      %p426 = por %p424, %p425
      %s428 = sadd.s32 %s427, 1
      %p431 = scmp.eq.s32.totalorder %s31, 1
      %p432 = scmp.ne.s32.totalorder %s427, %s429
      %p433 = scmp.eq.s32.totalorder %s31, 0
      %p434 = por %p432, %p433
      %p435 = scmp.ne.s32.totalorder %s427, %s429
      %p436 = scmp.eq.s32.totalorder %s36, 1
      %p437 = por %p435, %p436
      %p438 = scmp.ne.s32.totalorder %s429, %s430
      %p439 = scmp.eq.s32.totalorder %s36, 0
      %p440 = por %p438, %p439
      %p441 = scmp.ne.s32.totalorder %s429, %s430
      %p442 = scmp.eq.s32.totalorder %s37, 1
      %p443 = por %p441, %p442
      %p445 = scmp.ne.s32.totalorder %s430, %s444
      %p446 = scmp.eq.s32.totalorder %s37, 0
      %p447 = por %p445, %p446
      %s449 = sadd.s32 %s448, 1
      %p452 = scmp.eq.s32.totalorder %s31, 1
      %p453 = scmp.ne.s32.totalorder %s448, %s450
      %p454 = scmp.eq.s32.totalorder %s31, 0
      %p455 = por %p453, %p454
      %p456 = scmp.ne.s32.totalorder %s448, %s450
      %p457 = scmp.eq.s32.totalorder %s36, 1
      %p458 = por %p456, %p457
      %p459 = scmp.ne.s32.totalorder %s450, %s451
      %p460 = scmp.eq.s32.totalorder %s36, 0
      %p461 = por %p459, %p460
      %p462 = scmp.ne.s32.totalorder %s450, %s451
      %p463 = scmp.eq.s32.totalorder %s37, 1
      %p464 = por %p462, %p463
      %p466 = scmp.ne.s32.totalorder %s451, %s465
      %p467 = scmp.eq.s32.totalorder %s37, 0
      %p468 = por %p466, %p467
      %s469 = ssub.s32 %s31, %s38
      %p470 = scmp.eq.s32.totalorder %s469, 0
      %s472 = sadd.s32 %s471, 1
      %s473 = scalar_select %p470, %s471, %s472
      %p476 = pneg %p470
      %p477 = scmp.eq.s32.totalorder %s31, 1
      %p478 = por %p476, %p477
      %p479 = scmp.ne.s32.totalorder %s471, %s474
      %p480 = scmp.eq.s32.totalorder %s31, 0
      %p481 = por %p479, %p480
      %p482 = scmp.ne.s32.totalorder %s471, %s474
      %p483 = scmp.eq.s32.totalorder %s36, 1
      %p484 = por %p482, %p483
      %p485 = scmp.ne.s32.totalorder %s474, %s475
      %p486 = scmp.eq.s32.totalorder %s36, 0
      %p487 = por %p485, %p486
      %p488 = scmp.ne.s32.totalorder %s474, %s475
      %p489 = scmp.eq.s32.totalorder %s37, 1
      %p490 = por %p488, %p489
      %p492 = scmp.ne.s32.totalorder %s475, %s491
      %p493 = scmp.eq.s32.totalorder %s37, 0
      %p494 = por %p492, %p493
      %s495 = ssub.s32 %s31, %s38
      %p496 = scmp.eq.s32.totalorder %s495, 0
      %s498 = sadd.s32 %s497, 1
      %s499 = scalar_select %p496, %s497, %s498
      %p502 = pneg %p496
      %p503 = scmp.eq.s32.totalorder %s31, 1
      %p504 = por %p502, %p503
      %p505 = scmp.ne.s32.totalorder %s497, %s500
      %p506 = scmp.eq.s32.totalorder %s31, 0
      %p507 = por %p505, %p506
      %p508 = scmp.ne.s32.totalorder %s497, %s500
      %p509 = scmp.eq.s32.totalorder %s36, 1
      %p510 = por %p508, %p509
      %p511 = scmp.ne.s32.totalorder %s500, %s501
      %p512 = scmp.eq.s32.totalorder %s36, 0
      %p513 = por %p511, %p512
      %p514 = scmp.ne.s32.totalorder %s500, %s501
      %p515 = scmp.eq.s32.totalorder %s37, 1
      %p516 = por %p514, %p515
      %p518 = scmp.ne.s32.totalorder %s501, %s517
      %p519 = scmp.eq.s32.totalorder %s37, 0
      %p520 = por %p518, %p519
      %p521 = scmp.le.s32.totalorder 1, %s31
      %p522 = scmp.lt.s32.totalorder %s31, 3
      %p523 = pnand %p521, %p522
      %p524 = pneg %p523
      // Predicated region
      $region9: #{vae_forward.1} parent=5 // pred_check
        _
      $region10: #{vae_forward.1} parent=5 // pred_check_branch
        %526 = sbr.rel (%p523) target = $region12
      $region11: #{vae_forward.1} parent=5 // pred_region
        %s527 = ssub.s32 %s31, 1
        // Predicated region
        $region13: #{vae_forward.1} parent=11 // pred_check
          %p528 = pneg %p104
        $region14: #{vae_forward.1} parent=11 // pred_check_branch
          %530 = sbr.rel (%p528) target = $region16
        $region15: #{vae_forward.1} parent=11 // pred_region
          %s532 = ssub.s32 32768, 32768
          %533 = vsyncadd [#allocation3], %s532
          %s534 = sshll.u32 [#allocation2], 4
          %s535 = int_to_ptr.vmem [resolvable:$true] %s534
          %540 = dma.hbm_to_vmem [thread:$0]  %s2, 32768, %s535, [#allocation3], 256, 256, 16
        $region16: #{vae_forward.1} parent=11 // pred_fallthru
          _
        // Predicated region
        $region17: #{vae_forward.1} parent=11 // pred_check
          %p541 = pneg %p125
        $region18: #{vae_forward.1} parent=11 // pred_check_branch
          %543 = sbr.rel (%p541) target = $region20
        $region19: #{vae_forward.1} parent=11 // pred_region
          _
        $region20: #{vae_forward.1} parent=11 // pred_fallthru
          _
        // Predicated region
        $region21: #{vae_forward.1} parent=11 // pred_check
          %p544 = pneg %p146
        $region22: #{vae_forward.1} parent=11 // pred_check_branch
          %546 = sbr.rel (%p544) target = $region24
        $region23: #{vae_forward.1} parent=11 // pred_region
          _
        $region24: #{vae_forward.1} parent=11 // pred_fallthru
          _
        // Predicated region
        $region25: #{vae_forward.1} parent=11 // pred_check
          %p547 = pneg %p167
        $region26: #{vae_forward.1} parent=11 // pred_check_branch
          %549 = sbr.rel (%p547) target = $region28
        $region27: #{vae_forward.1} parent=11 // pred_region
          _
        $region28: #{vae_forward.1} parent=11 // pred_fallthru
          _
        // Predicated region
        $region29: #{vae_forward.1} parent=11 // pred_check
          %p550 = pneg %p188
        $region30: #{vae_forward.1} parent=11 // pred_check_branch
          %552 = sbr.rel (%p550) target = $region32
        $region31: #{vae_forward.1} parent=11 // pred_region
          %s554 = ssub.s32 8192, 8192
          %555 = vsyncadd [#allocation5], %s554
          %s556 = sshll.u32 [#allocation4], 4
          %s557 = int_to_ptr.vmem [resolvable:$true] %s556
          %562 = dma.hbm_to_vmem [thread:$0]  %s6, 8192, %s557, [#allocation5], 128, 128, 8
        $region32: #{vae_forward.1} parent=11 // pred_fallthru
          _
        // Predicated region
        $region33: #{vae_forward.1} parent=11 // pred_check
          %p563 = pneg %p209
        $region34: #{vae_forward.1} parent=11 // pred_check_branch
          %565 = sbr.rel (%p563) target = $region36
        $region35: #{vae_forward.1} parent=11 // pred_region
          _
        $region36: #{vae_forward.1} parent=11 // pred_fallthru
          _
        // Predicated region
        $region37: #{vae_forward.1} parent=11 // pred_check
          %p566 = pneg %p230
        $region38: #{vae_forward.1} parent=11 // pred_check_branch
          %568 = sbr.rel (%p566) target = $region40
        $region39: #{vae_forward.1} parent=11 // pred_region
          _
        $region40: #{vae_forward.1} parent=11 // pred_fallthru
          _
        // Predicated region
        $region41: #{vae_forward.1} parent=11 // pred_check
          %p569 = pneg %p251
        $region42: #{vae_forward.1} parent=11 // pred_check_branch
          %571 = sbr.rel (%p569) target = $region44
        $region43: #{vae_forward.1} parent=11 // pred_region
          _
        $region44: #{vae_forward.1} parent=11 // pred_fallthru
          _
        // Predicated region
        $region45: #{vae_forward.1} parent=11 // pred_check
          %p572 = pneg %p272
        $region46: #{vae_forward.1} parent=11 // pred_check_branch
          %574 = sbr.rel (%p572) target = $region48
        $region47: #{vae_forward.1} parent=11 // pred_region
          _
        $region48: #{vae_forward.1} parent=11 // pred_fallthru
          _
        // Predicated region
        $region49: #{vae_forward.1} parent=11 // pred_check
          %p575 = pneg %p293
        $region50: #{vae_forward.1} parent=11 // pred_check_branch
          %577 = sbr.rel (%p575) target = $region52
        $region51: #{vae_forward.1} parent=11 // pred_region
          _
        $region52: #{vae_forward.1} parent=11 // pred_fallthru
          _
        // Predicated region
        $region53: #{vae_forward.1} parent=11 // pred_check
          %p578 = pneg %p314
        $region54: #{vae_forward.1} parent=11 // pred_check_branch
          %580 = sbr.rel (%p578) target = $region56
        $region55: #{vae_forward.1} parent=11 // pred_region
          _
        $region56: #{vae_forward.1} parent=11 // pred_fallthru
          _
        // Predicated region
        $region57: #{vae_forward.1} parent=11 // pred_check
          %p581 = pneg %p335
        $region58: #{vae_forward.1} parent=11 // pred_check_branch
          %583 = sbr.rel (%p581) target = $region60
        $region59: #{vae_forward.1} parent=11 // pred_region
          _
        $region60: #{vae_forward.1} parent=11 // pred_fallthru
          _
        // Predicated region
        $region61: #{vae_forward.1} parent=11 // pred_check
          %p584 = pneg %p356
        $region62: #{vae_forward.1} parent=11 // pred_check_branch
          %586 = sbr.rel (%p584) target = $region64
        $region63: #{vae_forward.1} parent=11 // pred_region
          %s588 = ssub.s32 8192, 8192
          %589 = vsyncadd [#allocation5], %s588
          %s590 = sshll.u32 [#allocation6], 4
          %s591 = int_to_ptr.vmem [resolvable:$true] %s590
          %596 = dma.hbm_to_vmem [thread:$0]  %s14, 8192, %s591, [#allocation5], 256, 256, 16
        $region64: #{vae_forward.1} parent=11 // pred_fallthru
          _
        // Predicated region
        $region65: #{vae_forward.1} parent=11 // pred_check
          %p597 = pneg %p377
        $region66: #{vae_forward.1} parent=11 // pred_check_branch
          %599 = sbr.rel (%p597) target = $region68
        $region67: #{vae_forward.1} parent=11 // pred_region
          _
        $region68: #{vae_forward.1} parent=11 // pred_fallthru
          _
        // Predicated region
        $region69: #{vae_forward.1} parent=11 // pred_check
          %p600 = pneg %p398
        $region70: #{vae_forward.1} parent=11 // pred_check_branch
          %602 = sbr.rel (%p600) target = $region72
        $region71: #{vae_forward.1} parent=11 // pred_region
          _
        $region72: #{vae_forward.1} parent=11 // pred_fallthru
          _
        // Predicated region
        $region73: #{vae_forward.1} parent=11 // pred_check
          %p603 = pneg %p419
        $region74: #{vae_forward.1} parent=11 // pred_check_branch
          %605 = sbr.rel (%p603) target = $region76
        $region75: #{vae_forward.1} parent=11 // pred_region
          _
        $region76: #{vae_forward.1} parent=11 // pred_fallthru
          _
        // Predicated region
        $region77: #{vae_forward.1} parent=11 // pred_check
          %p606 = pneg %p440
        $region78: #{vae_forward.1} parent=11 // pred_check_branch
          %608 = sbr.rel (%p606) target = $region80
        $region79: #{vae_forward.1} parent=11 // pred_region
          %s610 = ssub.s32 32768, 32768
          %611 = vsyncadd [#allocation8], %s610
          %s612 = sshll.u32 [#allocation7], 4
          %s613 = int_to_ptr.vmem [resolvable:$true] %s612
          %618 = dma.hbm_to_vmem [thread:$0]  %s18, 32768, %s613, [#allocation8], 512, 512, 32
        $region80: #{vae_forward.1} parent=11 // pred_fallthru
          _
        // Predicated region
        $region81: #{vae_forward.1} parent=11 // pred_check
          %p619 = pneg %p461
        $region82: #{vae_forward.1} parent=11 // pred_check_branch
          %621 = sbr.rel (%p619) target = $region84
        $region83: #{vae_forward.1} parent=11 // pred_region
          _
        $region84: #{vae_forward.1} parent=11 // pred_fallthru
          _
      $region12: #{vae_forward.1} parent=5 // pred_fallthru
        _
      %p622 = scmp.lt.s32.totalorder %s31, 2
      // Predicated region
      $region85: #{vae_forward.1} parent=5 // pred_check
        %p623 = pneg %p622
      $region86: #{vae_forward.1} parent=5 // pred_check_branch
        %625 = sbr.rel (%p623) target = $region88
      $region87: #{vae_forward.1} parent=5 // pred_region
        // Predicated region
        $region89: #{vae_forward.1} parent=87 // pred_check
          %p626 = pneg %p51
        $region90: #{vae_forward.1} parent=87 // pred_check_branch
          %628 = sbr.rel (%p626) target = $region92
        $region91: #{vae_forward.1} parent=87 // pred_region
          %p629 = scmp.lt.s32.totalorder %s31, 1
          %s630 = scalar_select %p629, %s31, 1
          %s631 = smul.addr %s630, 8
          %s632 = scalar_lea.vmem %s0, %s631
        $region92: #{vae_forward.1} parent=87 // pred_fallthru
          _
        // Predicated region
        $region93: #{vae_forward.1} parent=87 // pred_check
          %p633 = pneg %p77
        $region94: #{vae_forward.1} parent=87 // pred_check_branch
          %635 = sbr.rel (%p633) target = $region96
        $region95: #{vae_forward.1} parent=87 // pred_region
          %p636 = scmp.lt.s32.totalorder %s31, 1
          %s637 = scalar_select %p636, %s31, 1
          %s638 = scalar_lea.vmem %s1, %s637
        $region96: #{vae_forward.1} parent=87 // pred_fallthru
          _
      $region88: #{vae_forward.1} parent=5 // pred_fallthru
        _
      %p639 = scmp.le.s32.totalorder 1, %s31
      %p640 = scmp.lt.s32.totalorder %s31, 3
      %p641 = pnand %p639, %p640
      %p642 = pneg %p641
      // Predicated region
      $region97: #{vae_forward.1} parent=5 // pred_check
        _
      $region98: #{vae_forward.1} parent=5 // pred_check_branch
        %644 = sbr.rel (%p641) target = $region100
      $region99: #{vae_forward.1} parent=5 // pred_region
        %s645 = ssub.s32 %s31, 1
        // Predicated region
        $region101: #{vae_forward.1} parent=99 // pred_check
          %p646 = pneg %p104
        $region102: #{vae_forward.1} parent=99 // pred_check_branch
          %648 = sbr.rel (%p646) target = $region104
        $region103: #{vae_forward.1} parent=99 // pred_region
          %649 = dma.done [#allocation3], 32768
        $region104: #{vae_forward.1} parent=99 // pred_fallthru
          _
        // Predicated region
        $region105: #{vae_forward.1} parent=99 // pred_check
          %p650 = pneg %p188
        $region106: #{vae_forward.1} parent=99 // pred_check_branch
          %652 = sbr.rel (%p650) target = $region108
        $region107: #{vae_forward.1} parent=99 // pred_region
          %653 = dma.done [#allocation5], 8192
        $region108: #{vae_forward.1} parent=99 // pred_fallthru
          _
        // Predicated region
        $region109: #{vae_forward.1} parent=99 // pred_check
          %p654 = pneg %p356
        $region110: #{vae_forward.1} parent=99 // pred_check_branch
          %656 = sbr.rel (%p654) target = $region112
        $region111: #{vae_forward.1} parent=99 // pred_region
          %657 = dma.done [#allocation5], 8192
        $region112: #{vae_forward.1} parent=99 // pred_fallthru
          _
        // Predicated region
        $region113: #{vae_forward.1} parent=99 // pred_check
          %p658 = pneg %p440
        $region114: #{vae_forward.1} parent=99 // pred_check_branch
          %660 = sbr.rel (%p658) target = $region116
        $region115: #{vae_forward.1} parent=99 // pred_region
          %661 = dma.done [#allocation8], 32768
        $region116: #{vae_forward.1} parent=99 // pred_fallthru
          _
        %p662 = scmp.lt.s32.totalorder %s36, 1
        %s663 = scalar_select %p662, %s36, 1
        %s664 = smul.addr %s663, 8
        %s665 = scalar_lea.vmem %s0, %s664
        %p666 = pneg %p57
        %p667 = pneg %p54
        %p668 = scmp.lt.s32.totalorder %s36, 1
        %s669 = scalar_select %p668, %s36, 1
        %s670 = scalar_lea.vmem %s1, %s669
        %p671 = pneg %p83
        %p672 = pneg %p80
        %p673 = pneg %p104
        %p674 = pneg %p101
        %p675 = pneg %p125
        %p676 = pneg %p122
        %p677 = pneg %p146
        %p678 = pneg %p143
        %p679 = pneg %p167
        %p680 = pneg %p164
        %p681 = pneg %p188
        %p682 = pneg %p185
        %p683 = pneg %p209
        %p684 = pneg %p206
        %p685 = pneg %p230
        %p686 = pneg %p227
        %p687 = pneg %p251
        %p688 = pneg %p248
        %p689 = pneg %p272
        %p690 = pneg %p269
        %p691 = pneg %p293
        %p692 = pneg %p290
        %p693 = pneg %p314
        %p694 = pneg %p311
        %p695 = pneg %p335
        %p696 = pneg %p332
        %p697 = pneg %p356
        %p698 = pneg %p353
        %p699 = pneg %p377
        %p700 = pneg %p374
        %p701 = pneg %p398
        %p702 = pneg %p395
        %p703 = pneg %p419
        %p704 = pneg %p416
        %p705 = pneg %p440
        %p706 = pneg %p437
        %p707 = pneg %p461
        %p708 = pneg %p458
        %p709 = pneg %p487
        %p710 = pneg %p484
        %p711 = scmp.lt.s32.totalorder %s36, 1
        %s712 = scalar_select %p711, %s36, 1
        %s713 = smul.addr %s712, 8
        %s714 = scalar_lea.vmem %s20, %s713
        %p715 = pneg %p513
        %p716 = pneg %p510
        %p717 = scmp.lt.s32.totalorder %s36, 1
        %s718 = scalar_select %p717, %s36, 1
        %s719 = scalar_lea.vmem %s21, %s718
        %p720 = scmp.lt.s32.totalorder %s36, 1
        %s721 = scalar_select %p720, %s36, 1
        %s722 = smul.addr %s721, 8
        %s723 = scalar_lea.vmem %s0, %s722
        %p724 = scmp.lt.s32.totalorder %s36, 1
        %s725 = scalar_select %p724, %s36, 1
        %s726 = scalar_lea.vmem %s1, %s725
        %p727 = scmp.lt.s32.totalorder %s36, 1
        %s728 = scalar_select %p727, %s36, 1
        %s729 = smul.addr %s728, 8
        %s730 = scalar_lea.vmem %s20, %s729
        %p731 = scmp.lt.s32.totalorder %s36, 1
        %s732 = scalar_select %p731, %s36, 1
        %s733 = scalar_lea.vmem %s21, %s732
        %v735 = vld [vmem:[%s723] sm:$0xff]
        %v736 = vld [vmem:[%s726] sm:$0x1]
        %v738 = vlaneseq
        %v739 = vshrl.u32 %v738, 7
        %v740 = vsub.s32 0, %v739
        %v741 = vrot.slane %v735, %v740
        %v742 = vlaneseq
        %v743 = vshrl.u32 %v742, 7
        %v744 = vsub.s32 1, %v743
        %v745 = vrot.slane %v735, %v744
        %v746 = vlaneseq
        %v747 = vshrl.u32 %v746, 7
        %v748 = vsub.s32 2, %v747
        %v749 = vrot.slane %v735, %v748
        %v750 = vlaneseq
        %v751 = vshrl.u32 %v750, 7
        %v752 = vsub.s32 3, %v751
        %v753 = vrot.slane %v735, %v752
        %v754 = vlaneseq
        %v755 = vshrl.u32 %v754, 7
        %v756 = vsub.s32 4, %v755
        %v757 = vrot.slane %v735, %v756
        %v758 = vlaneseq
        %v759 = vshrl.u32 %v758, 7
        %v760 = vsub.s32 5, %v759
        %v761 = vrot.slane %v735, %v760
        %v762 = vlaneseq
        %v763 = vshrl.u32 %v762, 7
        %v764 = vsub.s32 6, %v763
        %v765 = vrot.slane %v735, %v764
        %v766 = vlaneseq
        %v767 = vshrl.u32 %v766, 7
        %v768 = vsub.s32 7, %v767
        %v769 = vrot.slane %v735, %v768
        %v778 = vpack.c.bf16 %v741, %v741
        %v779 = vpack.c.bf16 %v745, %v745
        %v780 = vpack.c.bf16 %v749, %v749
        %v781 = vpack.c.bf16 %v753, %v753
        %v782 = vpack.c.bf16 %v757, %v757
        %v783 = vpack.c.bf16 %v761, %v761
        %v784 = vpack.c.bf16 %v765, %v765
        %v785 = vpack.c.bf16 %v769, %v769
        %v786 = vld [vmem:[#allocation2] sm:$0xff]
        %v787 = vld [vmem:[#allocation2 + $0x8] sm:$0xff]
        %v788 = vld [vmem:[#allocation2 + $0x10] sm:$0xff]
        %v789 = vld [vmem:[#allocation2 + $0x18] sm:$0xff]
        %v790 = vld [vmem:[#allocation2 + $0x20] sm:$0xff]
        %v791 = vld [vmem:[#allocation2 + $0x28] sm:$0xff]
        %v792 = vld [vmem:[#allocation2 + $0x30] sm:$0xff]
        %v793 = vld [vmem:[#allocation2 + $0x38] sm:$0xff]
        %v794 = vld [vmem:[#allocation2 + $0x40] sm:$0xff]
        %v795 = vld [vmem:[#allocation2 + $0x48] sm:$0xff]
        %v796 = vld [vmem:[#allocation2 + $0x50] sm:$0xff]
        %v797 = vld [vmem:[#allocation2 + $0x58] sm:$0xff]
        %v798 = vld [vmem:[#allocation2 + $0x60] sm:$0xff]
        %v799 = vld [vmem:[#allocation2 + $0x68] sm:$0xff]
        %v800 = vld [vmem:[#allocation2 + $0x70] sm:$0xff]
        %v801 = vld [vmem:[#allocation2 + $0x78] sm:$0xff]
        %v802 = vld [vmem:[#allocation2 + $0x80] sm:$0xff]
        %v803 = vld [vmem:[#allocation2 + $0x88] sm:$0xff]
        %v804 = vld [vmem:[#allocation2 + $0x90] sm:$0xff]
        %v805 = vld [vmem:[#allocation2 + $0x98] sm:$0xff]
        %v806 = vld [vmem:[#allocation2 + $0xa0] sm:$0xff]
        %v807 = vld [vmem:[#allocation2 + $0xa8] sm:$0xff]
        %v808 = vld [vmem:[#allocation2 + $0xb0] sm:$0xff]
        %v809 = vld [vmem:[#allocation2 + $0xb8] sm:$0xff]
        %v810 = vld [vmem:[#allocation2 + $0xc0] sm:$0xff]
        %v811 = vld [vmem:[#allocation2 + $0xc8] sm:$0xff]
        %v812 = vld [vmem:[#allocation2 + $0xd0] sm:$0xff]
        %v813 = vld [vmem:[#allocation2 + $0xd8] sm:$0xff]
        %v814 = vld [vmem:[#allocation2 + $0xe0] sm:$0xff]
        %v815 = vld [vmem:[#allocation2 + $0xe8] sm:$0xff]
        %v816 = vld [vmem:[#allocation2 + $0xf0] sm:$0xff]
        %v817 = vld [vmem:[#allocation2 + $0xf8] sm:$0xff]
        %v818 = vld [vmem:[#allocation2 + $0x100] sm:$0xff]
        %v819 = vld [vmem:[#allocation2 + $0x108] sm:$0xff]
        %v820 = vld [vmem:[#allocation2 + $0x110] sm:$0xff]
        %v821 = vld [vmem:[#allocation2 + $0x118] sm:$0xff]
        %v822 = vld [vmem:[#allocation2 + $0x120] sm:$0xff]
        %v823 = vld [vmem:[#allocation2 + $0x128] sm:$0xff]
        %v824 = vld [vmem:[#allocation2 + $0x130] sm:$0xff]
        %v825 = vld [vmem:[#allocation2 + $0x138] sm:$0xff]
        %v826 = vld [vmem:[#allocation2 + $0x140] sm:$0xff]
        %v827 = vld [vmem:[#allocation2 + $0x148] sm:$0xff]
        %v828 = vld [vmem:[#allocation2 + $0x150] sm:$0xff]
        %v829 = vld [vmem:[#allocation2 + $0x158] sm:$0xff]
        %v830 = vld [vmem:[#allocation2 + $0x160] sm:$0xff]
        %v831 = vld [vmem:[#allocation2 + $0x168] sm:$0xff]
        %v832 = vld [vmem:[#allocation2 + $0x170] sm:$0xff]
        %v833 = vld [vmem:[#allocation2 + $0x178] sm:$0xff]
        %v834 = vld [vmem:[#allocation2 + $0x180] sm:$0xff]
        %v835 = vld [vmem:[#allocation2 + $0x188] sm:$0xff]
        %v836 = vld [vmem:[#allocation2 + $0x190] sm:$0xff]
        %v837 = vld [vmem:[#allocation2 + $0x198] sm:$0xff]
        %v838 = vld [vmem:[#allocation2 + $0x1a0] sm:$0xff]
        %v839 = vld [vmem:[#allocation2 + $0x1a8] sm:$0xff]
        %v840 = vld [vmem:[#allocation2 + $0x1b0] sm:$0xff]
        %v841 = vld [vmem:[#allocation2 + $0x1b8] sm:$0xff]
        %v842 = vld [vmem:[#allocation2 + $0x1c0] sm:$0xff]
        %v843 = vld [vmem:[#allocation2 + $0x1c8] sm:$0xff]
        %v844 = vld [vmem:[#allocation2 + $0x1d0] sm:$0xff]
        %v845 = vld [vmem:[#allocation2 + $0x1d8] sm:$0xff]
        %v846 = vld [vmem:[#allocation2 + $0x1e0] sm:$0xff]
        %v847 = vld [vmem:[#allocation2 + $0x1e8] sm:$0xff]
        %v848 = vld [vmem:[#allocation2 + $0x1f0] sm:$0xff]
        %v849 = vld [vmem:[#allocation2 + $0x1f8] sm:$0xff]
        %v850 = vld [vmem:[#allocation2 + $0x200] sm:$0xff]
        %v851 = vld [vmem:[#allocation2 + $0x208] sm:$0xff]
        %v852 = vld [vmem:[#allocation2 + $0x210] sm:$0xff]
        %v853 = vld [vmem:[#allocation2 + $0x218] sm:$0xff]
        %v854 = vld [vmem:[#allocation2 + $0x220] sm:$0xff]
        %v855 = vld [vmem:[#allocation2 + $0x228] sm:$0xff]
        %v856 = vld [vmem:[#allocation2 + $0x230] sm:$0xff]
        %v857 = vld [vmem:[#allocation2 + $0x238] sm:$0xff]
        %v858 = vld [vmem:[#allocation2 + $0x240] sm:$0xff]
        %v859 = vld [vmem:[#allocation2 + $0x248] sm:$0xff]
        %v860 = vld [vmem:[#allocation2 + $0x250] sm:$0xff]
        %v861 = vld [vmem:[#allocation2 + $0x258] sm:$0xff]
        %v862 = vld [vmem:[#allocation2 + $0x260] sm:$0xff]
        %v863 = vld [vmem:[#allocation2 + $0x268] sm:$0xff]
        %v864 = vld [vmem:[#allocation2 + $0x270] sm:$0xff]
        %v865 = vld [vmem:[#allocation2 + $0x278] sm:$0xff]
        %v866 = vld [vmem:[#allocation2 + $0x280] sm:$0xff]
        %v867 = vld [vmem:[#allocation2 + $0x288] sm:$0xff]
        %v868 = vld [vmem:[#allocation2 + $0x290] sm:$0xff]
        %v869 = vld [vmem:[#allocation2 + $0x298] sm:$0xff]
        %v870 = vld [vmem:[#allocation2 + $0x2a0] sm:$0xff]
        %v871 = vld [vmem:[#allocation2 + $0x2a8] sm:$0xff]
        %v872 = vld [vmem:[#allocation2 + $0x2b0] sm:$0xff]
        %v873 = vld [vmem:[#allocation2 + $0x2b8] sm:$0xff]
        %v874 = vld [vmem:[#allocation2 + $0x2c0] sm:$0xff]
        %v875 = vld [vmem:[#allocation2 + $0x2c8] sm:$0xff]
        %v876 = vld [vmem:[#allocation2 + $0x2d0] sm:$0xff]
        %v877 = vld [vmem:[#allocation2 + $0x2d8] sm:$0xff]
        %v878 = vld [vmem:[#allocation2 + $0x2e0] sm:$0xff]
        %v879 = vld [vmem:[#allocation2 + $0x2e8] sm:$0xff]
        %v880 = vld [vmem:[#allocation2 + $0x2f0] sm:$0xff]
        %v881 = vld [vmem:[#allocation2 + $0x2f8] sm:$0xff]
        %v882 = vld [vmem:[#allocation2 + $0x300] sm:$0xff]
        %v883 = vld [vmem:[#allocation2 + $0x308] sm:$0xff]
        %v884 = vld [vmem:[#allocation2 + $0x310] sm:$0xff]
        %v885 = vld [vmem:[#allocation2 + $0x318] sm:$0xff]
        %v886 = vld [vmem:[#allocation2 + $0x320] sm:$0xff]
        %v887 = vld [vmem:[#allocation2 + $0x328] sm:$0xff]
        %v888 = vld [vmem:[#allocation2 + $0x330] sm:$0xff]
        %v889 = vld [vmem:[#allocation2 + $0x338] sm:$0xff]
        %v890 = vld [vmem:[#allocation2 + $0x340] sm:$0xff]
        %v891 = vld [vmem:[#allocation2 + $0x348] sm:$0xff]
        %v892 = vld [vmem:[#allocation2 + $0x350] sm:$0xff]
        %v893 = vld [vmem:[#allocation2 + $0x358] sm:$0xff]
        %v894 = vld [vmem:[#allocation2 + $0x360] sm:$0xff]
        %v895 = vld [vmem:[#allocation2 + $0x368] sm:$0xff]
        %v896 = vld [vmem:[#allocation2 + $0x370] sm:$0xff]
        %v897 = vld [vmem:[#allocation2 + $0x378] sm:$0xff]
        %v898 = vld [vmem:[#allocation2 + $0x380] sm:$0xff]
        %v899 = vld [vmem:[#allocation2 + $0x388] sm:$0xff]
        %v900 = vld [vmem:[#allocation2 + $0x390] sm:$0xff]
        %v901 = vld [vmem:[#allocation2 + $0x398] sm:$0xff]
        %v902 = vld [vmem:[#allocation2 + $0x3a0] sm:$0xff]
        %v903 = vld [vmem:[#allocation2 + $0x3a8] sm:$0xff]
        %v904 = vld [vmem:[#allocation2 + $0x3b0] sm:$0xff]
        %v905 = vld [vmem:[#allocation2 + $0x3b8] sm:$0xff]
        %v906 = vld [vmem:[#allocation2 + $0x3c0] sm:$0xff]
        %v907 = vld [vmem:[#allocation2 + $0x3c8] sm:$0xff]
        %v908 = vld [vmem:[#allocation2 + $0x3d0] sm:$0xff]
        %v909 = vld [vmem:[#allocation2 + $0x3d8] sm:$0xff]
        %v910 = vld [vmem:[#allocation2 + $0x3e0] sm:$0xff]
        %v911 = vld [vmem:[#allocation2 + $0x3e8] sm:$0xff]
        %v912 = vld [vmem:[#allocation2 + $0x3f0] sm:$0xff]
        %v913 = vld [vmem:[#allocation2 + $0x3f8] sm:$0xff]
        %v914 = vld [vmem:[#allocation2 + $0x400] sm:$0xff]
        %v915 = vld [vmem:[#allocation2 + $0x408] sm:$0xff]
        %v916 = vld [vmem:[#allocation2 + $0x410] sm:$0xff]
        %v917 = vld [vmem:[#allocation2 + $0x418] sm:$0xff]
        %v918 = vld [vmem:[#allocation2 + $0x420] sm:$0xff]
        %v919 = vld [vmem:[#allocation2 + $0x428] sm:$0xff]
        %v920 = vld [vmem:[#allocation2 + $0x430] sm:$0xff]
        %v921 = vld [vmem:[#allocation2 + $0x438] sm:$0xff]
        %v922 = vld [vmem:[#allocation2 + $0x440] sm:$0xff]
        %v923 = vld [vmem:[#allocation2 + $0x448] sm:$0xff]
        %v924 = vld [vmem:[#allocation2 + $0x450] sm:$0xff]
        %v925 = vld [vmem:[#allocation2 + $0x458] sm:$0xff]
        %v926 = vld [vmem:[#allocation2 + $0x460] sm:$0xff]
        %v927 = vld [vmem:[#allocation2 + $0x468] sm:$0xff]
        %v928 = vld [vmem:[#allocation2 + $0x470] sm:$0xff]
        %v929 = vld [vmem:[#allocation2 + $0x478] sm:$0xff]
        %v930 = vld [vmem:[#allocation2 + $0x480] sm:$0xff]
        %v931 = vld [vmem:[#allocation2 + $0x488] sm:$0xff]
        %v932 = vld [vmem:[#allocation2 + $0x490] sm:$0xff]
        %v933 = vld [vmem:[#allocation2 + $0x498] sm:$0xff]
        %v934 = vld [vmem:[#allocation2 + $0x4a0] sm:$0xff]
        %v935 = vld [vmem:[#allocation2 + $0x4a8] sm:$0xff]
        %v936 = vld [vmem:[#allocation2 + $0x4b0] sm:$0xff]
        %v937 = vld [vmem:[#allocation2 + $0x4b8] sm:$0xff]
        %v938 = vld [vmem:[#allocation2 + $0x4c0] sm:$0xff]
        %v939 = vld [vmem:[#allocation2 + $0x4c8] sm:$0xff]
        %v940 = vld [vmem:[#allocation2 + $0x4d0] sm:$0xff]
        %v941 = vld [vmem:[#allocation2 + $0x4d8] sm:$0xff]
        %v942 = vld [vmem:[#allocation2 + $0x4e0] sm:$0xff]
        %v943 = vld [vmem:[#allocation2 + $0x4e8] sm:$0xff]
        %v944 = vld [vmem:[#allocation2 + $0x4f0] sm:$0xff]
        %v945 = vld [vmem:[#allocation2 + $0x4f8] sm:$0xff]
        %v946 = vld [vmem:[#allocation2 + $0x500] sm:$0xff]
        %v947 = vld [vmem:[#allocation2 + $0x508] sm:$0xff]
        %v948 = vld [vmem:[#allocation2 + $0x510] sm:$0xff]
        %v949 = vld [vmem:[#allocation2 + $0x518] sm:$0xff]
        %v950 = vld [vmem:[#allocation2 + $0x520] sm:$0xff]
        %v951 = vld [vmem:[#allocation2 + $0x528] sm:$0xff]
        %v952 = vld [vmem:[#allocation2 + $0x530] sm:$0xff]
        %v953 = vld [vmem:[#allocation2 + $0x538] sm:$0xff]
        %v954 = vld [vmem:[#allocation2 + $0x540] sm:$0xff]
        %v955 = vld [vmem:[#allocation2 + $0x548] sm:$0xff]
        %v956 = vld [vmem:[#allocation2 + $0x550] sm:$0xff]
        %v957 = vld [vmem:[#allocation2 + $0x558] sm:$0xff]
        %v958 = vld [vmem:[#allocation2 + $0x560] sm:$0xff]
        %v959 = vld [vmem:[#allocation2 + $0x568] sm:$0xff]
        %v960 = vld [vmem:[#allocation2 + $0x570] sm:$0xff]
        %v961 = vld [vmem:[#allocation2 + $0x578] sm:$0xff]
        %v962 = vld [vmem:[#allocation2 + $0x580] sm:$0xff]
        %v963 = vld [vmem:[#allocation2 + $0x588] sm:$0xff]
        %v964 = vld [vmem:[#allocation2 + $0x590] sm:$0xff]
        %v965 = vld [vmem:[#allocation2 + $0x598] sm:$0xff]
        %v966 = vld [vmem:[#allocation2 + $0x5a0] sm:$0xff]
        %v967 = vld [vmem:[#allocation2 + $0x5a8] sm:$0xff]
        %v968 = vld [vmem:[#allocation2 + $0x5b0] sm:$0xff]
        %v969 = vld [vmem:[#allocation2 + $0x5b8] sm:$0xff]
        %v970 = vld [vmem:[#allocation2 + $0x5c0] sm:$0xff]
        %v971 = vld [vmem:[#allocation2 + $0x5c8] sm:$0xff]
        %v972 = vld [vmem:[#allocation2 + $0x5d0] sm:$0xff]
        %v973 = vld [vmem:[#allocation2 + $0x5d8] sm:$0xff]
        %v974 = vld [vmem:[#allocation2 + $0x5e0] sm:$0xff]
        %v975 = vld [vmem:[#allocation2 + $0x5e8] sm:$0xff]
        %v976 = vld [vmem:[#allocation2 + $0x5f0] sm:$0xff]
        %v977 = vld [vmem:[#allocation2 + $0x5f8] sm:$0xff]
        %v978 = vld [vmem:[#allocation2 + $0x600] sm:$0xff]
        %v979 = vld [vmem:[#allocation2 + $0x608] sm:$0xff]
        %v980 = vld [vmem:[#allocation2 + $0x610] sm:$0xff]
        %v981 = vld [vmem:[#allocation2 + $0x618] sm:$0xff]
        %v982 = vld [vmem:[#allocation2 + $0x620] sm:$0xff]
        %v983 = vld [vmem:[#allocation2 + $0x628] sm:$0xff]
        %v984 = vld [vmem:[#allocation2 + $0x630] sm:$0xff]
        %v985 = vld [vmem:[#allocation2 + $0x638] sm:$0xff]
        %v986 = vld [vmem:[#allocation2 + $0x640] sm:$0xff]
        %v987 = vld [vmem:[#allocation2 + $0x648] sm:$0xff]
        %v988 = vld [vmem:[#allocation2 + $0x650] sm:$0xff]
        %v989 = vld [vmem:[#allocation2 + $0x658] sm:$0xff]
        %v990 = vld [vmem:[#allocation2 + $0x660] sm:$0xff]
        %v991 = vld [vmem:[#allocation2 + $0x668] sm:$0xff]
        %v992 = vld [vmem:[#allocation2 + $0x670] sm:$0xff]
        %v993 = vld [vmem:[#allocation2 + $0x678] sm:$0xff]
        %v994 = vld [vmem:[#allocation2 + $0x680] sm:$0xff]
        %v995 = vld [vmem:[#allocation2 + $0x688] sm:$0xff]
        %v996 = vld [vmem:[#allocation2 + $0x690] sm:$0xff]
        %v997 = vld [vmem:[#allocation2 + $0x698] sm:$0xff]
        %v998 = vld [vmem:[#allocation2 + $0x6a0] sm:$0xff]
        %v999 = vld [vmem:[#allocation2 + $0x6a8] sm:$0xff]
        %v1000 = vld [vmem:[#allocation2 + $0x6b0] sm:$0xff]
        %v1001 = vld [vmem:[#allocation2 + $0x6b8] sm:$0xff]
        %v1002 = vld [vmem:[#allocation2 + $0x6c0] sm:$0xff]
        %v1003 = vld [vmem:[#allocation2 + $0x6c8] sm:$0xff]
        %v1004 = vld [vmem:[#allocation2 + $0x6d0] sm:$0xff]
        %v1005 = vld [vmem:[#allocation2 + $0x6d8] sm:$0xff]
        %v1006 = vld [vmem:[#allocation2 + $0x6e0] sm:$0xff]
        %v1007 = vld [vmem:[#allocation2 + $0x6e8] sm:$0xff]
        %v1008 = vld [vmem:[#allocation2 + $0x6f0] sm:$0xff]
        %v1009 = vld [vmem:[#allocation2 + $0x6f8] sm:$0xff]
        %v1010 = vld [vmem:[#allocation2 + $0x700] sm:$0xff]
        %v1011 = vld [vmem:[#allocation2 + $0x708] sm:$0xff]
        %v1012 = vld [vmem:[#allocation2 + $0x710] sm:$0xff]
        %v1013 = vld [vmem:[#allocation2 + $0x718] sm:$0xff]
        %v1014 = vld [vmem:[#allocation2 + $0x720] sm:$0xff]
        %v1015 = vld [vmem:[#allocation2 + $0x728] sm:$0xff]
        %v1016 = vld [vmem:[#allocation2 + $0x730] sm:$0xff]
        %v1017 = vld [vmem:[#allocation2 + $0x738] sm:$0xff]
        %v1018 = vld [vmem:[#allocation2 + $0x740] sm:$0xff]
        %v1019 = vld [vmem:[#allocation2 + $0x748] sm:$0xff]
        %v1020 = vld [vmem:[#allocation2 + $0x750] sm:$0xff]
        %v1021 = vld [vmem:[#allocation2 + $0x758] sm:$0xff]
        %v1022 = vld [vmem:[#allocation2 + $0x760] sm:$0xff]
        %v1023 = vld [vmem:[#allocation2 + $0x768] sm:$0xff]
        %v1024 = vld [vmem:[#allocation2 + $0x770] sm:$0xff]
        %v1025 = vld [vmem:[#allocation2 + $0x778] sm:$0xff]
        %v1026 = vld [vmem:[#allocation2 + $0x780] sm:$0xff]
        %v1027 = vld [vmem:[#allocation2 + $0x788] sm:$0xff]
        %v1028 = vld [vmem:[#allocation2 + $0x790] sm:$0xff]
        %v1029 = vld [vmem:[#allocation2 + $0x798] sm:$0xff]
        %v1030 = vld [vmem:[#allocation2 + $0x7a0] sm:$0xff]
        %v1031 = vld [vmem:[#allocation2 + $0x7a8] sm:$0xff]
        %v1032 = vld [vmem:[#allocation2 + $0x7b0] sm:$0xff]
        %v1033 = vld [vmem:[#allocation2 + $0x7b8] sm:$0xff]
        %v1034 = vld [vmem:[#allocation2 + $0x7c0] sm:$0xff]
        %v1035 = vld [vmem:[#allocation2 + $0x7c8] sm:$0xff]
        %v1036 = vld [vmem:[#allocation2 + $0x7d0] sm:$0xff]
        %v1037 = vld [vmem:[#allocation2 + $0x7d8] sm:$0xff]
        %v1038 = vld [vmem:[#allocation2 + $0x7e0] sm:$0xff]
        %v1039 = vld [vmem:[#allocation2 + $0x7e8] sm:$0xff]
        %v1040 = vld [vmem:[#allocation2 + $0x7f0] sm:$0xff]
        %v1041 = vld [vmem:[#allocation2 + $0x7f8] sm:$0xff]
        %v1042 = vld [vmem:[%s3] sm:$0xf]
        %v1299 = vunpack.c.l.b16 %v786
        %v1300 = vunpack.c.h.b16 %v786
        %v1301 = vunpack.c.l.b16 %v787
        %v1302 = vunpack.c.h.b16 %v787
        %v1303 = vunpack.c.l.b16 %v788
        %v1304 = vunpack.c.h.b16 %v788
        %v1305 = vunpack.c.l.b16 %v789
        %v1306 = vunpack.c.h.b16 %v789
        %v1307 = vunpack.c.l.b16 %v790
        %v1308 = vunpack.c.h.b16 %v790
        %v1309 = vunpack.c.l.b16 %v791
        %v1310 = vunpack.c.h.b16 %v791
        %v1311 = vunpack.c.l.b16 %v792
        %v1312 = vunpack.c.h.b16 %v792
        %v1313 = vunpack.c.l.b16 %v793
        %v1314 = vunpack.c.h.b16 %v793
        %v1315 = vunpack.c.l.b16 %v794
        %v1316 = vunpack.c.h.b16 %v794
        %v1317 = vunpack.c.l.b16 %v795
        %v1318 = vunpack.c.h.b16 %v795
        %v1319 = vunpack.c.l.b16 %v796
        %v1320 = vunpack.c.h.b16 %v796
        %v1321 = vunpack.c.l.b16 %v797
        %v1322 = vunpack.c.h.b16 %v797
        %v1323 = vunpack.c.l.b16 %v798
        %v1324 = vunpack.c.h.b16 %v798
        %v1325 = vunpack.c.l.b16 %v799
        %v1326 = vunpack.c.h.b16 %v799
        %v1327 = vunpack.c.l.b16 %v800
        %v1328 = vunpack.c.h.b16 %v800
        %v1329 = vunpack.c.l.b16 %v801
        %v1330 = vunpack.c.h.b16 %v801
        %v1331 = vunpack.c.l.b16 %v802
        %v1332 = vunpack.c.h.b16 %v802
        %v1333 = vunpack.c.l.b16 %v803
        %v1334 = vunpack.c.h.b16 %v803
        %v1335 = vunpack.c.l.b16 %v804
        %v1336 = vunpack.c.h.b16 %v804
        %v1337 = vunpack.c.l.b16 %v805
        %v1338 = vunpack.c.h.b16 %v805
        %v1339 = vunpack.c.l.b16 %v806
        %v1340 = vunpack.c.h.b16 %v806
        %v1341 = vunpack.c.l.b16 %v807
        %v1342 = vunpack.c.h.b16 %v807
        %v1343 = vunpack.c.l.b16 %v808
        %v1344 = vunpack.c.h.b16 %v808
        %v1345 = vunpack.c.l.b16 %v809
        %v1346 = vunpack.c.h.b16 %v809
        %v1347 = vunpack.c.l.b16 %v810
        %v1348 = vunpack.c.h.b16 %v810
        %v1349 = vunpack.c.l.b16 %v811
        %v1350 = vunpack.c.h.b16 %v811
        %v1351 = vunpack.c.l.b16 %v812
        %v1352 = vunpack.c.h.b16 %v812
        %v1353 = vunpack.c.l.b16 %v813
        %v1354 = vunpack.c.h.b16 %v813
        %v1355 = vunpack.c.l.b16 %v814
        %v1356 = vunpack.c.h.b16 %v814
        %v1357 = vunpack.c.l.b16 %v815
        %v1358 = vunpack.c.h.b16 %v815
        %v1359 = vunpack.c.l.b16 %v816
        %v1360 = vunpack.c.h.b16 %v816
        %v1361 = vunpack.c.l.b16 %v817
        %v1362 = vunpack.c.h.b16 %v817
        %v1363 = vunpack.c.l.b16 %v818
        %v1364 = vunpack.c.h.b16 %v818
        %v1365 = vunpack.c.l.b16 %v819
        %v1366 = vunpack.c.h.b16 %v819
        %v1367 = vunpack.c.l.b16 %v820
        %v1368 = vunpack.c.h.b16 %v820
        %v1369 = vunpack.c.l.b16 %v821
        %v1370 = vunpack.c.h.b16 %v821
        %v1371 = vunpack.c.l.b16 %v822
        %v1372 = vunpack.c.h.b16 %v822
        %v1373 = vunpack.c.l.b16 %v823
        %v1374 = vunpack.c.h.b16 %v823
        %v1375 = vunpack.c.l.b16 %v824
        %v1376 = vunpack.c.h.b16 %v824
        %v1377 = vunpack.c.l.b16 %v825
        %v1378 = vunpack.c.h.b16 %v825
        %v1379 = vunpack.c.l.b16 %v826
        %v1380 = vunpack.c.h.b16 %v826
        %v1381 = vunpack.c.l.b16 %v827
        %v1382 = vunpack.c.h.b16 %v827
        %v1383 = vunpack.c.l.b16 %v828
        %v1384 = vunpack.c.h.b16 %v828
        %v1385 = vunpack.c.l.b16 %v829
        %v1386 = vunpack.c.h.b16 %v829
        %v1387 = vunpack.c.l.b16 %v830
        %v1388 = vunpack.c.h.b16 %v830
        %v1389 = vunpack.c.l.b16 %v831
        %v1390 = vunpack.c.h.b16 %v831
        %v1391 = vunpack.c.l.b16 %v832
        %v1392 = vunpack.c.h.b16 %v832
        %v1393 = vunpack.c.l.b16 %v833
        %v1394 = vunpack.c.h.b16 %v833
        %v1395 = vunpack.c.l.b16 %v834
        %v1396 = vunpack.c.h.b16 %v834
        %v1397 = vunpack.c.l.b16 %v835
        %v1398 = vunpack.c.h.b16 %v835
        %v1399 = vunpack.c.l.b16 %v836
        %v1400 = vunpack.c.h.b16 %v836
        %v1401 = vunpack.c.l.b16 %v837
        %v1402 = vunpack.c.h.b16 %v837
        %v1403 = vunpack.c.l.b16 %v838
        %v1404 = vunpack.c.h.b16 %v838
        %v1405 = vunpack.c.l.b16 %v839
        %v1406 = vunpack.c.h.b16 %v839
        %v1407 = vunpack.c.l.b16 %v840
        %v1408 = vunpack.c.h.b16 %v840
        %v1409 = vunpack.c.l.b16 %v841
        %v1410 = vunpack.c.h.b16 %v841
        %v1411 = vunpack.c.l.b16 %v842
        %v1412 = vunpack.c.h.b16 %v842
        %v1413 = vunpack.c.l.b16 %v843
        %v1414 = vunpack.c.h.b16 %v843
        %v1415 = vunpack.c.l.b16 %v844
        %v1416 = vunpack.c.h.b16 %v844
        %v1417 = vunpack.c.l.b16 %v845
        %v1418 = vunpack.c.h.b16 %v845
        %v1419 = vunpack.c.l.b16 %v846
        %v1420 = vunpack.c.h.b16 %v846
        %v1421 = vunpack.c.l.b16 %v847
        %v1422 = vunpack.c.h.b16 %v847
        %v1423 = vunpack.c.l.b16 %v848
        %v1424 = vunpack.c.h.b16 %v848
        %v1425 = vunpack.c.l.b16 %v849
        %v1426 = vunpack.c.h.b16 %v849
        %v1427 = vunpack.c.l.b16 %v850
        %v1428 = vunpack.c.h.b16 %v850
        %v1429 = vunpack.c.l.b16 %v851
        %v1430 = vunpack.c.h.b16 %v851
        %v1431 = vunpack.c.l.b16 %v852
        %v1432 = vunpack.c.h.b16 %v852
        %v1433 = vunpack.c.l.b16 %v853
        %v1434 = vunpack.c.h.b16 %v853
        %v1435 = vunpack.c.l.b16 %v854
        %v1436 = vunpack.c.h.b16 %v854
        %v1437 = vunpack.c.l.b16 %v855
        %v1438 = vunpack.c.h.b16 %v855
        %v1439 = vunpack.c.l.b16 %v856
        %v1440 = vunpack.c.h.b16 %v856
        %v1441 = vunpack.c.l.b16 %v857
        %v1442 = vunpack.c.h.b16 %v857
        %v1443 = vunpack.c.l.b16 %v858
        %v1444 = vunpack.c.h.b16 %v858
        %v1445 = vunpack.c.l.b16 %v859
        %v1446 = vunpack.c.h.b16 %v859
        %v1447 = vunpack.c.l.b16 %v860
        %v1448 = vunpack.c.h.b16 %v860
        %v1449 = vunpack.c.l.b16 %v861
        %v1450 = vunpack.c.h.b16 %v861
        %v1451 = vunpack.c.l.b16 %v862
        %v1452 = vunpack.c.h.b16 %v862
        %v1453 = vunpack.c.l.b16 %v863
        %v1454 = vunpack.c.h.b16 %v863
        %v1455 = vunpack.c.l.b16 %v864
        %v1456 = vunpack.c.h.b16 %v864
        %v1457 = vunpack.c.l.b16 %v865
        %v1458 = vunpack.c.h.b16 %v865
        %v1459 = vunpack.c.l.b16 %v866
        %v1460 = vunpack.c.h.b16 %v866
        %v1461 = vunpack.c.l.b16 %v867
        %v1462 = vunpack.c.h.b16 %v867
        %v1463 = vunpack.c.l.b16 %v868
        %v1464 = vunpack.c.h.b16 %v868
        %v1465 = vunpack.c.l.b16 %v869
        %v1466 = vunpack.c.h.b16 %v869
        %v1467 = vunpack.c.l.b16 %v870
        %v1468 = vunpack.c.h.b16 %v870
        %v1469 = vunpack.c.l.b16 %v871
        %v1470 = vunpack.c.h.b16 %v871
        %v1471 = vunpack.c.l.b16 %v872
        %v1472 = vunpack.c.h.b16 %v872
        %v1473 = vunpack.c.l.b16 %v873
        %v1474 = vunpack.c.h.b16 %v873
        %v1475 = vunpack.c.l.b16 %v874
        %v1476 = vunpack.c.h.b16 %v874
        %v1477 = vunpack.c.l.b16 %v875
        %v1478 = vunpack.c.h.b16 %v875
        %v1479 = vunpack.c.l.b16 %v876
        %v1480 = vunpack.c.h.b16 %v876
        %v1481 = vunpack.c.l.b16 %v877
        %v1482 = vunpack.c.h.b16 %v877
        %v1483 = vunpack.c.l.b16 %v878
        %v1484 = vunpack.c.h.b16 %v878
        %v1485 = vunpack.c.l.b16 %v879
        %v1486 = vunpack.c.h.b16 %v879
        %v1487 = vunpack.c.l.b16 %v880
        %v1488 = vunpack.c.h.b16 %v880
        %v1489 = vunpack.c.l.b16 %v881
        %v1490 = vunpack.c.h.b16 %v881
        %v1491 = vunpack.c.l.b16 %v882
        %v1492 = vunpack.c.h.b16 %v882
        %v1493 = vunpack.c.l.b16 %v883
        %v1494 = vunpack.c.h.b16 %v883
        %v1495 = vunpack.c.l.b16 %v884
        %v1496 = vunpack.c.h.b16 %v884
        %v1497 = vunpack.c.l.b16 %v885
        %v1498 = vunpack.c.h.b16 %v885
        %v1499 = vunpack.c.l.b16 %v886
        %v1500 = vunpack.c.h.b16 %v886
        %v1501 = vunpack.c.l.b16 %v887
        %v1502 = vunpack.c.h.b16 %v887
        %v1503 = vunpack.c.l.b16 %v888
        %v1504 = vunpack.c.h.b16 %v888
        %v1505 = vunpack.c.l.b16 %v889
        %v1506 = vunpack.c.h.b16 %v889
        %v1507 = vunpack.c.l.b16 %v890
        %v1508 = vunpack.c.h.b16 %v890
        %v1509 = vunpack.c.l.b16 %v891
        %v1510 = vunpack.c.h.b16 %v891
        %v1511 = vunpack.c.l.b16 %v892
        %v1512 = vunpack.c.h.b16 %v892
        %v1513 = vunpack.c.l.b16 %v893
        %v1514 = vunpack.c.h.b16 %v893
        %v1515 = vunpack.c.l.b16 %v894
        %v1516 = vunpack.c.h.b16 %v894
        %v1517 = vunpack.c.l.b16 %v895
        %v1518 = vunpack.c.h.b16 %v895
        %v1519 = vunpack.c.l.b16 %v896
        %v1520 = vunpack.c.h.b16 %v896
        %v1521 = vunpack.c.l.b16 %v897
        %v1522 = vunpack.c.h.b16 %v897
        %v1523 = vunpack.c.l.b16 %v898
        %v1524 = vunpack.c.h.b16 %v898
        %v1525 = vunpack.c.l.b16 %v899
        %v1526 = vunpack.c.h.b16 %v899
        %v1527 = vunpack.c.l.b16 %v900
        %v1528 = vunpack.c.h.b16 %v900
        %v1529 = vunpack.c.l.b16 %v901
        %v1530 = vunpack.c.h.b16 %v901
        %v1531 = vunpack.c.l.b16 %v902
        %v1532 = vunpack.c.h.b16 %v902
        %v1533 = vunpack.c.l.b16 %v903
        %v1534 = vunpack.c.h.b16 %v903
        %v1535 = vunpack.c.l.b16 %v904
        %v1536 = vunpack.c.h.b16 %v904
        %v1537 = vunpack.c.l.b16 %v905
        %v1538 = vunpack.c.h.b16 %v905
        %v1539 = vunpack.c.l.b16 %v906
        %v1540 = vunpack.c.h.b16 %v906
        %v1541 = vunpack.c.l.b16 %v907
        %v1542 = vunpack.c.h.b16 %v907
        %v1543 = vunpack.c.l.b16 %v908
        %v1544 = vunpack.c.h.b16 %v908
        %v1545 = vunpack.c.l.b16 %v909
        %v1546 = vunpack.c.h.b16 %v909
        %v1547 = vunpack.c.l.b16 %v910
        %v1548 = vunpack.c.h.b16 %v910
        %v1549 = vunpack.c.l.b16 %v911
        %v1550 = vunpack.c.h.b16 %v911
        %v1551 = vunpack.c.l.b16 %v912
        %v1552 = vunpack.c.h.b16 %v912
        %v1553 = vunpack.c.l.b16 %v913
        %v1554 = vunpack.c.h.b16 %v913
        %v1555 = vunpack.c.l.b16 %v914
        %v1556 = vunpack.c.h.b16 %v914
        %v1557 = vunpack.c.l.b16 %v915
        %v1558 = vunpack.c.h.b16 %v915
        %v1559 = vunpack.c.l.b16 %v916
        %v1560 = vunpack.c.h.b16 %v916
        %v1561 = vunpack.c.l.b16 %v917
        %v1562 = vunpack.c.h.b16 %v917
        %v1563 = vunpack.c.l.b16 %v918
        %v1564 = vunpack.c.h.b16 %v918
        %v1565 = vunpack.c.l.b16 %v919
        %v1566 = vunpack.c.h.b16 %v919
        %v1567 = vunpack.c.l.b16 %v920
        %v1568 = vunpack.c.h.b16 %v920
        %v1569 = vunpack.c.l.b16 %v921
        %v1570 = vunpack.c.h.b16 %v921
        %v1571 = vunpack.c.l.b16 %v922
        %v1572 = vunpack.c.h.b16 %v922
        %v1573 = vunpack.c.l.b16 %v923
        %v1574 = vunpack.c.h.b16 %v923
        %v1575 = vunpack.c.l.b16 %v924
        %v1576 = vunpack.c.h.b16 %v924
        %v1577 = vunpack.c.l.b16 %v925
        %v1578 = vunpack.c.h.b16 %v925
        %v1579 = vunpack.c.l.b16 %v926
        %v1580 = vunpack.c.h.b16 %v926
        %v1581 = vunpack.c.l.b16 %v927
        %v1582 = vunpack.c.h.b16 %v927
        %v1583 = vunpack.c.l.b16 %v928
        %v1584 = vunpack.c.h.b16 %v928
        %v1585 = vunpack.c.l.b16 %v929
        %v1586 = vunpack.c.h.b16 %v929
        %v1587 = vunpack.c.l.b16 %v930
        %v1588 = vunpack.c.h.b16 %v930
        %v1589 = vunpack.c.l.b16 %v931
        %v1590 = vunpack.c.h.b16 %v931
        %v1591 = vunpack.c.l.b16 %v932
        %v1592 = vunpack.c.h.b16 %v932
        %v1593 = vunpack.c.l.b16 %v933
        %v1594 = vunpack.c.h.b16 %v933
        %v1595 = vunpack.c.l.b16 %v934
        %v1596 = vunpack.c.h.b16 %v934
        %v1597 = vunpack.c.l.b16 %v935
        %v1598 = vunpack.c.h.b16 %v935
        %v1599 = vunpack.c.l.b16 %v936
        %v1600 = vunpack.c.h.b16 %v936
        %v1601 = vunpack.c.l.b16 %v937
        %v1602 = vunpack.c.h.b16 %v937
        %v1603 = vunpack.c.l.b16 %v938
        %v1604 = vunpack.c.h.b16 %v938
        %v1605 = vunpack.c.l.b16 %v939
        %v1606 = vunpack.c.h.b16 %v939
        %v1607 = vunpack.c.l.b16 %v940
        %v1608 = vunpack.c.h.b16 %v940
        %v1609 = vunpack.c.l.b16 %v941
        %v1610 = vunpack.c.h.b16 %v941
        %v1611 = vunpack.c.l.b16 %v942
        %v1612 = vunpack.c.h.b16 %v942
        %v1613 = vunpack.c.l.b16 %v943
        %v1614 = vunpack.c.h.b16 %v943
        %v1615 = vunpack.c.l.b16 %v944
        %v1616 = vunpack.c.h.b16 %v944
        %v1617 = vunpack.c.l.b16 %v945
        %v1618 = vunpack.c.h.b16 %v945
        %v1619 = vunpack.c.l.b16 %v946
        %v1620 = vunpack.c.h.b16 %v946
        %v1621 = vunpack.c.l.b16 %v947
        %v1622 = vunpack.c.h.b16 %v947
        %v1623 = vunpack.c.l.b16 %v948
        %v1624 = vunpack.c.h.b16 %v948
        %v1625 = vunpack.c.l.b16 %v949
        %v1626 = vunpack.c.h.b16 %v949
        %v1627 = vunpack.c.l.b16 %v950
        %v1628 = vunpack.c.h.b16 %v950
        %v1629 = vunpack.c.l.b16 %v951
        %v1630 = vunpack.c.h.b16 %v951
        %v1631 = vunpack.c.l.b16 %v952
        %v1632 = vunpack.c.h.b16 %v952
        %v1633 = vunpack.c.l.b16 %v953
        %v1634 = vunpack.c.h.b16 %v953
        %v1635 = vunpack.c.l.b16 %v954
        %v1636 = vunpack.c.h.b16 %v954
        %v1637 = vunpack.c.l.b16 %v955
        %v1638 = vunpack.c.h.b16 %v955
        %v1639 = vunpack.c.l.b16 %v956
        %v1640 = vunpack.c.h.b16 %v956
        %v1641 = vunpack.c.l.b16 %v957
        %v1642 = vunpack.c.h.b16 %v957
        %v1643 = vunpack.c.l.b16 %v958
        %v1644 = vunpack.c.h.b16 %v958
        %v1645 = vunpack.c.l.b16 %v959
        %v1646 = vunpack.c.h.b16 %v959
        %v1647 = vunpack.c.l.b16 %v960
        %v1648 = vunpack.c.h.b16 %v960
        %v1649 = vunpack.c.l.b16 %v961
        %v1650 = vunpack.c.h.b16 %v961
        %v1651 = vunpack.c.l.b16 %v962
        %v1652 = vunpack.c.h.b16 %v962
        %v1653 = vunpack.c.l.b16 %v963
        %v1654 = vunpack.c.h.b16 %v963
        %v1655 = vunpack.c.l.b16 %v964
        %v1656 = vunpack.c.h.b16 %v964
        %v1657 = vunpack.c.l.b16 %v965
        %v1658 = vunpack.c.h.b16 %v965
        %v1659 = vunpack.c.l.b16 %v966
        %v1660 = vunpack.c.h.b16 %v966
        %v1661 = vunpack.c.l.b16 %v967
        %v1662 = vunpack.c.h.b16 %v967
        %v1663 = vunpack.c.l.b16 %v968
        %v1664 = vunpack.c.h.b16 %v968
        %v1665 = vunpack.c.l.b16 %v969
        %v1666 = vunpack.c.h.b16 %v969
        %v1667 = vunpack.c.l.b16 %v970
        %v1668 = vunpack.c.h.b16 %v970
        %v1669 = vunpack.c.l.b16 %v971
        %v1670 = vunpack.c.h.b16 %v971
        %v1671 = vunpack.c.l.b16 %v972
        %v1672 = vunpack.c.h.b16 %v972
        %v1673 = vunpack.c.l.b16 %v973
        %v1674 = vunpack.c.h.b16 %v973
        %v1675 = vunpack.c.l.b16 %v974
        %v1676 = vunpack.c.h.b16 %v974
        %v1677 = vunpack.c.l.b16 %v975
        %v1678 = vunpack.c.h.b16 %v975
        %v1679 = vunpack.c.l.b16 %v976
        %v1680 = vunpack.c.h.b16 %v976
        %v1681 = vunpack.c.l.b16 %v977
        %v1682 = vunpack.c.h.b16 %v977
        %v1683 = vunpack.c.l.b16 %v978
        %v1684 = vunpack.c.h.b16 %v978
        %v1685 = vunpack.c.l.b16 %v979
        %v1686 = vunpack.c.h.b16 %v979
        %v1687 = vunpack.c.l.b16 %v980
        %v1688 = vunpack.c.h.b16 %v980
        %v1689 = vunpack.c.l.b16 %v981
        %v1690 = vunpack.c.h.b16 %v981
        %v1691 = vunpack.c.l.b16 %v982
        %v1692 = vunpack.c.h.b16 %v982
        %v1693 = vunpack.c.l.b16 %v983
        %v1694 = vunpack.c.h.b16 %v983
        %v1695 = vunpack.c.l.b16 %v984
        %v1696 = vunpack.c.h.b16 %v984
        %v1697 = vunpack.c.l.b16 %v985
        %v1698 = vunpack.c.h.b16 %v985
        %v1699 = vunpack.c.l.b16 %v986
        %v1700 = vunpack.c.h.b16 %v986
        %v1701 = vunpack.c.l.b16 %v987
        %v1702 = vunpack.c.h.b16 %v987
        %v1703 = vunpack.c.l.b16 %v988
        %v1704 = vunpack.c.h.b16 %v988
        %v1705 = vunpack.c.l.b16 %v989
        %v1706 = vunpack.c.h.b16 %v989
        %v1707 = vunpack.c.l.b16 %v990
        %v1708 = vunpack.c.h.b16 %v990
        %v1709 = vunpack.c.l.b16 %v991
        %v1710 = vunpack.c.h.b16 %v991
        %v1711 = vunpack.c.l.b16 %v992
        %v1712 = vunpack.c.h.b16 %v992
        %v1713 = vunpack.c.l.b16 %v993
        %v1714 = vunpack.c.h.b16 %v993
        %v1715 = vunpack.c.l.b16 %v994
        %v1716 = vunpack.c.h.b16 %v994
        %v1717 = vunpack.c.l.b16 %v995
        %v1718 = vunpack.c.h.b16 %v995
        %v1719 = vunpack.c.l.b16 %v996
        %v1720 = vunpack.c.h.b16 %v996
        %v1721 = vunpack.c.l.b16 %v997
        %v1722 = vunpack.c.h.b16 %v997
        %v1723 = vunpack.c.l.b16 %v998
        %v1724 = vunpack.c.h.b16 %v998
        %v1725 = vunpack.c.l.b16 %v999
        %v1726 = vunpack.c.h.b16 %v999
        %v1727 = vunpack.c.l.b16 %v1000
        %v1728 = vunpack.c.h.b16 %v1000
        %v1729 = vunpack.c.l.b16 %v1001
        %v1730 = vunpack.c.h.b16 %v1001
        %v1731 = vunpack.c.l.b16 %v1002
        %v1732 = vunpack.c.h.b16 %v1002
        %v1733 = vunpack.c.l.b16 %v1003
        %v1734 = vunpack.c.h.b16 %v1003
        %v1735 = vunpack.c.l.b16 %v1004
        %v1736 = vunpack.c.h.b16 %v1004
        %v1737 = vunpack.c.l.b16 %v1005
        %v1738 = vunpack.c.h.b16 %v1005
        %v1739 = vunpack.c.l.b16 %v1006
        %v1740 = vunpack.c.h.b16 %v1006
        %v1741 = vunpack.c.l.b16 %v1007
        %v1742 = vunpack.c.h.b16 %v1007
        %v1743 = vunpack.c.l.b16 %v1008
        %v1744 = vunpack.c.h.b16 %v1008
        %v1745 = vunpack.c.l.b16 %v1009
        %v1746 = vunpack.c.h.b16 %v1009
        %v1747 = vunpack.c.l.b16 %v1010
        %v1748 = vunpack.c.h.b16 %v1010
        %v1749 = vunpack.c.l.b16 %v1011
        %v1750 = vunpack.c.h.b16 %v1011
        %v1751 = vunpack.c.l.b16 %v1012
        %v1752 = vunpack.c.h.b16 %v1012
        %v1753 = vunpack.c.l.b16 %v1013
        %v1754 = vunpack.c.h.b16 %v1013
        %v1755 = vunpack.c.l.b16 %v1014
        %v1756 = vunpack.c.h.b16 %v1014
        %v1757 = vunpack.c.l.b16 %v1015
        %v1758 = vunpack.c.h.b16 %v1015
        %v1759 = vunpack.c.l.b16 %v1016
        %v1760 = vunpack.c.h.b16 %v1016
        %v1761 = vunpack.c.l.b16 %v1017
        %v1762 = vunpack.c.h.b16 %v1017
        %v1763 = vunpack.c.l.b16 %v1018
        %v1764 = vunpack.c.h.b16 %v1018
        %v1765 = vunpack.c.l.b16 %v1019
        %v1766 = vunpack.c.h.b16 %v1019
        %v1767 = vunpack.c.l.b16 %v1020
        %v1768 = vunpack.c.h.b16 %v1020
        %v1769 = vunpack.c.l.b16 %v1021
        %v1770 = vunpack.c.h.b16 %v1021
        %v1771 = vunpack.c.l.b16 %v1022
        %v1772 = vunpack.c.h.b16 %v1022
        %v1773 = vunpack.c.l.b16 %v1023
        %v1774 = vunpack.c.h.b16 %v1023
        %v1775 = vunpack.c.l.b16 %v1024
        %v1776 = vunpack.c.h.b16 %v1024
        %v1777 = vunpack.c.l.b16 %v1025
        %v1778 = vunpack.c.h.b16 %v1025
        %v1779 = vunpack.c.l.b16 %v1026
        %v1780 = vunpack.c.h.b16 %v1026
        %v1781 = vunpack.c.l.b16 %v1027
        %v1782 = vunpack.c.h.b16 %v1027
        %v1783 = vunpack.c.l.b16 %v1028
        %v1784 = vunpack.c.h.b16 %v1028
        %v1785 = vunpack.c.l.b16 %v1029
        %v1786 = vunpack.c.h.b16 %v1029
        %v1787 = vunpack.c.l.b16 %v1030
        %v1788 = vunpack.c.h.b16 %v1030
        %v1789 = vunpack.c.l.b16 %v1031
        %v1790 = vunpack.c.h.b16 %v1031
        %v1791 = vunpack.c.l.b16 %v1032
        %v1792 = vunpack.c.h.b16 %v1032
        %v1793 = vunpack.c.l.b16 %v1033
        %v1794 = vunpack.c.h.b16 %v1033
        %v1795 = vunpack.c.l.b16 %v1034
        %v1796 = vunpack.c.h.b16 %v1034
        %v1797 = vunpack.c.l.b16 %v1035
        %v1798 = vunpack.c.h.b16 %v1035
        %v1799 = vunpack.c.l.b16 %v1036
        %v1800 = vunpack.c.h.b16 %v1036
        %v1801 = vunpack.c.l.b16 %v1037
        %v1802 = vunpack.c.h.b16 %v1037
        %v1803 = vunpack.c.l.b16 %v1038
        %v1804 = vunpack.c.h.b16 %v1038
        %v1805 = vunpack.c.l.b16 %v1039
        %v1806 = vunpack.c.h.b16 %v1039
        %v1807 = vunpack.c.l.b16 %v1040
        %v1808 = vunpack.c.h.b16 %v1040
        %v1809 = vunpack.c.l.b16 %v1041
        %v1810 = vunpack.c.h.b16 %v1041
        %v1811 = vpack.c.b16 %v1303, %v1299
        %v1812 = vpack.c.b16 %v1304, %v1300
        %v1813 = vpack.c.b16 %v1305, %v1301
        %v1814 = vpack.c.b16 %v1306, %v1302
        %v1815 = vpack.c.b16 %v1311, %v1307
        %v1816 = vpack.c.b16 %v1312, %v1308
        %v1817 = vpack.c.b16 %v1313, %v1309
        %v1818 = vpack.c.b16 %v1314, %v1310
        %v1819 = vpack.c.b16 %v1319, %v1315
        %v1820 = vpack.c.b16 %v1320, %v1316
        %v1821 = vpack.c.b16 %v1321, %v1317
        %v1822 = vpack.c.b16 %v1322, %v1318
        %v1823 = vpack.c.b16 %v1327, %v1323
        %v1824 = vpack.c.b16 %v1328, %v1324
        %v1825 = vpack.c.b16 %v1329, %v1325
        %v1826 = vpack.c.b16 %v1330, %v1326
        %v1827 = vpack.c.b16 %v1335, %v1331
        %v1828 = vpack.c.b16 %v1336, %v1332
        %v1829 = vpack.c.b16 %v1337, %v1333
        %v1830 = vpack.c.b16 %v1338, %v1334
        %v1831 = vpack.c.b16 %v1343, %v1339
        %v1832 = vpack.c.b16 %v1344, %v1340
        %v1833 = vpack.c.b16 %v1345, %v1341
        %v1834 = vpack.c.b16 %v1346, %v1342
        %v1835 = vpack.c.b16 %v1351, %v1347
        %v1836 = vpack.c.b16 %v1352, %v1348
        %v1837 = vpack.c.b16 %v1353, %v1349
        %v1838 = vpack.c.b16 %v1354, %v1350
        %v1839 = vpack.c.b16 %v1359, %v1355
        %v1840 = vpack.c.b16 %v1360, %v1356
        %v1841 = vpack.c.b16 %v1361, %v1357
        %v1842 = vpack.c.b16 %v1362, %v1358
        %v1843 = vpack.c.b16 %v1367, %v1363
        %v1844 = vpack.c.b16 %v1368, %v1364
        %v1845 = vpack.c.b16 %v1369, %v1365
        %v1846 = vpack.c.b16 %v1370, %v1366
        %v1847 = vpack.c.b16 %v1375, %v1371
        %v1848 = vpack.c.b16 %v1376, %v1372
        %v1849 = vpack.c.b16 %v1377, %v1373
        %v1850 = vpack.c.b16 %v1378, %v1374
        %v1851 = vpack.c.b16 %v1383, %v1379
        %v1852 = vpack.c.b16 %v1384, %v1380
        %v1853 = vpack.c.b16 %v1385, %v1381
        %v1854 = vpack.c.b16 %v1386, %v1382
        %v1855 = vpack.c.b16 %v1391, %v1387
        %v1856 = vpack.c.b16 %v1392, %v1388
        %v1857 = vpack.c.b16 %v1393, %v1389
        %v1858 = vpack.c.b16 %v1394, %v1390
        %v1859 = vpack.c.b16 %v1399, %v1395
        %v1860 = vpack.c.b16 %v1400, %v1396
        %v1861 = vpack.c.b16 %v1401, %v1397
        %v1862 = vpack.c.b16 %v1402, %v1398
        %v1863 = vpack.c.b16 %v1407, %v1403
        %v1864 = vpack.c.b16 %v1408, %v1404
        %v1865 = vpack.c.b16 %v1409, %v1405
        %v1866 = vpack.c.b16 %v1410, %v1406
        %v1867 = vpack.c.b16 %v1415, %v1411
        %v1868 = vpack.c.b16 %v1416, %v1412
        %v1869 = vpack.c.b16 %v1417, %v1413
        %v1870 = vpack.c.b16 %v1418, %v1414
        %v1871 = vpack.c.b16 %v1423, %v1419
        %v1872 = vpack.c.b16 %v1424, %v1420
        %v1873 = vpack.c.b16 %v1425, %v1421
        %v1874 = vpack.c.b16 %v1426, %v1422
        %v1875 = vpack.c.b16 %v1431, %v1427
        %v1876 = vpack.c.b16 %v1432, %v1428
        %v1877 = vpack.c.b16 %v1433, %v1429
        %v1878 = vpack.c.b16 %v1434, %v1430
        %v1879 = vpack.c.b16 %v1439, %v1435
        %v1880 = vpack.c.b16 %v1440, %v1436
        %v1881 = vpack.c.b16 %v1441, %v1437
        %v1882 = vpack.c.b16 %v1442, %v1438
        %v1883 = vpack.c.b16 %v1447, %v1443
        %v1884 = vpack.c.b16 %v1448, %v1444
        %v1885 = vpack.c.b16 %v1449, %v1445
        %v1886 = vpack.c.b16 %v1450, %v1446
        %v1887 = vpack.c.b16 %v1455, %v1451
        %v1888 = vpack.c.b16 %v1456, %v1452
        %v1889 = vpack.c.b16 %v1457, %v1453
        %v1890 = vpack.c.b16 %v1458, %v1454
        %v1891 = vpack.c.b16 %v1463, %v1459
        %v1892 = vpack.c.b16 %v1464, %v1460
        %v1893 = vpack.c.b16 %v1465, %v1461
        %v1894 = vpack.c.b16 %v1466, %v1462
        %v1895 = vpack.c.b16 %v1471, %v1467
        %v1896 = vpack.c.b16 %v1472, %v1468
        %v1897 = vpack.c.b16 %v1473, %v1469
        %v1898 = vpack.c.b16 %v1474, %v1470
        %v1899 = vpack.c.b16 %v1479, %v1475
        %v1900 = vpack.c.b16 %v1480, %v1476
        %v1901 = vpack.c.b16 %v1481, %v1477
        %v1902 = vpack.c.b16 %v1482, %v1478
        %v1903 = vpack.c.b16 %v1487, %v1483
        %v1904 = vpack.c.b16 %v1488, %v1484
        %v1905 = vpack.c.b16 %v1489, %v1485
        %v1906 = vpack.c.b16 %v1490, %v1486
        %v1907 = vpack.c.b16 %v1495, %v1491
        %v1908 = vpack.c.b16 %v1496, %v1492
        %v1909 = vpack.c.b16 %v1497, %v1493
        %v1910 = vpack.c.b16 %v1498, %v1494
        %v1911 = vpack.c.b16 %v1503, %v1499
        %v1912 = vpack.c.b16 %v1504, %v1500
        %v1913 = vpack.c.b16 %v1505, %v1501
        %v1914 = vpack.c.b16 %v1506, %v1502
        %v1915 = vpack.c.b16 %v1511, %v1507
        %v1916 = vpack.c.b16 %v1512, %v1508
        %v1917 = vpack.c.b16 %v1513, %v1509
        %v1918 = vpack.c.b16 %v1514, %v1510
        %v1919 = vpack.c.b16 %v1519, %v1515
        %v1920 = vpack.c.b16 %v1520, %v1516
        %v1921 = vpack.c.b16 %v1521, %v1517
        %v1922 = vpack.c.b16 %v1522, %v1518
        %v1923 = vpack.c.b16 %v1527, %v1523
        %v1924 = vpack.c.b16 %v1528, %v1524
        %v1925 = vpack.c.b16 %v1529, %v1525
        %v1926 = vpack.c.b16 %v1530, %v1526
        %v1927 = vpack.c.b16 %v1535, %v1531
        %v1928 = vpack.c.b16 %v1536, %v1532
        %v1929 = vpack.c.b16 %v1537, %v1533
        %v1930 = vpack.c.b16 %v1538, %v1534
        %v1931 = vpack.c.b16 %v1543, %v1539
        %v1932 = vpack.c.b16 %v1544, %v1540
        %v1933 = vpack.c.b16 %v1545, %v1541
        %v1934 = vpack.c.b16 %v1546, %v1542
        %v1935 = vpack.c.b16 %v1551, %v1547
        %v1936 = vpack.c.b16 %v1552, %v1548
        %v1937 = vpack.c.b16 %v1553, %v1549
        %v1938 = vpack.c.b16 %v1554, %v1550
        %v1939 = vpack.c.b16 %v1559, %v1555
        %v1940 = vpack.c.b16 %v1560, %v1556
        %v1941 = vpack.c.b16 %v1561, %v1557
        %v1942 = vpack.c.b16 %v1562, %v1558
        %v1943 = vpack.c.b16 %v1567, %v1563
        %v1944 = vpack.c.b16 %v1568, %v1564
        %v1945 = vpack.c.b16 %v1569, %v1565
        %v1946 = vpack.c.b16 %v1570, %v1566
        %v1947 = vpack.c.b16 %v1575, %v1571
        %v1948 = vpack.c.b16 %v1576, %v1572
        %v1949 = vpack.c.b16 %v1577, %v1573
        %v1950 = vpack.c.b16 %v1578, %v1574
        %v1951 = vpack.c.b16 %v1583, %v1579
        %v1952 = vpack.c.b16 %v1584, %v1580
        %v1953 = vpack.c.b16 %v1585, %v1581
        %v1954 = vpack.c.b16 %v1586, %v1582
        %v1955 = vpack.c.b16 %v1591, %v1587
        %v1956 = vpack.c.b16 %v1592, %v1588
        %v1957 = vpack.c.b16 %v1593, %v1589
        %v1958 = vpack.c.b16 %v1594, %v1590
        %v1959 = vpack.c.b16 %v1599, %v1595
        %v1960 = vpack.c.b16 %v1600, %v1596
        %v1961 = vpack.c.b16 %v1601, %v1597
        %v1962 = vpack.c.b16 %v1602, %v1598
        %v1963 = vpack.c.b16 %v1607, %v1603
        %v1964 = vpack.c.b16 %v1608, %v1604
        %v1965 = vpack.c.b16 %v1609, %v1605
        %v1966 = vpack.c.b16 %v1610, %v1606
        %v1967 = vpack.c.b16 %v1615, %v1611
        %v1968 = vpack.c.b16 %v1616, %v1612
        %v1969 = vpack.c.b16 %v1617, %v1613
        %v1970 = vpack.c.b16 %v1618, %v1614
        %v1971 = vpack.c.b16 %v1623, %v1619
        %v1972 = vpack.c.b16 %v1624, %v1620
        %v1973 = vpack.c.b16 %v1625, %v1621
        %v1974 = vpack.c.b16 %v1626, %v1622
        %v1975 = vpack.c.b16 %v1631, %v1627
        %v1976 = vpack.c.b16 %v1632, %v1628
        %v1977 = vpack.c.b16 %v1633, %v1629
        %v1978 = vpack.c.b16 %v1634, %v1630
        %v1979 = vpack.c.b16 %v1639, %v1635
        %v1980 = vpack.c.b16 %v1640, %v1636
        %v1981 = vpack.c.b16 %v1641, %v1637
        %v1982 = vpack.c.b16 %v1642, %v1638
        %v1983 = vpack.c.b16 %v1647, %v1643
        %v1984 = vpack.c.b16 %v1648, %v1644
        %v1985 = vpack.c.b16 %v1649, %v1645
        %v1986 = vpack.c.b16 %v1650, %v1646
        %v1987 = vpack.c.b16 %v1655, %v1651
        %v1988 = vpack.c.b16 %v1656, %v1652
        %v1989 = vpack.c.b16 %v1657, %v1653
        %v1990 = vpack.c.b16 %v1658, %v1654
        %v1991 = vpack.c.b16 %v1663, %v1659
        %v1992 = vpack.c.b16 %v1664, %v1660
        %v1993 = vpack.c.b16 %v1665, %v1661
        %v1994 = vpack.c.b16 %v1666, %v1662
        %v1995 = vpack.c.b16 %v1671, %v1667
        %v1996 = vpack.c.b16 %v1672, %v1668
        %v1997 = vpack.c.b16 %v1673, %v1669
        %v1998 = vpack.c.b16 %v1674, %v1670
        %v1999 = vpack.c.b16 %v1679, %v1675
        %v2000 = vpack.c.b16 %v1680, %v1676
        %v2001 = vpack.c.b16 %v1681, %v1677
        %v2002 = vpack.c.b16 %v1682, %v1678
        %v2003 = vpack.c.b16 %v1687, %v1683
        %v2004 = vpack.c.b16 %v1688, %v1684
        %v2005 = vpack.c.b16 %v1689, %v1685
        %v2006 = vpack.c.b16 %v1690, %v1686
        %v2007 = vpack.c.b16 %v1695, %v1691
        %v2008 = vpack.c.b16 %v1696, %v1692
        %v2009 = vpack.c.b16 %v1697, %v1693
        %v2010 = vpack.c.b16 %v1698, %v1694
        %v2011 = vpack.c.b16 %v1703, %v1699
        %v2012 = vpack.c.b16 %v1704, %v1700
        %v2013 = vpack.c.b16 %v1705, %v1701
        %v2014 = vpack.c.b16 %v1706, %v1702
        %v2015 = vpack.c.b16 %v1711, %v1707
        %v2016 = vpack.c.b16 %v1712, %v1708
        %v2017 = vpack.c.b16 %v1713, %v1709
        %v2018 = vpack.c.b16 %v1714, %v1710
        %v2019 = vpack.c.b16 %v1719, %v1715
        %v2020 = vpack.c.b16 %v1720, %v1716
        %v2021 = vpack.c.b16 %v1721, %v1717
        %v2022 = vpack.c.b16 %v1722, %v1718
        %v2023 = vpack.c.b16 %v1727, %v1723
        %v2024 = vpack.c.b16 %v1728, %v1724
        %v2025 = vpack.c.b16 %v1729, %v1725
        %v2026 = vpack.c.b16 %v1730, %v1726
        %v2027 = vpack.c.b16 %v1735, %v1731
        %v2028 = vpack.c.b16 %v1736, %v1732
        %v2029 = vpack.c.b16 %v1737, %v1733
        %v2030 = vpack.c.b16 %v1738, %v1734
        %v2031 = vpack.c.b16 %v1743, %v1739
        %v2032 = vpack.c.b16 %v1744, %v1740
        %v2033 = vpack.c.b16 %v1745, %v1741
        %v2034 = vpack.c.b16 %v1746, %v1742
        %v2035 = vpack.c.b16 %v1751, %v1747
        %v2036 = vpack.c.b16 %v1752, %v1748
        %v2037 = vpack.c.b16 %v1753, %v1749
        %v2038 = vpack.c.b16 %v1754, %v1750
        %v2039 = vpack.c.b16 %v1759, %v1755
        %v2040 = vpack.c.b16 %v1760, %v1756
        %v2041 = vpack.c.b16 %v1761, %v1757
        %v2042 = vpack.c.b16 %v1762, %v1758
        %v2043 = vpack.c.b16 %v1767, %v1763
        %v2044 = vpack.c.b16 %v1768, %v1764
        %v2045 = vpack.c.b16 %v1769, %v1765
        %v2046 = vpack.c.b16 %v1770, %v1766
        %v2047 = vpack.c.b16 %v1775, %v1771
        %v2048 = vpack.c.b16 %v1776, %v1772
        %v2049 = vpack.c.b16 %v1777, %v1773
        %v2050 = vpack.c.b16 %v1778, %v1774
        %v2051 = vpack.c.b16 %v1783, %v1779
        %v2052 = vpack.c.b16 %v1784, %v1780
        %v2053 = vpack.c.b16 %v1785, %v1781
        %v2054 = vpack.c.b16 %v1786, %v1782
        %v2055 = vpack.c.b16 %v1791, %v1787
        %v2056 = vpack.c.b16 %v1792, %v1788
        %v2057 = vpack.c.b16 %v1793, %v1789
        %v2058 = vpack.c.b16 %v1794, %v1790
        %v2059 = vpack.c.b16 %v1799, %v1795
        %v2060 = vpack.c.b16 %v1800, %v1796
        %v2061 = vpack.c.b16 %v1801, %v1797
        %v2062 = vpack.c.b16 %v1802, %v1798
        %v2063 = vpack.c.b16 %v1807, %v1803
        %v2064 = vpack.c.b16 %v1808, %v1804
        %v2065 = vpack.c.b16 %v1809, %v1805
        %v2066 = vpack.c.b16 %v1810, %v1806
        %v2324 = vlaneseq
        %v2325 = vshrl.u32 %v2324, 7
        %v2326 = vsub.s32 0, %v2325
        %v2327 = vrot.slane %v1042, %v2326
        %v2328 = vlaneseq
        %v2329 = vshrl.u32 %v2328, 7
        %v2330 = vsub.s32 1, %v2329
        %v2331 = vrot.slane %v1042, %v2330
        %v2332 = vlaneseq
        %v2333 = vshrl.u32 %v2332, 7
        %v2334 = vsub.s32 2, %v2333
        %v2335 = vrot.slane %v1042, %v2334
        %v2336 = vlaneseq
        %v2337 = vshrl.u32 %v2336, 7
        %v2338 = vsub.s32 3, %v2337
        %v2339 = vrot.slane %v1042, %v2338
        %2344 = vmatprep.subr.bf16.mxu0 %v1812
        %2345 = vmatpush1.bf16.msra.mxu0 %v1811
        %2346 = vmatprep.subr.bf16.mxu0 %v1816
        %2347 = vmatpush1.bf16.msra.mxu0 %v1815
        %2348 = vmatprep.subr.bf16.mxu0 %v1820
        %2349 = vmatpush1.bf16.msra.mxu0 %v1819
        %2350 = vmatprep.subr.bf16.mxu0 %v1824
        %2351 = vmatpush1.bf16.msra.mxu0 %v1823
        %2352 = vmatprep.subr.bf16.mxu0 %v1828
        %2353 = vmatpush1.bf16.msra.mxu0 %v1827
        %2354 = vmatprep.subr.bf16.mxu0 %v1832
        %2355 = vmatpush1.bf16.msra.mxu0 %v1831
        %2356 = vmatprep.subr.bf16.mxu0 %v1836
        %2357 = vmatpush1.bf16.msra.mxu0 %v1835
        %2358 = vmatprep.subr.bf16.mxu0 %v1840
        %2359 = vmatpush1.bf16.msra.mxu0 %v1839
        %2360 = vmatprep.subr.bf16.mxu0 %v1844
        %2361 = vmatpush1.bf16.msra.mxu0 %v1843
        %2362 = vmatprep.subr.bf16.mxu0 %v1848
        %2363 = vmatpush1.bf16.msra.mxu0 %v1847
        %2364 = vmatprep.subr.bf16.mxu0 %v1852
        %2365 = vmatpush1.bf16.msra.mxu0 %v1851
        %2366 = vmatprep.subr.bf16.mxu0 %v1856
        %2367 = vmatpush1.bf16.msra.mxu0 %v1855
        %2368 = vmatprep.subr.bf16.mxu0 %v1860
        %2369 = vmatpush1.bf16.msra.mxu0 %v1859
        %2370 = vmatprep.subr.bf16.mxu0 %v1864
        %2371 = vmatpush1.bf16.msra.mxu0 %v1863
        %2372 = vmatprep.subr.bf16.mxu0 %v1868
        %2373 = vmatpush1.bf16.msra.mxu0 %v1867
        %2374 = vmatprep.subr.bf16.mxu0 %v1872
        %2375 = vmatpush1.bf16.msra.mxu0 %v1871
        %2376 = vmatprep.mubr.bf16.mxu0 %v779
        %2377 = vmatmul.mubr.bf16.gmra.mrb[0].mxu0 %v778
        %v2378 = vpop.f32.mrb[0].mxu0
        %v2379 = vadd.f32 %v2327, %v2378
        %v2380 = vpop.f32.mrb[0].mxu0
        %v2381 = vadd.f32 %v2331, %v2380
        %v2382 = vpop.f32.mrb[0].mxu0
        %v2383 = vpop.f32.mrb[0].mxu0
        %2384 = vdwg.mxu0
        %2385 = vmatprep.subr.bf16.mxu0 %v1876
        %2386 = vmatpush1.bf16.msra.mxu0 %v1875
        %2387 = vmatprep.subr.bf16.mxu0 %v1880
        %2388 = vmatpush1.bf16.msra.mxu0 %v1879
        %2389 = vmatprep.subr.bf16.mxu0 %v1884
        %2390 = vmatpush1.bf16.msra.mxu0 %v1883
        %2391 = vmatprep.subr.bf16.mxu0 %v1888
        %2392 = vmatpush1.bf16.msra.mxu0 %v1887
        %2393 = vmatprep.subr.bf16.mxu0 %v1892
        %2394 = vmatpush1.bf16.msra.mxu0 %v1891
        %2395 = vmatprep.subr.bf16.mxu0 %v1896
        %2396 = vmatpush1.bf16.msra.mxu0 %v1895
        %2397 = vmatprep.subr.bf16.mxu0 %v1900
        %2398 = vmatpush1.bf16.msra.mxu0 %v1899
        %2399 = vmatprep.subr.bf16.mxu0 %v1904
        %2400 = vmatpush1.bf16.msra.mxu0 %v1903
        %2401 = vmatprep.subr.bf16.mxu0 %v1908
        %2402 = vmatpush1.bf16.msra.mxu0 %v1907
        %2403 = vmatprep.subr.bf16.mxu0 %v1912
        %2404 = vmatpush1.bf16.msra.mxu0 %v1911
        %2405 = vmatprep.subr.bf16.mxu0 %v1916
        %2406 = vmatpush1.bf16.msra.mxu0 %v1915
        %2407 = vmatprep.subr.bf16.mxu0 %v1920
        %2408 = vmatpush1.bf16.msra.mxu0 %v1919
        %2409 = vmatprep.subr.bf16.mxu0 %v1924
        %2410 = vmatpush1.bf16.msra.mxu0 %v1923
        %2411 = vmatprep.subr.bf16.mxu0 %v1928
        %2412 = vmatpush1.bf16.msra.mxu0 %v1927
        %2413 = vmatprep.subr.bf16.mxu0 %v1932
        %2414 = vmatpush1.bf16.msra.mxu0 %v1931
        %2415 = vmatprep.subr.bf16.mxu0 %v1936
        %2416 = vmatpush1.bf16.msra.mxu0 %v1935
        %2417 = vmatprep.mubr.bf16.mxu0 %v781
        %2418 = vmatmul.mubr.bf16.gmra.mrb[0].mxu0 %v780
        %v2419 = vpop.f32.mrb[0].mxu0
        %v2420 = vadd.f32 %v2379, %v2419
        %v2421 = vpop.f32.mrb[0].mxu0
        %v2422 = vadd.f32 %v2381, %v2421
        %v2423 = vpop.f32.mrb[0].mxu0
        %v2424 = vpop.f32.mrb[0].mxu0
        %2425 = vdwg.mxu0
        %2426 = vmatprep.subr.bf16.mxu0 %v1940
        %2427 = vmatpush1.bf16.msra.mxu0 %v1939
        %2428 = vmatprep.subr.bf16.mxu0 %v1944
        %2429 = vmatpush1.bf16.msra.mxu0 %v1943
        %2430 = vmatprep.subr.bf16.mxu0 %v1948
        %2431 = vmatpush1.bf16.msra.mxu0 %v1947
        %2432 = vmatprep.subr.bf16.mxu0 %v1952
        %2433 = vmatpush1.bf16.msra.mxu0 %v1951
        %2434 = vmatprep.subr.bf16.mxu0 %v1956
        %2435 = vmatpush1.bf16.msra.mxu0 %v1955
        %2436 = vmatprep.subr.bf16.mxu0 %v1960
        %2437 = vmatpush1.bf16.msra.mxu0 %v1959
        %2438 = vmatprep.subr.bf16.mxu0 %v1964
        %2439 = vmatpush1.bf16.msra.mxu0 %v1963
        %2440 = vmatprep.subr.bf16.mxu0 %v1968
        %2441 = vmatpush1.bf16.msra.mxu0 %v1967
        %2442 = vmatprep.subr.bf16.mxu0 %v1972
        %2443 = vmatpush1.bf16.msra.mxu0 %v1971
        %2444 = vmatprep.subr.bf16.mxu0 %v1976
        %2445 = vmatpush1.bf16.msra.mxu0 %v1975
        %2446 = vmatprep.subr.bf16.mxu0 %v1980
        %2447 = vmatpush1.bf16.msra.mxu0 %v1979
        %2448 = vmatprep.subr.bf16.mxu0 %v1984
        %2449 = vmatpush1.bf16.msra.mxu0 %v1983
        %2450 = vmatprep.subr.bf16.mxu0 %v1988
        %2451 = vmatpush1.bf16.msra.mxu0 %v1987
        %2452 = vmatprep.subr.bf16.mxu0 %v1992
        %2453 = vmatpush1.bf16.msra.mxu0 %v1991
        %2454 = vmatprep.subr.bf16.mxu0 %v1996
        %2455 = vmatpush1.bf16.msra.mxu0 %v1995
        %2456 = vmatprep.subr.bf16.mxu0 %v2000
        %2457 = vmatpush1.bf16.msra.mxu0 %v1999
        %2458 = vmatprep.mubr.bf16.mxu0 %v783
        %2459 = vmatmul.mubr.bf16.gmra.mrb[0].mxu0 %v782
        %v2460 = vpop.f32.mrb[0].mxu0
        %v2461 = vadd.f32 %v2420, %v2460
        %v2462 = vpop.f32.mrb[0].mxu0
        %v2463 = vadd.f32 %v2422, %v2462
        %v2464 = vpop.f32.mrb[0].mxu0
        %v2465 = vpop.f32.mrb[0].mxu0
        %2466 = vdwg.mxu0
        %2467 = vmatprep.subr.bf16.mxu0 %v2004
        %2468 = vmatpush1.bf16.msra.mxu0 %v2003
        %2469 = vmatprep.subr.bf16.mxu0 %v2008
        %2470 = vmatpush1.bf16.msra.mxu0 %v2007
        %2471 = vmatprep.subr.bf16.mxu0 %v2012
        %2472 = vmatpush1.bf16.msra.mxu0 %v2011
        %2473 = vmatprep.subr.bf16.mxu0 %v2016
        %2474 = vmatpush1.bf16.msra.mxu0 %v2015
        %2475 = vmatprep.subr.bf16.mxu0 %v2020
        %2476 = vmatpush1.bf16.msra.mxu0 %v2019
        %2477 = vmatprep.subr.bf16.mxu0 %v2024
        %2478 = vmatpush1.bf16.msra.mxu0 %v2023
        %2479 = vmatprep.subr.bf16.mxu0 %v2028
        %2480 = vmatpush1.bf16.msra.mxu0 %v2027
        %2481 = vmatprep.subr.bf16.mxu0 %v2032
        %2482 = vmatpush1.bf16.msra.mxu0 %v2031
        %2483 = vmatprep.subr.bf16.mxu0 %v2036
        %2484 = vmatpush1.bf16.msra.mxu0 %v2035
        %2485 = vmatprep.subr.bf16.mxu0 %v2040
        %2486 = vmatpush1.bf16.msra.mxu0 %v2039
        %2487 = vmatprep.subr.bf16.mxu0 %v2044
        %2488 = vmatpush1.bf16.msra.mxu0 %v2043
        %2489 = vmatprep.subr.bf16.mxu0 %v2048
        %2490 = vmatpush1.bf16.msra.mxu0 %v2047
        %2491 = vmatprep.subr.bf16.mxu0 %v2052
        %2492 = vmatpush1.bf16.msra.mxu0 %v2051
        %2493 = vmatprep.subr.bf16.mxu0 %v2056
        %2494 = vmatpush1.bf16.msra.mxu0 %v2055
        %2495 = vmatprep.subr.bf16.mxu0 %v2060
        %2496 = vmatpush1.bf16.msra.mxu0 %v2059
        %2497 = vmatprep.subr.bf16.mxu0 %v2064
        %2498 = vmatpush1.bf16.msra.mxu0 %v2063
        %2499 = vmatprep.mubr.bf16.mxu0 %v785
        %2500 = vmatmul.mubr.bf16.gmra.mrb[0].mxu0 %v784
        %v2501 = vpop.f32.mrb[0].mxu0
        %v2502 = vadd.f32 %v2461, %v2501
        %v2503 = vpop.f32.mrb[0].mxu0
        %v2504 = vadd.f32 %v2463, %v2503
        %v2505 = vpop.f32.mrb[0].mxu0
        %v2506 = vpop.f32.mrb[0].mxu0
        %2507 = vdwg.mxu0
        %2508 = vmatprep.subr.bf16.mxu0 %v1814
        %2509 = vmatpush1.bf16.msra.mxu0 %v1813
        %2510 = vmatprep.subr.bf16.mxu0 %v1818
        %2511 = vmatpush1.bf16.msra.mxu0 %v1817
        %2512 = vmatprep.subr.bf16.mxu0 %v1822
        %2513 = vmatpush1.bf16.msra.mxu0 %v1821
        %2514 = vmatprep.subr.bf16.mxu0 %v1826
        %2515 = vmatpush1.bf16.msra.mxu0 %v1825
        %2516 = vmatprep.subr.bf16.mxu0 %v1830
        %2517 = vmatpush1.bf16.msra.mxu0 %v1829
        %2518 = vmatprep.subr.bf16.mxu0 %v1834
        %2519 = vmatpush1.bf16.msra.mxu0 %v1833
        %2520 = vmatprep.subr.bf16.mxu0 %v1838
        %2521 = vmatpush1.bf16.msra.mxu0 %v1837
        %2522 = vmatprep.subr.bf16.mxu0 %v1842
        %2523 = vmatpush1.bf16.msra.mxu0 %v1841
        %2524 = vmatprep.subr.bf16.mxu0 %v1846
        %2525 = vmatpush1.bf16.msra.mxu0 %v1845
        %2526 = vmatprep.subr.bf16.mxu0 %v1850
        %2527 = vmatpush1.bf16.msra.mxu0 %v1849
        %2528 = vmatprep.subr.bf16.mxu0 %v1854
        %2529 = vmatpush1.bf16.msra.mxu0 %v1853
        %2530 = vmatprep.subr.bf16.mxu0 %v1858
        %2531 = vmatpush1.bf16.msra.mxu0 %v1857
        %2532 = vmatprep.subr.bf16.mxu0 %v1862
        %2533 = vmatpush1.bf16.msra.mxu0 %v1861
        %2534 = vmatprep.subr.bf16.mxu0 %v1866
        %2535 = vmatpush1.bf16.msra.mxu0 %v1865
        %2536 = vmatprep.subr.bf16.mxu0 %v1870
        %2537 = vmatpush1.bf16.msra.mxu0 %v1869
        %2538 = vmatprep.subr.bf16.mxu0 %v1874
        %2539 = vmatpush1.bf16.msra.mxu0 %v1873
        %2540 = vmatprep.mubr.bf16.mxu0 %v779
        %2541 = vmatmul.mubr.bf16.gmra.mrb[0].mxu0 %v778
        %v2542 = vpop.f32.mrb[0].mxu0
        %v2543 = vadd.f32 %v2335, %v2542
        %v2544 = vpop.f32.mrb[0].mxu0
        %v2545 = vadd.f32 %v2339, %v2544
        %v2546 = vpop.f32.mrb[0].mxu0
        %v2547 = vpop.f32.mrb[0].mxu0
        %2548 = vdwg.mxu0
        %2549 = vmatprep.subr.bf16.mxu0 %v1878
        %2550 = vmatpush1.bf16.msra.mxu0 %v1877
        %2551 = vmatprep.subr.bf16.mxu0 %v1882
        %2552 = vmatpush1.bf16.msra.mxu0 %v1881
        %2553 = vmatprep.subr.bf16.mxu0 %v1886
        %2554 = vmatpush1.bf16.msra.mxu0 %v1885
        %2555 = vmatprep.subr.bf16.mxu0 %v1890
        %2556 = vmatpush1.bf16.msra.mxu0 %v1889
        %2557 = vmatprep.subr.bf16.mxu0 %v1894
        %2558 = vmatpush1.bf16.msra.mxu0 %v1893
        %2559 = vmatprep.subr.bf16.mxu0 %v1898
        %2560 = vmatpush1.bf16.msra.mxu0 %v1897
        %2561 = vmatprep.subr.bf16.mxu0 %v1902
        %2562 = vmatpush1.bf16.msra.mxu0 %v1901
        %2563 = vmatprep.subr.bf16.mxu0 %v1906
        %2564 = vmatpush1.bf16.msra.mxu0 %v1905
        %2565 = vmatprep.subr.bf16.mxu0 %v1910
        %2566 = vmatpush1.bf16.msra.mxu0 %v1909
        %2567 = vmatprep.subr.bf16.mxu0 %v1914
        %2568 = vmatpush1.bf16.msra.mxu0 %v1913
        %2569 = vmatprep.subr.bf16.mxu0 %v1918
        %2570 = vmatpush1.bf16.msra.mxu0 %v1917
        %2571 = vmatprep.subr.bf16.mxu0 %v1922
        %2572 = vmatpush1.bf16.msra.mxu0 %v1921
        %2573 = vmatprep.subr.bf16.mxu0 %v1926
        %2574 = vmatpush1.bf16.msra.mxu0 %v1925
        %2575 = vmatprep.subr.bf16.mxu0 %v1930
        %2576 = vmatpush1.bf16.msra.mxu0 %v1929
        %2577 = vmatprep.subr.bf16.mxu0 %v1934
        %2578 = vmatpush1.bf16.msra.mxu0 %v1933
        %2579 = vmatprep.subr.bf16.mxu0 %v1938
        %2580 = vmatpush1.bf16.msra.mxu0 %v1937
        %2581 = vmatprep.mubr.bf16.mxu0 %v781
        %2582 = vmatmul.mubr.bf16.gmra.mrb[0].mxu0 %v780
        %v2583 = vpop.f32.mrb[0].mxu0
        %v2584 = vadd.f32 %v2543, %v2583
        %v2585 = vpop.f32.mrb[0].mxu0
        %v2586 = vadd.f32 %v2545, %v2585
        %v2587 = vpop.f32.mrb[0].mxu0
        %v2588 = vpop.f32.mrb[0].mxu0
        %2589 = vdwg.mxu0
        %2590 = vmatprep.subr.bf16.mxu0 %v1942
        %2591 = vmatpush1.bf16.msra.mxu0 %v1941
        %2592 = vmatprep.subr.bf16.mxu0 %v1946
        %2593 = vmatpush1.bf16.msra.mxu0 %v1945
        %2594 = vmatprep.subr.bf16.mxu0 %v1950
        %2595 = vmatpush1.bf16.msra.mxu0 %v1949
        %2596 = vmatprep.subr.bf16.mxu0 %v1954
        %2597 = vmatpush1.bf16.msra.mxu0 %v1953
        %2598 = vmatprep.subr.bf16.mxu0 %v1958
        %2599 = vmatpush1.bf16.msra.mxu0 %v1957
        %2600 = vmatprep.subr.bf16.mxu0 %v1962
        %2601 = vmatpush1.bf16.msra.mxu0 %v1961
        %2602 = vmatprep.subr.bf16.mxu0 %v1966
        %2603 = vmatpush1.bf16.msra.mxu0 %v1965
        %2604 = vmatprep.subr.bf16.mxu0 %v1970
        %2605 = vmatpush1.bf16.msra.mxu0 %v1969
        %2606 = vmatprep.subr.bf16.mxu0 %v1974
        %2607 = vmatpush1.bf16.msra.mxu0 %v1973
        %2608 = vmatprep.subr.bf16.mxu0 %v1978
        %2609 = vmatpush1.bf16.msra.mxu0 %v1977
        %2610 = vmatprep.subr.bf16.mxu0 %v1982
        %2611 = vmatpush1.bf16.msra.mxu0 %v1981
        %2612 = vmatprep.subr.bf16.mxu0 %v1986
        %2613 = vmatpush1.bf16.msra.mxu0 %v1985
        %2614 = vmatprep.subr.bf16.mxu0 %v1990
        %2615 = vmatpush1.bf16.msra.mxu0 %v1989
        %2616 = vmatprep.subr.bf16.mxu0 %v1994
        %2617 = vmatpush1.bf16.msra.mxu0 %v1993
        %2618 = vmatprep.subr.bf16.mxu0 %v1998
        %2619 = vmatpush1.bf16.msra.mxu0 %v1997
        %2620 = vmatprep.subr.bf16.mxu0 %v2002
        %2621 = vmatpush1.bf16.msra.mxu0 %v2001
        %2622 = vmatprep.mubr.bf16.mxu0 %v783
        %2623 = vmatmul.mubr.bf16.gmra.mrb[0].mxu0 %v782
        %v2624 = vpop.f32.mrb[0].mxu0
        %v2625 = vadd.f32 %v2584, %v2624
        %v2626 = vpop.f32.mrb[0].mxu0
        %v2627 = vadd.f32 %v2586, %v2626
        %v2628 = vpop.f32.mrb[0].mxu0
        %v2629 = vpop.f32.mrb[0].mxu0
        %2630 = vdwg.mxu0
        %2631 = vmatprep.subr.bf16.mxu0 %v2006
        %2632 = vmatpush1.bf16.msra.mxu0 %v2005
        %2633 = vmatprep.subr.bf16.mxu0 %v2010
        %2634 = vmatpush1.bf16.msra.mxu0 %v2009
        %2635 = vmatprep.subr.bf16.mxu0 %v2014
        %2636 = vmatpush1.bf16.msra.mxu0 %v2013
        %2637 = vmatprep.subr.bf16.mxu0 %v2018
        %2638 = vmatpush1.bf16.msra.mxu0 %v2017
        %2639 = vmatprep.subr.bf16.mxu0 %v2022
        %2640 = vmatpush1.bf16.msra.mxu0 %v2021
        %2641 = vmatprep.subr.bf16.mxu0 %v2026
        %2642 = vmatpush1.bf16.msra.mxu0 %v2025
        %2643 = vmatprep.subr.bf16.mxu0 %v2030
        %2644 = vmatpush1.bf16.msra.mxu0 %v2029
        %2645 = vmatprep.subr.bf16.mxu0 %v2034
        %2646 = vmatpush1.bf16.msra.mxu0 %v2033
        %2647 = vmatprep.subr.bf16.mxu0 %v2038
        %2648 = vmatpush1.bf16.msra.mxu0 %v2037
        %2649 = vmatprep.subr.bf16.mxu0 %v2042
        %2650 = vmatpush1.bf16.msra.mxu0 %v2041
        %2651 = vmatprep.subr.bf16.mxu0 %v2046
        %2652 = vmatpush1.bf16.msra.mxu0 %v2045
        %2653 = vmatprep.subr.bf16.mxu0 %v2050
        %2654 = vmatpush1.bf16.msra.mxu0 %v2049
        %2655 = vmatprep.subr.bf16.mxu0 %v2054
        %2656 = vmatpush1.bf16.msra.mxu0 %v2053
        %2657 = vmatprep.subr.bf16.mxu0 %v2058
        %2658 = vmatpush1.bf16.msra.mxu0 %v2057
        %2659 = vmatprep.subr.bf16.mxu0 %v2062
        %2660 = vmatpush1.bf16.msra.mxu0 %v2061
        %2661 = vmatprep.subr.bf16.mxu0 %v2066
        %2662 = vmatpush1.bf16.msra.mxu0 %v2065
        %2663 = vmatprep.mubr.bf16.mxu0 %v785
        %2664 = vmatmul.mubr.bf16.gmra.mrb[0].mxu0 %v784
        %v2665 = vpop.f32.mrb[0].mxu0
        %v2666 = vadd.f32 %v2625, %v2665
        %v2667 = vpop.f32.mrb[0].mxu0
        %v2668 = vadd.f32 %v2627, %v2667
        %v2669 = vpop.f32.mrb[0].mxu0
        %v2670 = vpop.f32.mrb[0].mxu0
        %2671 = vdwg.mxu0
        %v2672 = vmax.f32 %v2502, 0.0
        %v2673 = vmax.f32 %v2504, 0.0
        %v2674 = vmax.f32 %v2666, 0.0
        %v2675 = vmax.f32 %v2668, 0.0
        %v2676 = vld [vmem:[%s4] sm:$0xf]
        %v2678 = vlaneseq
        %v2679 = vshrl.u32 %v2678, 7
        %v2680 = vsub.s32 0, %v2679
        %v2681 = vrot.slane %v2676, %v2680
        %v2682 = vlaneseq
        %v2683 = vshrl.u32 %v2682, 7
        %v2684 = vsub.s32 1, %v2683
        %v2685 = vrot.slane %v2676, %v2684
        %v2686 = vlaneseq
        %v2687 = vshrl.u32 %v2686, 7
        %v2688 = vsub.s32 2, %v2687
        %v2689 = vrot.slane %v2676, %v2688
        %v2690 = vlaneseq
        %v2691 = vshrl.u32 %v2690, 7
        %v2692 = vsub.s32 3, %v2691
        %v2693 = vrot.slane %v2676, %v2692
        %v2698 = vmul.f32 %v2672, %v2681
        %v2699 = vmul.f32 %v2673, %v2685
        %v2700 = vmul.f32 %v2674, %v2689
        %v2701 = vmul.f32 %v2675, %v2693
        %v2702 = vld [vmem:[%s5] sm:$0xf]
        %v2704 = vlaneseq
        %v2705 = vshrl.u32 %v2704, 7
        %v2706 = vsub.s32 0, %v2705
        %v2707 = vrot.slane %v2702, %v2706
        %v2708 = vlaneseq
        %v2709 = vshrl.u32 %v2708, 7
        %v2710 = vsub.s32 1, %v2709
        %v2711 = vrot.slane %v2702, %v2710
        %v2712 = vlaneseq
        %v2713 = vshrl.u32 %v2712, 7
        %v2714 = vsub.s32 2, %v2713
        %v2715 = vrot.slane %v2702, %v2714
        %v2716 = vlaneseq
        %v2717 = vshrl.u32 %v2716, 7
        %v2718 = vsub.s32 3, %v2717
        %v2719 = vrot.slane %v2702, %v2718
        %v2724 = vadd.f32 %v2698, %v2707
        %v2725 = vadd.f32 %v2699, %v2711
        %v2726 = vadd.f32 %v2700, %v2715
        %v2727 = vadd.f32 %v2701, %v2719
        %v2728 = vpack.c.bf16 %v2724, %v2724
        %v2729 = vpack.c.bf16 %v2725, %v2725
        %v2730 = vpack.c.bf16 %v2726, %v2726
        %v2731 = vpack.c.bf16 %v2727, %v2727
        %v2732 = vld [vmem:[#allocation4] sm:$0xff]
        %v2733 = vld [vmem:[#allocation4 + $0x8] sm:$0xff]
        %v2734 = vld [vmem:[#allocation4 + $0x10] sm:$0xff]
        %v2735 = vld [vmem:[#allocation4 + $0x18] sm:$0xff]
        %v2736 = vld [vmem:[#allocation4 + $0x20] sm:$0xff]
        %v2737 = vld [vmem:[#allocation4 + $0x28] sm:$0xff]
        %v2738 = vld [vmem:[#allocation4 + $0x30] sm:$0xff]
        %v2739 = vld [vmem:[#allocation4 + $0x38] sm:$0xff]
        %v2740 = vld [vmem:[#allocation4 + $0x40] sm:$0xff]
        %v2741 = vld [vmem:[#allocation4 + $0x48] sm:$0xff]
        %v2742 = vld [vmem:[#allocation4 + $0x50] sm:$0xff]
        %v2743 = vld [vmem:[#allocation4 + $0x58] sm:$0xff]
        %v2744 = vld [vmem:[#allocation4 + $0x60] sm:$0xff]
        %v2745 = vld [vmem:[#allocation4 + $0x68] sm:$0xff]
        %v2746 = vld [vmem:[#allocation4 + $0x70] sm:$0xff]
        %v2747 = vld [vmem:[#allocation4 + $0x78] sm:$0xff]
        %v2748 = vld [vmem:[#allocation4 + $0x80] sm:$0xff]
        %v2749 = vld [vmem:[#allocation4 + $0x88] sm:$0xff]
        %v2750 = vld [vmem:[#allocation4 + $0x90] sm:$0xff]
        %v2751 = vld [vmem:[#allocation4 + $0x98] sm:$0xff]
        %v2752 = vld [vmem:[#allocation4 + $0xa0] sm:$0xff]
        %v2753 = vld [vmem:[#allocation4 + $0xa8] sm:$0xff]
        %v2754 = vld [vmem:[#allocation4 + $0xb0] sm:$0xff]
        %v2755 = vld [vmem:[#allocation4 + $0xb8] sm:$0xff]
        %v2756 = vld [vmem:[#allocation4 + $0xc0] sm:$0xff]
        %v2757 = vld [vmem:[#allocation4 + $0xc8] sm:$0xff]
        %v2758 = vld [vmem:[#allocation4 + $0xd0] sm:$0xff]
        %v2759 = vld [vmem:[#allocation4 + $0xd8] sm:$0xff]
        %v2760 = vld [vmem:[#allocation4 + $0xe0] sm:$0xff]
        %v2761 = vld [vmem:[#allocation4 + $0xe8] sm:$0xff]
        %v2762 = vld [vmem:[#allocation4 + $0xf0] sm:$0xff]
        %v2763 = vld [vmem:[#allocation4 + $0xf8] sm:$0xff]
        %v2764 = vld [vmem:[#allocation4 + $0x100] sm:$0xff]
        %v2765 = vld [vmem:[#allocation4 + $0x108] sm:$0xff]
        %v2766 = vld [vmem:[#allocation4 + $0x110] sm:$0xff]
        %v2767 = vld [vmem:[#allocation4 + $0x118] sm:$0xff]
        %v2768 = vld [vmem:[#allocation4 + $0x120] sm:$0xff]
        %v2769 = vld [vmem:[#allocation4 + $0x128] sm:$0xff]
        %v2770 = vld [vmem:[#allocation4 + $0x130] sm:$0xff]
        %v2771 = vld [vmem:[#allocation4 + $0x138] sm:$0xff]
        %v2772 = vld [vmem:[#allocation4 + $0x140] sm:$0xff]
        %v2773 = vld [vmem:[#allocation4 + $0x148] sm:$0xff]
        %v2774 = vld [vmem:[#allocation4 + $0x150] sm:$0xff]
        %v2775 = vld [vmem:[#allocation4 + $0x158] sm:$0xff]
        %v2776 = vld [vmem:[#allocation4 + $0x160] sm:$0xff]
        %v2777 = vld [vmem:[#allocation4 + $0x168] sm:$0xff]
        %v2778 = vld [vmem:[#allocation4 + $0x170] sm:$0xff]
        %v2779 = vld [vmem:[#allocation4 + $0x178] sm:$0xff]
        %v2780 = vld [vmem:[#allocation4 + $0x180] sm:$0xff]
        %v2781 = vld [vmem:[#allocation4 + $0x188] sm:$0xff]
        %v2782 = vld [vmem:[#allocation4 + $0x190] sm:$0xff]
        %v2783 = vld [vmem:[#allocation4 + $0x198] sm:$0xff]
        %v2784 = vld [vmem:[#allocation4 + $0x1a0] sm:$0xff]
        %v2785 = vld [vmem:[#allocation4 + $0x1a8] sm:$0xff]
        %v2786 = vld [vmem:[#allocation4 + $0x1b0] sm:$0xff]
        %v2787 = vld [vmem:[#allocation4 + $0x1b8] sm:$0xff]
        %v2788 = vld [vmem:[#allocation4 + $0x1c0] sm:$0xff]
        %v2789 = vld [vmem:[#allocation4 + $0x1c8] sm:$0xff]
        %v2790 = vld [vmem:[#allocation4 + $0x1d0] sm:$0xff]
        %v2791 = vld [vmem:[#allocation4 + $0x1d8] sm:$0xff]
        %v2792 = vld [vmem:[#allocation4 + $0x1e0] sm:$0xff]
        %v2793 = vld [vmem:[#allocation4 + $0x1e8] sm:$0xff]
        %v2794 = vld [vmem:[#allocation4 + $0x1f0] sm:$0xff]
        %v2795 = vld [vmem:[#allocation4 + $0x1f8] sm:$0xff]
        %v2796 = vld [vmem:[%s7] sm:$0x3]
        %v2861 = vunpack.c.l.b16 %v2732
        %v2862 = vunpack.c.h.b16 %v2732
        %v2863 = vunpack.c.l.b16 %v2733
        %v2864 = vunpack.c.h.b16 %v2733
        %v2865 = vunpack.c.l.b16 %v2734
        %v2866 = vunpack.c.h.b16 %v2734
        %v2867 = vunpack.c.l.b16 %v2735
        %v2868 = vunpack.c.h.b16 %v2735
        %v2869 = vunpack.c.l.b16 %v2736
        %v2870 = vunpack.c.h.b16 %v2736
        %v2871 = vunpack.c.l.b16 %v2737
        %v2872 = vunpack.c.h.b16 %v2737
        %v2873 = vunpack.c.l.b16 %v2738
        %v2874 = vunpack.c.h.b16 %v2738
        %v2875 = vunpack.c.l.b16 %v2739
        %v2876 = vunpack.c.h.b16 %v2739
        %v2877 = vunpack.c.l.b16 %v2740
        %v2878 = vunpack.c.h.b16 %v2740
        %v2879 = vunpack.c.l.b16 %v2741
        %v2880 = vunpack.c.h.b16 %v2741
        %v2881 = vunpack.c.l.b16 %v2742
        %v2882 = vunpack.c.h.b16 %v2742
        %v2883 = vunpack.c.l.b16 %v2743
        %v2884 = vunpack.c.h.b16 %v2743
        %v2885 = vunpack.c.l.b16 %v2744
        %v2886 = vunpack.c.h.b16 %v2744
        %v2887 = vunpack.c.l.b16 %v2745
        %v2888 = vunpack.c.h.b16 %v2745
        %v2889 = vunpack.c.l.b16 %v2746
        %v2890 = vunpack.c.h.b16 %v2746
        %v2891 = vunpack.c.l.b16 %v2747
        %v2892 = vunpack.c.h.b16 %v2747
        %v2893 = vunpack.c.l.b16 %v2748
        %v2894 = vunpack.c.h.b16 %v2748
        %v2895 = vunpack.c.l.b16 %v2749
        %v2896 = vunpack.c.h.b16 %v2749
        %v2897 = vunpack.c.l.b16 %v2750
        %v2898 = vunpack.c.h.b16 %v2750
        %v2899 = vunpack.c.l.b16 %v2751
        %v2900 = vunpack.c.h.b16 %v2751
        %v2901 = vunpack.c.l.b16 %v2752
        %v2902 = vunpack.c.h.b16 %v2752
        %v2903 = vunpack.c.l.b16 %v2753
        %v2904 = vunpack.c.h.b16 %v2753
        %v2905 = vunpack.c.l.b16 %v2754
        %v2906 = vunpack.c.h.b16 %v2754
        %v2907 = vunpack.c.l.b16 %v2755
        %v2908 = vunpack.c.h.b16 %v2755
        %v2909 = vunpack.c.l.b16 %v2756
        %v2910 = vunpack.c.h.b16 %v2756
        %v2911 = vunpack.c.l.b16 %v2757
        %v2912 = vunpack.c.h.b16 %v2757
        %v2913 = vunpack.c.l.b16 %v2758
        %v2914 = vunpack.c.h.b16 %v2758
        %v2915 = vunpack.c.l.b16 %v2759
        %v2916 = vunpack.c.h.b16 %v2759
        %v2917 = vunpack.c.l.b16 %v2760
        %v2918 = vunpack.c.h.b16 %v2760
        %v2919 = vunpack.c.l.b16 %v2761
        %v2920 = vunpack.c.h.b16 %v2761
        %v2921 = vunpack.c.l.b16 %v2762
        %v2922 = vunpack.c.h.b16 %v2762
        %v2923 = vunpack.c.l.b16 %v2763
        %v2924 = vunpack.c.h.b16 %v2763
        %v2925 = vunpack.c.l.b16 %v2764
        %v2926 = vunpack.c.h.b16 %v2764
        %v2927 = vunpack.c.l.b16 %v2765
        %v2928 = vunpack.c.h.b16 %v2765
        %v2929 = vunpack.c.l.b16 %v2766
        %v2930 = vunpack.c.h.b16 %v2766
        %v2931 = vunpack.c.l.b16 %v2767
        %v2932 = vunpack.c.h.b16 %v2767
        %v2933 = vunpack.c.l.b16 %v2768
        %v2934 = vunpack.c.h.b16 %v2768
        %v2935 = vunpack.c.l.b16 %v2769
        %v2936 = vunpack.c.h.b16 %v2769
        %v2937 = vunpack.c.l.b16 %v2770
        %v2938 = vunpack.c.h.b16 %v2770
        %v2939 = vunpack.c.l.b16 %v2771
        %v2940 = vunpack.c.h.b16 %v2771
        %v2941 = vunpack.c.l.b16 %v2772
        %v2942 = vunpack.c.h.b16 %v2772
        %v2943 = vunpack.c.l.b16 %v2773
        %v2944 = vunpack.c.h.b16 %v2773
        %v2945 = vunpack.c.l.b16 %v2774
        %v2946 = vunpack.c.h.b16 %v2774
        %v2947 = vunpack.c.l.b16 %v2775
        %v2948 = vunpack.c.h.b16 %v2775
        %v2949 = vunpack.c.l.b16 %v2776
        %v2950 = vunpack.c.h.b16 %v2776
        %v2951 = vunpack.c.l.b16 %v2777
        %v2952 = vunpack.c.h.b16 %v2777
        %v2953 = vunpack.c.l.b16 %v2778
        %v2954 = vunpack.c.h.b16 %v2778
        %v2955 = vunpack.c.l.b16 %v2779
        %v2956 = vunpack.c.h.b16 %v2779
        %v2957 = vunpack.c.l.b16 %v2780
        %v2958 = vunpack.c.h.b16 %v2780
        %v2959 = vunpack.c.l.b16 %v2781
        %v2960 = vunpack.c.h.b16 %v2781
        %v2961 = vunpack.c.l.b16 %v2782
        %v2962 = vunpack.c.h.b16 %v2782
        %v2963 = vunpack.c.l.b16 %v2783
        %v2964 = vunpack.c.h.b16 %v2783
        %v2965 = vunpack.c.l.b16 %v2784
        %v2966 = vunpack.c.h.b16 %v2784
        %v2967 = vunpack.c.l.b16 %v2785
        %v2968 = vunpack.c.h.b16 %v2785
        %v2969 = vunpack.c.l.b16 %v2786
        %v2970 = vunpack.c.h.b16 %v2786
        %v2971 = vunpack.c.l.b16 %v2787
        %v2972 = vunpack.c.h.b16 %v2787
        %v2973 = vunpack.c.l.b16 %v2788
        %v2974 = vunpack.c.h.b16 %v2788
        %v2975 = vunpack.c.l.b16 %v2789
        %v2976 = vunpack.c.h.b16 %v2789
        %v2977 = vunpack.c.l.b16 %v2790
        %v2978 = vunpack.c.h.b16 %v2790
        %v2979 = vunpack.c.l.b16 %v2791
        %v2980 = vunpack.c.h.b16 %v2791
        %v2981 = vunpack.c.l.b16 %v2792
        %v2982 = vunpack.c.h.b16 %v2792
        %v2983 = vunpack.c.l.b16 %v2793
        %v2984 = vunpack.c.h.b16 %v2793
        %v2985 = vunpack.c.l.b16 %v2794
        %v2986 = vunpack.c.h.b16 %v2794
        %v2987 = vunpack.c.l.b16 %v2795
        %v2988 = vunpack.c.h.b16 %v2795
        %v2989 = vpack.c.b16 %v2863, %v2861
        %v2990 = vpack.c.b16 %v2864, %v2862
        %v2991 = vpack.c.b16 %v2867, %v2865
        %v2992 = vpack.c.b16 %v2868, %v2866
        %v2993 = vpack.c.b16 %v2871, %v2869
        %v2994 = vpack.c.b16 %v2872, %v2870
        %v2995 = vpack.c.b16 %v2875, %v2873
        %v2996 = vpack.c.b16 %v2876, %v2874
        %v2997 = vpack.c.b16 %v2879, %v2877
        %v2998 = vpack.c.b16 %v2880, %v2878
        %v2999 = vpack.c.b16 %v2883, %v2881
        %v3000 = vpack.c.b16 %v2884, %v2882
        %v3001 = vpack.c.b16 %v2887, %v2885
        %v3002 = vpack.c.b16 %v2888, %v2886
        %v3003 = vpack.c.b16 %v2891, %v2889
        %v3004 = vpack.c.b16 %v2892, %v2890
        %v3005 = vpack.c.b16 %v2895, %v2893
        %v3006 = vpack.c.b16 %v2896, %v2894
        %v3007 = vpack.c.b16 %v2899, %v2897
        %v3008 = vpack.c.b16 %v2900, %v2898
        %v3009 = vpack.c.b16 %v2903, %v2901
        %v3010 = vpack.c.b16 %v2904, %v2902
        %v3011 = vpack.c.b16 %v2907, %v2905
        %v3012 = vpack.c.b16 %v2908, %v2906
        %v3013 = vpack.c.b16 %v2911, %v2909
        %v3014 = vpack.c.b16 %v2912, %v2910
        %v3015 = vpack.c.b16 %v2915, %v2913
        %v3016 = vpack.c.b16 %v2916, %v2914
        %v3017 = vpack.c.b16 %v2919, %v2917
        %v3018 = vpack.c.b16 %v2920, %v2918
        %v3019 = vpack.c.b16 %v2923, %v2921
        %v3020 = vpack.c.b16 %v2924, %v2922
        %v3021 = vpack.c.b16 %v2927, %v2925
        %v3022 = vpack.c.b16 %v2928, %v2926
        %v3023 = vpack.c.b16 %v2931, %v2929
        %v3024 = vpack.c.b16 %v2932, %v2930
        %v3025 = vpack.c.b16 %v2935, %v2933
        %v3026 = vpack.c.b16 %v2936, %v2934
        %v3027 = vpack.c.b16 %v2939, %v2937
        %v3028 = vpack.c.b16 %v2940, %v2938
        %v3029 = vpack.c.b16 %v2943, %v2941
        %v3030 = vpack.c.b16 %v2944, %v2942
        %v3031 = vpack.c.b16 %v2947, %v2945
        %v3032 = vpack.c.b16 %v2948, %v2946
        %v3033 = vpack.c.b16 %v2951, %v2949
        %v3034 = vpack.c.b16 %v2952, %v2950
        %v3035 = vpack.c.b16 %v2955, %v2953
        %v3036 = vpack.c.b16 %v2956, %v2954
        %v3037 = vpack.c.b16 %v2959, %v2957
        %v3038 = vpack.c.b16 %v2960, %v2958
        %v3039 = vpack.c.b16 %v2963, %v2961
        %v3040 = vpack.c.b16 %v2964, %v2962
        %v3041 = vpack.c.b16 %v2967, %v2965
        %v3042 = vpack.c.b16 %v2968, %v2966
        %v3043 = vpack.c.b16 %v2971, %v2969
        %v3044 = vpack.c.b16 %v2972, %v2970
        %v3045 = vpack.c.b16 %v2975, %v2973
        %v3046 = vpack.c.b16 %v2976, %v2974
        %v3047 = vpack.c.b16 %v2979, %v2977
        %v3048 = vpack.c.b16 %v2980, %v2978
        %v3049 = vpack.c.b16 %v2983, %v2981
        %v3050 = vpack.c.b16 %v2984, %v2982
        %v3051 = vpack.c.b16 %v2987, %v2985
        %v3052 = vpack.c.b16 %v2988, %v2986
        %v3118 = vlaneseq
        %v3119 = vshrl.u32 %v3118, 7
        %v3120 = vsub.s32 0, %v3119
        %v3121 = vrot.slane %v2796, %v3120
        %v3122 = vlaneseq
        %v3123 = vshrl.u32 %v3122, 7
        %v3124 = vsub.s32 1, %v3123
        %v3125 = vrot.slane %v2796, %v3124
        %3128 = vmatprep.subr.bf16.mxu0 %v2990
        %3129 = vmatpush1.bf16.msra.mxu0 %v2989
        %3130 = vmatprep.subr.bf16.mxu0 %v2992
        %3131 = vmatpush1.bf16.msra.mxu0 %v2991
        %3132 = vmatprep.subr.bf16.mxu0 %v2994
        %3133 = vmatpush1.bf16.msra.mxu0 %v2993
        %3134 = vmatprep.subr.bf16.mxu0 %v2996
        %3135 = vmatpush1.bf16.msra.mxu0 %v2995
        %3136 = vmatprep.subr.bf16.mxu0 %v2998
        %3137 = vmatpush1.bf16.msra.mxu0 %v2997
        %3138 = vmatprep.subr.bf16.mxu0 %v3000
        %3139 = vmatpush1.bf16.msra.mxu0 %v2999
        %3140 = vmatprep.subr.bf16.mxu0 %v3002
        %3141 = vmatpush1.bf16.msra.mxu0 %v3001
        %3142 = vmatprep.subr.bf16.mxu0 %v3004
        %3143 = vmatpush1.bf16.msra.mxu0 %v3003
        %3144 = vmatprep.subr.bf16.mxu0 %v3006
        %3145 = vmatpush1.bf16.msra.mxu0 %v3005
        %3146 = vmatprep.subr.bf16.mxu0 %v3008
        %3147 = vmatpush1.bf16.msra.mxu0 %v3007
        %3148 = vmatprep.subr.bf16.mxu0 %v3010
        %3149 = vmatpush1.bf16.msra.mxu0 %v3009
        %3150 = vmatprep.subr.bf16.mxu0 %v3012
        %3151 = vmatpush1.bf16.msra.mxu0 %v3011
        %3152 = vmatprep.subr.bf16.mxu0 %v3014
        %3153 = vmatpush1.bf16.msra.mxu0 %v3013
        %3154 = vmatprep.subr.bf16.mxu0 %v3016
        %3155 = vmatpush1.bf16.msra.mxu0 %v3015
        %3156 = vmatprep.subr.bf16.mxu0 %v3018
        %3157 = vmatpush1.bf16.msra.mxu0 %v3017
        %3158 = vmatprep.subr.bf16.mxu0 %v3020
        %3159 = vmatpush1.bf16.msra.mxu0 %v3019
        %3160 = vmatprep.mubr.bf16.mxu0 %v2729
        %3161 = vmatmul.mubr.bf16.gmra.mrb[0].mxu0 %v2728
        %v3162 = vpop.f32.mrb[0].mxu0
        %v3163 = vadd.f32 %v3121, %v3162
        %v3164 = vpop.f32.mrb[0].mxu0
        %v3165 = vadd.f32 %v3125, %v3164
        %v3166 = vpop.f32.mrb[0].mxu0
        %v3167 = vpop.f32.mrb[0].mxu0
        %3168 = vdwg.mxu0
        %3169 = vmatprep.subr.bf16.mxu0 %v3022
        %3170 = vmatpush1.bf16.msra.mxu0 %v3021
        %3171 = vmatprep.subr.bf16.mxu0 %v3024
        %3172 = vmatpush1.bf16.msra.mxu0 %v3023
        %3173 = vmatprep.subr.bf16.mxu0 %v3026
        %3174 = vmatpush1.bf16.msra.mxu0 %v3025
        %3175 = vmatprep.subr.bf16.mxu0 %v3028
        %3176 = vmatpush1.bf16.msra.mxu0 %v3027
        %3177 = vmatprep.subr.bf16.mxu0 %v3030
        %3178 = vmatpush1.bf16.msra.mxu0 %v3029
        %3179 = vmatprep.subr.bf16.mxu0 %v3032
        %3180 = vmatpush1.bf16.msra.mxu0 %v3031
        %3181 = vmatprep.subr.bf16.mxu0 %v3034
        %3182 = vmatpush1.bf16.msra.mxu0 %v3033
        %3183 = vmatprep.subr.bf16.mxu0 %v3036
        %3184 = vmatpush1.bf16.msra.mxu0 %v3035
        %3185 = vmatprep.subr.bf16.mxu0 %v3038
        %3186 = vmatpush1.bf16.msra.mxu0 %v3037
        %3187 = vmatprep.subr.bf16.mxu0 %v3040
        %3188 = vmatpush1.bf16.msra.mxu0 %v3039
        %3189 = vmatprep.subr.bf16.mxu0 %v3042
        %3190 = vmatpush1.bf16.msra.mxu0 %v3041
        %3191 = vmatprep.subr.bf16.mxu0 %v3044
        %3192 = vmatpush1.bf16.msra.mxu0 %v3043
        %3193 = vmatprep.subr.bf16.mxu0 %v3046
        %3194 = vmatpush1.bf16.msra.mxu0 %v3045
        %3195 = vmatprep.subr.bf16.mxu0 %v3048
        %3196 = vmatpush1.bf16.msra.mxu0 %v3047
        %3197 = vmatprep.subr.bf16.mxu0 %v3050
        %3198 = vmatpush1.bf16.msra.mxu0 %v3049
        %3199 = vmatprep.subr.bf16.mxu0 %v3052
        %3200 = vmatpush1.bf16.msra.mxu0 %v3051
        %3201 = vmatprep.mubr.bf16.mxu0 %v2731
        %3202 = vmatmul.mubr.bf16.gmra.mrb[0].mxu0 %v2730
        %v3203 = vpop.f32.mrb[0].mxu0
        %v3204 = vadd.f32 %v3163, %v3203
        %v3205 = vpop.f32.mrb[0].mxu0
        %v3206 = vadd.f32 %v3165, %v3205
        %v3207 = vpop.f32.mrb[0].mxu0
        %v3208 = vpop.f32.mrb[0].mxu0
        %3209 = vdwg.mxu0
        %v3210 = vmax.f32 %v3204, 0.0
        %v3211 = vmax.f32 %v3206, 0.0
        %v3212 = vld [vmem:[%s8] sm:$0x3]
        %v3214 = vlaneseq
        %v3215 = vshrl.u32 %v3214, 7
        %v3216 = vsub.s32 0, %v3215
        %v3217 = vrot.slane %v3212, %v3216
        %v3218 = vlaneseq
        %v3219 = vshrl.u32 %v3218, 7
        %v3220 = vsub.s32 1, %v3219
        %v3221 = vrot.slane %v3212, %v3220
        %v3224 = vmul.f32 %v3210, %v3217
        %v3225 = vmul.f32 %v3211, %v3221
        %v3226 = vld [vmem:[%s9] sm:$0x3]
        %v3228 = vlaneseq
        %v3229 = vshrl.u32 %v3228, 7
        %v3230 = vsub.s32 0, %v3229
        %v3231 = vrot.slane %v3226, %v3230
        %v3232 = vlaneseq
        %v3233 = vshrl.u32 %v3232, 7
        %v3234 = vsub.s32 1, %v3233
        %v3235 = vrot.slane %v3226, %v3234
        %v3238 = vadd.f32 %v3224, %v3231
        %v3239 = vadd.f32 %v3225, %v3235
        %v3240 = vpack.c.bf16 %v3238, %v3238
        %v3241 = vpack.c.bf16 %v3239, %v3239
        %v3242 = vld [vmem:[%s10] sm:$0xf]
        %v3243 = vld [vmem:[%s10 + $0x4] sm:$0xf]
        %v3244 = vld [vmem:[%s10 + $0x8] sm:$0xf]
        %v3245 = vld [vmem:[%s10 + $0xc] sm:$0xf]
        %v3246 = vld [vmem:[%s10 + $0x10] sm:$0xf]
        %v3247 = vld [vmem:[%s10 + $0x14] sm:$0xf]
        %v3248 = vld [vmem:[%s10 + $0x18] sm:$0xf]
        %v3249 = vld [vmem:[%s10 + $0x1c] sm:$0xf]
        %v3250 = vld [vmem:[%s10 + $0x20] sm:$0xf]
        %v3251 = vld [vmem:[%s10 + $0x24] sm:$0xf]
        %v3252 = vld [vmem:[%s10 + $0x28] sm:$0xf]
        %v3253 = vld [vmem:[%s10 + $0x2c] sm:$0xf]
        %v3254 = vld [vmem:[%s10 + $0x30] sm:$0xf]
        %v3255 = vld [vmem:[%s10 + $0x34] sm:$0xf]
        %v3256 = vld [vmem:[%s10 + $0x38] sm:$0xf]
        %v3257 = vld [vmem:[%s10 + $0x3c] sm:$0xf]
        %v3258 = vld [vmem:[%s10 + $0x40] sm:$0xf]
        %v3259 = vld [vmem:[%s10 + $0x44] sm:$0xf]
        %v3260 = vld [vmem:[%s10 + $0x48] sm:$0xf]
        %v3261 = vld [vmem:[%s10 + $0x4c] sm:$0xf]
        %v3262 = vld [vmem:[%s10 + $0x50] sm:$0xf]
        %v3263 = vld [vmem:[%s10 + $0x54] sm:$0xf]
        %v3264 = vld [vmem:[%s10 + $0x58] sm:$0xf]
        %v3265 = vld [vmem:[%s10 + $0x5c] sm:$0xf]
        %v3266 = vld [vmem:[%s10 + $0x60] sm:$0xf]
        %v3267 = vld [vmem:[%s10 + $0x64] sm:$0xf]
        %v3268 = vld [vmem:[%s10 + $0x68] sm:$0xf]
        %v3269 = vld [vmem:[%s10 + $0x6c] sm:$0xf]
        %v3270 = vld [vmem:[%s10 + $0x70] sm:$0xf]
        %v3271 = vld [vmem:[%s10 + $0x74] sm:$0xf]
        %v3272 = vld [vmem:[%s10 + $0x78] sm:$0xf]
        %v3273 = vld [vmem:[%s10 + $0x7c] sm:$0xf]
        %v3274 = vld [vmem:[%s11] sm:$0x1]
        %v3307 = vunpack.c.l.b16 %v3242
        %v3308 = vunpack.c.l.b16 %v3243
        %v3309 = vunpack.c.l.b16 %v3244
        %v3310 = vunpack.c.l.b16 %v3245
        %v3311 = vunpack.c.l.b16 %v3246
        %v3312 = vunpack.c.l.b16 %v3247
        %v3313 = vunpack.c.l.b16 %v3248
        %v3314 = vunpack.c.l.b16 %v3249
        %v3315 = vunpack.c.l.b16 %v3250
        %v3316 = vunpack.c.l.b16 %v3251
        %v3317 = vunpack.c.l.b16 %v3252
        %v3318 = vunpack.c.l.b16 %v3253
        %v3319 = vunpack.c.l.b16 %v3254
        %v3320 = vunpack.c.l.b16 %v3255
        %v3321 = vunpack.c.l.b16 %v3256
        %v3322 = vunpack.c.l.b16 %v3257
        %v3323 = vunpack.c.l.b16 %v3258
        %v3324 = vunpack.c.l.b16 %v3259
        %v3325 = vunpack.c.l.b16 %v3260
        %v3326 = vunpack.c.l.b16 %v3261
        %v3327 = vunpack.c.l.b16 %v3262
        %v3328 = vunpack.c.l.b16 %v3263
        %v3329 = vunpack.c.l.b16 %v3264
        %v3330 = vunpack.c.l.b16 %v3265
        %v3331 = vunpack.c.l.b16 %v3266
        %v3332 = vunpack.c.l.b16 %v3267
        %v3333 = vunpack.c.l.b16 %v3268
        %v3334 = vunpack.c.l.b16 %v3269
        %v3335 = vunpack.c.l.b16 %v3270
        %v3336 = vunpack.c.l.b16 %v3271
        %v3337 = vunpack.c.l.b16 %v3272
        %v3338 = vunpack.c.l.b16 %v3273
        %v3339 = vpack.c.b16 %v3308, %v3307
        %v3340 = vpack.c.b16 %v3310, %v3309
        %v3341 = vpack.c.b16 %v3312, %v3311
        %v3342 = vpack.c.b16 %v3314, %v3313
        %v3343 = vpack.c.b16 %v3316, %v3315
        %v3344 = vpack.c.b16 %v3318, %v3317
        %v3345 = vpack.c.b16 %v3320, %v3319
        %v3346 = vpack.c.b16 %v3322, %v3321
        %v3347 = vpack.c.b16 %v3324, %v3323
        %v3348 = vpack.c.b16 %v3326, %v3325
        %v3349 = vpack.c.b16 %v3328, %v3327
        %v3350 = vpack.c.b16 %v3330, %v3329
        %v3351 = vpack.c.b16 %v3332, %v3331
        %v3352 = vpack.c.b16 %v3334, %v3333
        %v3353 = vpack.c.b16 %v3336, %v3335
        %v3354 = vpack.c.b16 %v3338, %v3337
        %3371 = vmatprep.subr.bf16.mxu0 0
        %3372 = vmatpush1.bf16.msra.mxu0 %v3339
        %3373 = vmatprep.subr.bf16.mxu0 0
        %3374 = vmatpush1.bf16.msra.mxu0 %v3340
        %3375 = vmatprep.subr.bf16.mxu0 0
        %3376 = vmatpush1.bf16.msra.mxu0 %v3341
        %3377 = vmatprep.subr.bf16.mxu0 0
        %3378 = vmatpush1.bf16.msra.mxu0 %v3342
        %3379 = vmatprep.subr.bf16.mxu0 0
        %3380 = vmatpush1.bf16.msra.mxu0 %v3343
        %3381 = vmatprep.subr.bf16.mxu0 0
        %3382 = vmatpush1.bf16.msra.mxu0 %v3344
        %3383 = vmatprep.subr.bf16.mxu0 0
        %3384 = vmatpush1.bf16.msra.mxu0 %v3345
        %3385 = vmatprep.subr.bf16.mxu0 0
        %3386 = vmatpush1.bf16.msra.mxu0 %v3346
        %3387 = vmatprep.subr.bf16.mxu0 0
        %3388 = vmatpush1.bf16.msra.mxu0 %v3347
        %3389 = vmatprep.subr.bf16.mxu0 0
        %3390 = vmatpush1.bf16.msra.mxu0 %v3348
        %3391 = vmatprep.subr.bf16.mxu0 0
        %3392 = vmatpush1.bf16.msra.mxu0 %v3349
        %3393 = vmatprep.subr.bf16.mxu0 0
        %3394 = vmatpush1.bf16.msra.mxu0 %v3350
        %3395 = vmatprep.subr.bf16.mxu0 0
        %3396 = vmatpush1.bf16.msra.mxu0 %v3351
        %3397 = vmatprep.subr.bf16.mxu0 0
        %3398 = vmatpush1.bf16.msra.mxu0 %v3352
        %3399 = vmatprep.subr.bf16.mxu0 0
        %3400 = vmatpush1.bf16.msra.mxu0 %v3353
        %3401 = vmatprep.subr.bf16.mxu0 0
        %3402 = vmatpush1.bf16.msra.mxu0 %v3354
        %3403 = vmatprep.mubr.bf16.mxu0 %v3241
        %3404 = vmatmul.mubr.bf16.gmra.mrb[0].mxu0 %v3240
        %v3405 = vpop.f32.mrb[0].mxu0
        %v3406 = vadd.f32 %v3274, %v3405
        %v3407 = vpop.f32.mrb[0].mxu0
        %v3408 = vpop.f32.mrb[0].mxu0
        %v3409 = vpop.f32.mrb[0].mxu0
        %3410 = vdwg.mxu0
        %v3411 = vmul.f32 %v3406, 0.5
        %v3412 = vmul.f32 %v3411, 1.442695
        %v3413 = vpow.pop %v3412
        %v3415 = vlaneseq
        %v3416 = vshrl.u32 %v3415, 7
        %v3417 = vsub.s32 0, %v3416
        %v3418 = vrot.slane %v736, %v3417
        %3419 = vrot.lane.b32.xlu0 %v3418, 32
        %v3420 = vpop.permute.xlu0 %3419
        %v3422 = vmul.f32 %v3413, %v3420
        %3424 = vrot.lane.b32.xlu0 %v3422, 96
        %v3425 = vpop.permute.xlu0 %3424
        %v3427 = vadd.f32 %v3406, %v3425
        %3429 = vrot.lane.b32.xlu0 %v3406, 32
        %v3430 = vpop.permute.xlu0 %3429
        %vm3432 = vcmask 261120
        %v3433 = vsel %vm3432, %v3427, %v3430
        %vm3434 = vcmask 523264
        %v3435 = vsel %vm3434, %v3433, %v3430
        %vm3436 = vcmask 778240
        %3437 = vst.msk [vmem:[%s733] sm:$0x1] %vm3436, %v3435
        %v3438 = vpack.c.bf16 %v3427, %v3427
        %v3439 = vld [vmem:[%s12] sm:$0xff]
        %v3440 = vld [vmem:[%s12 + $0x8] sm:$0xff]
        %v3441 = vld [vmem:[%s12 + $0x10] sm:$0xff]
        %v3442 = vld [vmem:[%s12 + $0x18] sm:$0xff]
        %v3443 = vld [vmem:[%s13] sm:$0x3]
        %v3448 = vunpack.c.l.b16 %v3439
        %v3449 = vunpack.c.h.b16 %v3439
        %v3450 = vunpack.c.l.b16 %v3440
        %v3451 = vunpack.c.h.b16 %v3440
        %v3452 = vunpack.c.l.b16 %v3441
        %v3453 = vunpack.c.h.b16 %v3441
        %v3454 = vunpack.c.l.b16 %v3442
        %v3455 = vunpack.c.h.b16 %v3442
        %v3456 = vpack.c.b16 %v3450, %v3448
        %v3457 = vpack.c.b16 %v3451, %v3449
        %v3458 = vpack.c.b16 %v3454, %v3452
        %v3459 = vpack.c.b16 %v3455, %v3453
        %v3465 = vlaneseq
        %v3466 = vshrl.u32 %v3465, 7
        %v3467 = vsub.s32 0, %v3466
        %v3468 = vrot.slane %v3443, %v3467
        %v3469 = vlaneseq
        %v3470 = vshrl.u32 %v3469, 7
        %v3471 = vsub.s32 1, %v3470
        %v3472 = vrot.slane %v3443, %v3471
        %v3476 = vsel %vm3432, %v3438, 0
        %3478 = vmatprep.subr.bf16.mxu0 %v3457
        %3479 = vmatpush1.bf16.msra.mxu0 %v3456
        %3480 = vmatprep.subr.bf16.mxu0 %v3459
        %3481 = vmatpush1.bf16.msra.mxu0 %v3458
        %3482 = vmatprep.subr.bf16.mxu0 0
        %3483 = vmatpush1.bf16.msra.mxu0 0
        %3484 = vmatprep.subr.bf16.mxu0 0
        %3485 = vmatpush1.bf16.msra.mxu0 0
        %3486 = vmatprep.subr.bf16.mxu0 0
        %3487 = vmatpush1.bf16.msra.mxu0 0
        %3488 = vmatprep.subr.bf16.mxu0 0
        %3489 = vmatpush1.bf16.msra.mxu0 0
        %3490 = vmatprep.subr.bf16.mxu0 0
        %3491 = vmatpush1.bf16.msra.mxu0 0
        %3492 = vmatprep.subr.bf16.mxu0 0
        %3493 = vmatpush1.bf16.msra.mxu0 0
        %3494 = vmatprep.subr.bf16.mxu0 0
        %3495 = vmatpush1.bf16.msra.mxu0 0
        %3496 = vmatprep.subr.bf16.mxu0 0
        %3497 = vmatpush1.bf16.msra.mxu0 0
        %3498 = vmatprep.subr.bf16.mxu0 0
        %3499 = vmatpush1.bf16.msra.mxu0 0
        %3500 = vmatprep.subr.bf16.mxu0 0
        %3501 = vmatpush1.bf16.msra.mxu0 0
        %3502 = vmatprep.subr.bf16.mxu0 0
        %3503 = vmatpush1.bf16.msra.mxu0 0
        %3504 = vmatprep.subr.bf16.mxu0 0
        %3505 = vmatpush1.bf16.msra.mxu0 0
        %3506 = vmatprep.subr.bf16.mxu0 0
        %3507 = vmatpush1.bf16.msra.mxu0 0
        %3508 = vmatprep.subr.bf16.mxu0 0
        %3509 = vmatpush1.bf16.msra.mxu0 0
        %3510 = vmatprep.mubr.bf16.mxu0 0
        %3511 = vmatmul.mubr.bf16.gmra.mrb[0].mxu0 %v3476
        %v3512 = vpop.f32.mrb[0].mxu0
        %v3513 = vadd.f32 %v3468, %v3512
        %v3514 = vpop.f32.mrb[0].mxu0
        %v3515 = vadd.f32 %v3472, %v3514
        %v3516 = vpop.f32.mrb[0].mxu0
        %v3517 = vpop.f32.mrb[0].mxu0
        %3518 = vdwg.mxu0
        %v3519 = vmax.f32 %v3513, 0.0
        %v3520 = vmax.f32 %v3515, 0.0
        %v3521 = vpack.c.bf16 %v3519, %v3519
        %v3522 = vpack.c.bf16 %v3520, %v3520
        %v3523 = vld [vmem:[#allocation6] sm:$0xff]
        %v3524 = vld [vmem:[#allocation6 + $0x8] sm:$0xff]
        %v3525 = vld [vmem:[#allocation6 + $0x10] sm:$0xff]
        %v3526 = vld [vmem:[#allocation6 + $0x18] sm:$0xff]
        %v3527 = vld [vmem:[#allocation6 + $0x20] sm:$0xff]
        %v3528 = vld [vmem:[#allocation6 + $0x28] sm:$0xff]
        %v3529 = vld [vmem:[#allocation6 + $0x30] sm:$0xff]
        %v3530 = vld [vmem:[#allocation6 + $0x38] sm:$0xff]
        %v3531 = vld [vmem:[#allocation6 + $0x40] sm:$0xff]
        %v3532 = vld [vmem:[#allocation6 + $0x48] sm:$0xff]
        %v3533 = vld [vmem:[#allocation6 + $0x50] sm:$0xff]
        %v3534 = vld [vmem:[#allocation6 + $0x58] sm:$0xff]
        %v3535 = vld [vmem:[#allocation6 + $0x60] sm:$0xff]
        %v3536 = vld [vmem:[#allocation6 + $0x68] sm:$0xff]
        %v3537 = vld [vmem:[#allocation6 + $0x70] sm:$0xff]
        %v3538 = vld [vmem:[#allocation6 + $0x78] sm:$0xff]
        %v3539 = vld [vmem:[#allocation6 + $0x80] sm:$0xff]
        %v3540 = vld [vmem:[#allocation6 + $0x88] sm:$0xff]
        %v3541 = vld [vmem:[#allocation6 + $0x90] sm:$0xff]
        %v3542 = vld [vmem:[#allocation6 + $0x98] sm:$0xff]
        %v3543 = vld [vmem:[#allocation6 + $0xa0] sm:$0xff]
        %v3544 = vld [vmem:[#allocation6 + $0xa8] sm:$0xff]
        %v3545 = vld [vmem:[#allocation6 + $0xb0] sm:$0xff]
        %v3546 = vld [vmem:[#allocation6 + $0xb8] sm:$0xff]
        %v3547 = vld [vmem:[#allocation6 + $0xc0] sm:$0xff]
        %v3548 = vld [vmem:[#allocation6 + $0xc8] sm:$0xff]
        %v3549 = vld [vmem:[#allocation6 + $0xd0] sm:$0xff]
        %v3550 = vld [vmem:[#allocation6 + $0xd8] sm:$0xff]
        %v3551 = vld [vmem:[#allocation6 + $0xe0] sm:$0xff]
        %v3552 = vld [vmem:[#allocation6 + $0xe8] sm:$0xff]
        %v3553 = vld [vmem:[#allocation6 + $0xf0] sm:$0xff]
        %v3554 = vld [vmem:[#allocation6 + $0xf8] sm:$0xff]
        %v3555 = vld [vmem:[#allocation6 + $0x100] sm:$0xff]
        %v3556 = vld [vmem:[#allocation6 + $0x108] sm:$0xff]
        %v3557 = vld [vmem:[#allocation6 + $0x110] sm:$0xff]
        %v3558 = vld [vmem:[#allocation6 + $0x118] sm:$0xff]
        %v3559 = vld [vmem:[#allocation6 + $0x120] sm:$0xff]
        %v3560 = vld [vmem:[#allocation6 + $0x128] sm:$0xff]
        %v3561 = vld [vmem:[#allocation6 + $0x130] sm:$0xff]
        %v3562 = vld [vmem:[#allocation6 + $0x138] sm:$0xff]
        %v3563 = vld [vmem:[#allocation6 + $0x140] sm:$0xff]
        %v3564 = vld [vmem:[#allocation6 + $0x148] sm:$0xff]
        %v3565 = vld [vmem:[#allocation6 + $0x150] sm:$0xff]
        %v3566 = vld [vmem:[#allocation6 + $0x158] sm:$0xff]
        %v3567 = vld [vmem:[#allocation6 + $0x160] sm:$0xff]
        %v3568 = vld [vmem:[#allocation6 + $0x168] sm:$0xff]
        %v3569 = vld [vmem:[#allocation6 + $0x170] sm:$0xff]
        %v3570 = vld [vmem:[#allocation6 + $0x178] sm:$0xff]
        %v3571 = vld [vmem:[#allocation6 + $0x180] sm:$0xff]
        %v3572 = vld [vmem:[#allocation6 + $0x188] sm:$0xff]
        %v3573 = vld [vmem:[#allocation6 + $0x190] sm:$0xff]
        %v3574 = vld [vmem:[#allocation6 + $0x198] sm:$0xff]
        %v3575 = vld [vmem:[#allocation6 + $0x1a0] sm:$0xff]
        %v3576 = vld [vmem:[#allocation6 + $0x1a8] sm:$0xff]
        %v3577 = vld [vmem:[#allocation6 + $0x1b0] sm:$0xff]
        %v3578 = vld [vmem:[#allocation6 + $0x1b8] sm:$0xff]
        %v3579 = vld [vmem:[#allocation6 + $0x1c0] sm:$0xff]
        %v3580 = vld [vmem:[#allocation6 + $0x1c8] sm:$0xff]
        %v3581 = vld [vmem:[#allocation6 + $0x1d0] sm:$0xff]
        %v3582 = vld [vmem:[#allocation6 + $0x1d8] sm:$0xff]
        %v3583 = vld [vmem:[#allocation6 + $0x1e0] sm:$0xff]
        %v3584 = vld [vmem:[#allocation6 + $0x1e8] sm:$0xff]
        %v3585 = vld [vmem:[#allocation6 + $0x1f0] sm:$0xff]
        %v3586 = vld [vmem:[#allocation6 + $0x1f8] sm:$0xff]
        %v3587 = vld [vmem:[%s15] sm:$0xf]
        %v3652 = vunpack.c.l.b16 %v3523
        %v3653 = vunpack.c.h.b16 %v3523
        %v3654 = vunpack.c.l.b16 %v3524
        %v3655 = vunpack.c.h.b16 %v3524
        %v3656 = vunpack.c.l.b16 %v3525
        %v3657 = vunpack.c.h.b16 %v3525
        %v3658 = vunpack.c.l.b16 %v3526
        %v3659 = vunpack.c.h.b16 %v3526
        %v3660 = vunpack.c.l.b16 %v3527
        %v3661 = vunpack.c.h.b16 %v3527
        %v3662 = vunpack.c.l.b16 %v3528
        %v3663 = vunpack.c.h.b16 %v3528
        %v3664 = vunpack.c.l.b16 %v3529
        %v3665 = vunpack.c.h.b16 %v3529
        %v3666 = vunpack.c.l.b16 %v3530
        %v3667 = vunpack.c.h.b16 %v3530
        %v3668 = vunpack.c.l.b16 %v3531
        %v3669 = vunpack.c.h.b16 %v3531
        %v3670 = vunpack.c.l.b16 %v3532
        %v3671 = vunpack.c.h.b16 %v3532
        %v3672 = vunpack.c.l.b16 %v3533
        %v3673 = vunpack.c.h.b16 %v3533
        %v3674 = vunpack.c.l.b16 %v3534
        %v3675 = vunpack.c.h.b16 %v3534
        %v3676 = vunpack.c.l.b16 %v3535
        %v3677 = vunpack.c.h.b16 %v3535
        %v3678 = vunpack.c.l.b16 %v3536
        %v3679 = vunpack.c.h.b16 %v3536
        %v3680 = vunpack.c.l.b16 %v3537
        %v3681 = vunpack.c.h.b16 %v3537
        %v3682 = vunpack.c.l.b16 %v3538
        %v3683 = vunpack.c.h.b16 %v3538
        %v3684 = vunpack.c.l.b16 %v3539
        %v3685 = vunpack.c.h.b16 %v3539
        %v3686 = vunpack.c.l.b16 %v3540
        %v3687 = vunpack.c.h.b16 %v3540
        %v3688 = vunpack.c.l.b16 %v3541
        %v3689 = vunpack.c.h.b16 %v3541
        %v3690 = vunpack.c.l.b16 %v3542
        %v3691 = vunpack.c.h.b16 %v3542
        %v3692 = vunpack.c.l.b16 %v3543
        %v3693 = vunpack.c.h.b16 %v3543
        %v3694 = vunpack.c.l.b16 %v3544
        %v3695 = vunpack.c.h.b16 %v3544
        %v3696 = vunpack.c.l.b16 %v3545
        %v3697 = vunpack.c.h.b16 %v3545
        %v3698 = vunpack.c.l.b16 %v3546
        %v3699 = vunpack.c.h.b16 %v3546
        %v3700 = vunpack.c.l.b16 %v3547
        %v3701 = vunpack.c.h.b16 %v3547
        %v3702 = vunpack.c.l.b16 %v3548
        %v3703 = vunpack.c.h.b16 %v3548
        %v3704 = vunpack.c.l.b16 %v3549
        %v3705 = vunpack.c.h.b16 %v3549
        %v3706 = vunpack.c.l.b16 %v3550
        %v3707 = vunpack.c.h.b16 %v3550
        %v3708 = vunpack.c.l.b16 %v3551
        %v3709 = vunpack.c.h.b16 %v3551
        %v3710 = vunpack.c.l.b16 %v3552
        %v3711 = vunpack.c.h.b16 %v3552
        %v3712 = vunpack.c.l.b16 %v3553
        %v3713 = vunpack.c.h.b16 %v3553
        %v3714 = vunpack.c.l.b16 %v3554
        %v3715 = vunpack.c.h.b16 %v3554
        %v3716 = vunpack.c.l.b16 %v3555
        %v3717 = vunpack.c.h.b16 %v3555
        %v3718 = vunpack.c.l.b16 %v3556
        %v3719 = vunpack.c.h.b16 %v3556
        %v3720 = vunpack.c.l.b16 %v3557
        %v3721 = vunpack.c.h.b16 %v3557
        %v3722 = vunpack.c.l.b16 %v3558
        %v3723 = vunpack.c.h.b16 %v3558
        %v3724 = vunpack.c.l.b16 %v3559
        %v3725 = vunpack.c.h.b16 %v3559
        %v3726 = vunpack.c.l.b16 %v3560
        %v3727 = vunpack.c.h.b16 %v3560
        %v3728 = vunpack.c.l.b16 %v3561
        %v3729 = vunpack.c.h.b16 %v3561
        %v3730 = vunpack.c.l.b16 %v3562
        %v3731 = vunpack.c.h.b16 %v3562
        %v3732 = vunpack.c.l.b16 %v3563
        %v3733 = vunpack.c.h.b16 %v3563
        %v3734 = vunpack.c.l.b16 %v3564
        %v3735 = vunpack.c.h.b16 %v3564
        %v3736 = vunpack.c.l.b16 %v3565
        %v3737 = vunpack.c.h.b16 %v3565
        %v3738 = vunpack.c.l.b16 %v3566
        %v3739 = vunpack.c.h.b16 %v3566
        %v3740 = vunpack.c.l.b16 %v3567
        %v3741 = vunpack.c.h.b16 %v3567
        %v3742 = vunpack.c.l.b16 %v3568
        %v3743 = vunpack.c.h.b16 %v3568
        %v3744 = vunpack.c.l.b16 %v3569
        %v3745 = vunpack.c.h.b16 %v3569
        %v3746 = vunpack.c.l.b16 %v3570
        %v3747 = vunpack.c.h.b16 %v3570
        %v3748 = vunpack.c.l.b16 %v3571
        %v3749 = vunpack.c.h.b16 %v3571
        %v3750 = vunpack.c.l.b16 %v3572
        %v3751 = vunpack.c.h.b16 %v3572
        %v3752 = vunpack.c.l.b16 %v3573
        %v3753 = vunpack.c.h.b16 %v3573
        %v3754 = vunpack.c.l.b16 %v3574
        %v3755 = vunpack.c.h.b16 %v3574
        %v3756 = vunpack.c.l.b16 %v3575
        %v3757 = vunpack.c.h.b16 %v3575
        %v3758 = vunpack.c.l.b16 %v3576
        %v3759 = vunpack.c.h.b16 %v3576
        %v3760 = vunpack.c.l.b16 %v3577
        %v3761 = vunpack.c.h.b16 %v3577
        %v3762 = vunpack.c.l.b16 %v3578
        %v3763 = vunpack.c.h.b16 %v3578
        %v3764 = vunpack.c.l.b16 %v3579
        %v3765 = vunpack.c.h.b16 %v3579
        %v3766 = vunpack.c.l.b16 %v3580
        %v3767 = vunpack.c.h.b16 %v3580
        %v3768 = vunpack.c.l.b16 %v3581
        %v3769 = vunpack.c.h.b16 %v3581
        %v3770 = vunpack.c.l.b16 %v3582
        %v3771 = vunpack.c.h.b16 %v3582
        %v3772 = vunpack.c.l.b16 %v3583
        %v3773 = vunpack.c.h.b16 %v3583
        %v3774 = vunpack.c.l.b16 %v3584
        %v3775 = vunpack.c.h.b16 %v3584
        %v3776 = vunpack.c.l.b16 %v3585
        %v3777 = vunpack.c.h.b16 %v3585
        %v3778 = vunpack.c.l.b16 %v3586
        %v3779 = vunpack.c.h.b16 %v3586
        %v3780 = vpack.c.b16 %v3656, %v3652
        %v3781 = vpack.c.b16 %v3657, %v3653
        %v3782 = vpack.c.b16 %v3658, %v3654
        %v3783 = vpack.c.b16 %v3659, %v3655
        %v3784 = vpack.c.b16 %v3664, %v3660
        %v3785 = vpack.c.b16 %v3665, %v3661
        %v3786 = vpack.c.b16 %v3666, %v3662
        %v3787 = vpack.c.b16 %v3667, %v3663
        %v3788 = vpack.c.b16 %v3672, %v3668
        %v3789 = vpack.c.b16 %v3673, %v3669
        %v3790 = vpack.c.b16 %v3674, %v3670
        %v3791 = vpack.c.b16 %v3675, %v3671
        %v3792 = vpack.c.b16 %v3680, %v3676
        %v3793 = vpack.c.b16 %v3681, %v3677
        %v3794 = vpack.c.b16 %v3682, %v3678
        %v3795 = vpack.c.b16 %v3683, %v3679
        %v3796 = vpack.c.b16 %v3688, %v3684
        %v3797 = vpack.c.b16 %v3689, %v3685
        %v3798 = vpack.c.b16 %v3690, %v3686
        %v3799 = vpack.c.b16 %v3691, %v3687
        %v3800 = vpack.c.b16 %v3696, %v3692
        %v3801 = vpack.c.b16 %v3697, %v3693
        %v3802 = vpack.c.b16 %v3698, %v3694
        %v3803 = vpack.c.b16 %v3699, %v3695
        %v3804 = vpack.c.b16 %v3704, %v3700
        %v3805 = vpack.c.b16 %v3705, %v3701
        %v3806 = vpack.c.b16 %v3706, %v3702
        %v3807 = vpack.c.b16 %v3707, %v3703
        %v3808 = vpack.c.b16 %v3712, %v3708
        %v3809 = vpack.c.b16 %v3713, %v3709
        %v3810 = vpack.c.b16 %v3714, %v3710
        %v3811 = vpack.c.b16 %v3715, %v3711
        %v3812 = vpack.c.b16 %v3720, %v3716
        %v3813 = vpack.c.b16 %v3721, %v3717
        %v3814 = vpack.c.b16 %v3722, %v3718
        %v3815 = vpack.c.b16 %v3723, %v3719
        %v3816 = vpack.c.b16 %v3728, %v3724
        %v3817 = vpack.c.b16 %v3729, %v3725
        %v3818 = vpack.c.b16 %v3730, %v3726
        %v3819 = vpack.c.b16 %v3731, %v3727
        %v3820 = vpack.c.b16 %v3736, %v3732
        %v3821 = vpack.c.b16 %v3737, %v3733
        %v3822 = vpack.c.b16 %v3738, %v3734
        %v3823 = vpack.c.b16 %v3739, %v3735
        %v3824 = vpack.c.b16 %v3744, %v3740
        %v3825 = vpack.c.b16 %v3745, %v3741
        %v3826 = vpack.c.b16 %v3746, %v3742
        %v3827 = vpack.c.b16 %v3747, %v3743
        %v3828 = vpack.c.b16 %v3752, %v3748
        %v3829 = vpack.c.b16 %v3753, %v3749
        %v3830 = vpack.c.b16 %v3754, %v3750
        %v3831 = vpack.c.b16 %v3755, %v3751
        %v3832 = vpack.c.b16 %v3760, %v3756
        %v3833 = vpack.c.b16 %v3761, %v3757
        %v3834 = vpack.c.b16 %v3762, %v3758
        %v3835 = vpack.c.b16 %v3763, %v3759
        %v3836 = vpack.c.b16 %v3768, %v3764
        %v3837 = vpack.c.b16 %v3769, %v3765
        %v3838 = vpack.c.b16 %v3770, %v3766
        %v3839 = vpack.c.b16 %v3771, %v3767
        %v3840 = vpack.c.b16 %v3776, %v3772
        %v3841 = vpack.c.b16 %v3777, %v3773
        %v3842 = vpack.c.b16 %v3778, %v3774
        %v3843 = vpack.c.b16 %v3779, %v3775
        %v3909 = vlaneseq
        %v3910 = vshrl.u32 %v3909, 7
        %v3911 = vsub.s32 0, %v3910
        %v3912 = vrot.slane %v3587, %v3911
        %v3913 = vlaneseq
        %v3914 = vshrl.u32 %v3913, 7
        %v3915 = vsub.s32 1, %v3914
        %v3916 = vrot.slane %v3587, %v3915
        %v3917 = vlaneseq
        %v3918 = vshrl.u32 %v3917, 7
        %v3919 = vsub.s32 2, %v3918
        %v3920 = vrot.slane %v3587, %v3919
        %v3921 = vlaneseq
        %v3922 = vshrl.u32 %v3921, 7
        %v3923 = vsub.s32 3, %v3922
        %v3924 = vrot.slane %v3587, %v3923
        %3929 = vmatprep.subr.bf16.mxu0 %v3781
        %3930 = vmatpush1.bf16.msra.mxu0 %v3780
        %3931 = vmatprep.subr.bf16.mxu0 %v3785
        %3932 = vmatpush1.bf16.msra.mxu0 %v3784
        %3933 = vmatprep.subr.bf16.mxu0 %v3789
        %3934 = vmatpush1.bf16.msra.mxu0 %v3788
        %3935 = vmatprep.subr.bf16.mxu0 %v3793
        %3936 = vmatpush1.bf16.msra.mxu0 %v3792
        %3937 = vmatprep.subr.bf16.mxu0 %v3797
        %3938 = vmatpush1.bf16.msra.mxu0 %v3796
        %3939 = vmatprep.subr.bf16.mxu0 %v3801
        %3940 = vmatpush1.bf16.msra.mxu0 %v3800
        %3941 = vmatprep.subr.bf16.mxu0 %v3805
        %3942 = vmatpush1.bf16.msra.mxu0 %v3804
        %3943 = vmatprep.subr.bf16.mxu0 %v3809
        %3944 = vmatpush1.bf16.msra.mxu0 %v3808
        %3945 = vmatprep.subr.bf16.mxu0 %v3813
        %3946 = vmatpush1.bf16.msra.mxu0 %v3812
        %3947 = vmatprep.subr.bf16.mxu0 %v3817
        %3948 = vmatpush1.bf16.msra.mxu0 %v3816
        %3949 = vmatprep.subr.bf16.mxu0 %v3821
        %3950 = vmatpush1.bf16.msra.mxu0 %v3820
        %3951 = vmatprep.subr.bf16.mxu0 %v3825
        %3952 = vmatpush1.bf16.msra.mxu0 %v3824
        %3953 = vmatprep.subr.bf16.mxu0 %v3829
        %3954 = vmatpush1.bf16.msra.mxu0 %v3828
        %3955 = vmatprep.subr.bf16.mxu0 %v3833
        %3956 = vmatpush1.bf16.msra.mxu0 %v3832
        %3957 = vmatprep.subr.bf16.mxu0 %v3837
        %3958 = vmatpush1.bf16.msra.mxu0 %v3836
        %3959 = vmatprep.subr.bf16.mxu0 %v3841
        %3960 = vmatpush1.bf16.msra.mxu0 %v3840
        %3961 = vmatprep.mubr.bf16.mxu0 %v3522
        %3962 = vmatmul.mubr.bf16.gmra.mrb[0].mxu0 %v3521
        %v3963 = vpop.f32.mrb[0].mxu0
        %v3964 = vadd.f32 %v3912, %v3963
        %v3965 = vpop.f32.mrb[0].mxu0
        %v3966 = vadd.f32 %v3916, %v3965
        %v3967 = vpop.f32.mrb[0].mxu0
        %v3968 = vpop.f32.mrb[0].mxu0
        %3969 = vdwg.mxu0
        %3970 = vmatprep.subr.bf16.mxu0 %v3783
        %3971 = vmatpush1.bf16.msra.mxu0 %v3782
        %3972 = vmatprep.subr.bf16.mxu0 %v3787
        %3973 = vmatpush1.bf16.msra.mxu0 %v3786
        %3974 = vmatprep.subr.bf16.mxu0 %v3791
        %3975 = vmatpush1.bf16.msra.mxu0 %v3790
        %3976 = vmatprep.subr.bf16.mxu0 %v3795
        %3977 = vmatpush1.bf16.msra.mxu0 %v3794
        %3978 = vmatprep.subr.bf16.mxu0 %v3799
        %3979 = vmatpush1.bf16.msra.mxu0 %v3798
        %3980 = vmatprep.subr.bf16.mxu0 %v3803
        %3981 = vmatpush1.bf16.msra.mxu0 %v3802
        %3982 = vmatprep.subr.bf16.mxu0 %v3807
        %3983 = vmatpush1.bf16.msra.mxu0 %v3806
        %3984 = vmatprep.subr.bf16.mxu0 %v3811
        %3985 = vmatpush1.bf16.msra.mxu0 %v3810
        %3986 = vmatprep.subr.bf16.mxu0 %v3815
        %3987 = vmatpush1.bf16.msra.mxu0 %v3814
        %3988 = vmatprep.subr.bf16.mxu0 %v3819
        %3989 = vmatpush1.bf16.msra.mxu0 %v3818
        %3990 = vmatprep.subr.bf16.mxu0 %v3823
        %3991 = vmatpush1.bf16.msra.mxu0 %v3822
        %3992 = vmatprep.subr.bf16.mxu0 %v3827
        %3993 = vmatpush1.bf16.msra.mxu0 %v3826
        %3994 = vmatprep.subr.bf16.mxu0 %v3831
        %3995 = vmatpush1.bf16.msra.mxu0 %v3830
        %3996 = vmatprep.subr.bf16.mxu0 %v3835
        %3997 = vmatpush1.bf16.msra.mxu0 %v3834
        %3998 = vmatprep.subr.bf16.mxu0 %v3839
        %3999 = vmatpush1.bf16.msra.mxu0 %v3838
        %4000 = vmatprep.subr.bf16.mxu0 %v3843
        %4001 = vmatpush1.bf16.msra.mxu0 %v3842
        %4002 = vmatprep.mubr.bf16.mxu0 %v3522
        %4003 = vmatmul.mubr.bf16.gmra.mrb[0].mxu0 %v3521
        %v4004 = vpop.f32.mrb[0].mxu0
        %v4005 = vadd.f32 %v3920, %v4004
        %v4006 = vpop.f32.mrb[0].mxu0
        %v4007 = vadd.f32 %v3924, %v4006
        %v4008 = vpop.f32.mrb[0].mxu0
        %v4009 = vpop.f32.mrb[0].mxu0
        %4010 = vdwg.mxu0
        %v4011 = vmax.f32 %v3964, 0.0
        %v4012 = vmax.f32 %v3966, 0.0
        %v4013 = vmax.f32 %v4005, 0.0
        %v4014 = vmax.f32 %v4007, 0.0
        %v4015 = vld [vmem:[%s16] sm:$0xf]
        %v4017 = vlaneseq
        %v4018 = vshrl.u32 %v4017, 7
        %v4019 = vsub.s32 0, %v4018
        %v4020 = vrot.slane %v4015, %v4019
        %v4021 = vlaneseq
        %v4022 = vshrl.u32 %v4021, 7
        %v4023 = vsub.s32 1, %v4022
        %v4024 = vrot.slane %v4015, %v4023
        %v4025 = vlaneseq
        %v4026 = vshrl.u32 %v4025, 7
        %v4027 = vsub.s32 2, %v4026
        %v4028 = vrot.slane %v4015, %v4027
        %v4029 = vlaneseq
        %v4030 = vshrl.u32 %v4029, 7
        %v4031 = vsub.s32 3, %v4030
        %v4032 = vrot.slane %v4015, %v4031
        %v4037 = vmul.f32 %v4011, %v4020
        %v4038 = vmul.f32 %v4012, %v4024
        %v4039 = vmul.f32 %v4013, %v4028
        %v4040 = vmul.f32 %v4014, %v4032
        %v4041 = vld [vmem:[%s17] sm:$0xf]
        %v4043 = vlaneseq
        %v4044 = vshrl.u32 %v4043, 7
        %v4045 = vsub.s32 0, %v4044
        %v4046 = vrot.slane %v4041, %v4045
        %v4047 = vlaneseq
        %v4048 = vshrl.u32 %v4047, 7
        %v4049 = vsub.s32 1, %v4048
        %v4050 = vrot.slane %v4041, %v4049
        %v4051 = vlaneseq
        %v4052 = vshrl.u32 %v4051, 7
        %v4053 = vsub.s32 2, %v4052
        %v4054 = vrot.slane %v4041, %v4053
        %v4055 = vlaneseq
        %v4056 = vshrl.u32 %v4055, 7
        %v4057 = vsub.s32 3, %v4056
        %v4058 = vrot.slane %v4041, %v4057
        %v4063 = vadd.f32 %v4037, %v4046
        %v4064 = vadd.f32 %v4038, %v4050
        %v4065 = vadd.f32 %v4039, %v4054
        %v4066 = vadd.f32 %v4040, %v4058
        %v4067 = vpack.c.bf16 %v4063, %v4063
        %v4068 = vpack.c.bf16 %v4064, %v4064
        %v4069 = vpack.c.bf16 %v4065, %v4065
        %v4070 = vpack.c.bf16 %v4066, %v4066
        %v4071 = vld [vmem:[#allocation7] sm:$0xff]
        %v4072 = vld [vmem:[#allocation7 + $0x8] sm:$0xff]
        %v4073 = vld [vmem:[#allocation7 + $0x10] sm:$0xff]
        %v4074 = vld [vmem:[#allocation7 + $0x18] sm:$0xff]
        %v4075 = vld [vmem:[#allocation7 + $0x20] sm:$0xff]
        %v4076 = vld [vmem:[#allocation7 + $0x28] sm:$0xff]
        %v4077 = vld [vmem:[#allocation7 + $0x30] sm:$0xff]
        %v4078 = vld [vmem:[#allocation7 + $0x38] sm:$0xff]
        %v4079 = vld [vmem:[#allocation7 + $0x40] sm:$0xff]
        %v4080 = vld [vmem:[#allocation7 + $0x48] sm:$0xff]
        %v4081 = vld [vmem:[#allocation7 + $0x50] sm:$0xff]
        %v4082 = vld [vmem:[#allocation7 + $0x58] sm:$0xff]
        %v4083 = vld [vmem:[#allocation7 + $0x60] sm:$0xff]
        %v4084 = vld [vmem:[#allocation7 + $0x68] sm:$0xff]
        %v4085 = vld [vmem:[#allocation7 + $0x70] sm:$0xff]
        %v4086 = vld [vmem:[#allocation7 + $0x78] sm:$0xff]
        %v4087 = vld [vmem:[#allocation7 + $0x80] sm:$0xff]
        %v4088 = vld [vmem:[#allocation7 + $0x88] sm:$0xff]
        %v4089 = vld [vmem:[#allocation7 + $0x90] sm:$0xff]
        %v4090 = vld [vmem:[#allocation7 + $0x98] sm:$0xff]
        %v4091 = vld [vmem:[#allocation7 + $0xa0] sm:$0xff]
        %v4092 = vld [vmem:[#allocation7 + $0xa8] sm:$0xff]
        %v4093 = vld [vmem:[#allocation7 + $0xb0] sm:$0xff]
        %v4094 = vld [vmem:[#allocation7 + $0xb8] sm:$0xff]
        %v4095 = vld [vmem:[#allocation7 + $0xc0] sm:$0xff]
        %v4096 = vld [vmem:[#allocation7 + $0xc8] sm:$0xff]
        %v4097 = vld [vmem:[#allocation7 + $0xd0] sm:$0xff]
        %v4098 = vld [vmem:[#allocation7 + $0xd8] sm:$0xff]
        %v4099 = vld [vmem:[#allocation7 + $0xe0] sm:$0xff]
        %v4100 = vld [vmem:[#allocation7 + $0xe8] sm:$0xff]
        %v4101 = vld [vmem:[#allocation7 + $0xf0] sm:$0xff]
        %v4102 = vld [vmem:[#allocation7 + $0xf8] sm:$0xff]
        %v4103 = vld [vmem:[#allocation7 + $0x100] sm:$0xff]
        %v4104 = vld [vmem:[#allocation7 + $0x108] sm:$0xff]
        %v4105 = vld [vmem:[#allocation7 + $0x110] sm:$0xff]
        %v4106 = vld [vmem:[#allocation7 + $0x118] sm:$0xff]
        %v4107 = vld [vmem:[#allocation7 + $0x120] sm:$0xff]
        %v4108 = vld [vmem:[#allocation7 + $0x128] sm:$0xff]
        %v4109 = vld [vmem:[#allocation7 + $0x130] sm:$0xff]
        %v4110 = vld [vmem:[#allocation7 + $0x138] sm:$0xff]
        %v4111 = vld [vmem:[#allocation7 + $0x140] sm:$0xff]
        %v4112 = vld [vmem:[#allocation7 + $0x148] sm:$0xff]
        %v4113 = vld [vmem:[#allocation7 + $0x150] sm:$0xff]
        %v4114 = vld [vmem:[#allocation7 + $0x158] sm:$0xff]
        %v4115 = vld [vmem:[#allocation7 + $0x160] sm:$0xff]
        %v4116 = vld [vmem:[#allocation7 + $0x168] sm:$0xff]
        %v4117 = vld [vmem:[#allocation7 + $0x170] sm:$0xff]
        %v4118 = vld [vmem:[#allocation7 + $0x178] sm:$0xff]
        %v4119 = vld [vmem:[#allocation7 + $0x180] sm:$0xff]
        %v4120 = vld [vmem:[#allocation7 + $0x188] sm:$0xff]
        %v4121 = vld [vmem:[#allocation7 + $0x190] sm:$0xff]
        %v4122 = vld [vmem:[#allocation7 + $0x198] sm:$0xff]
        %v4123 = vld [vmem:[#allocation7 + $0x1a0] sm:$0xff]
        %v4124 = vld [vmem:[#allocation7 + $0x1a8] sm:$0xff]
        %v4125 = vld [vmem:[#allocation7 + $0x1b0] sm:$0xff]
        %v4126 = vld [vmem:[#allocation7 + $0x1b8] sm:$0xff]
        %v4127 = vld [vmem:[#allocation7 + $0x1c0] sm:$0xff]
        %v4128 = vld [vmem:[#allocation7 + $0x1c8] sm:$0xff]
        %v4129 = vld [vmem:[#allocation7 + $0x1d0] sm:$0xff]
        %v4130 = vld [vmem:[#allocation7 + $0x1d8] sm:$0xff]
        %v4131 = vld [vmem:[#allocation7 + $0x1e0] sm:$0xff]
        %v4132 = vld [vmem:[#allocation7 + $0x1e8] sm:$0xff]
        %v4133 = vld [vmem:[#allocation7 + $0x1f0] sm:$0xff]
        %v4134 = vld [vmem:[#allocation7 + $0x1f8] sm:$0xff]
        %v4135 = vld [vmem:[#allocation7 + $0x200] sm:$0xff]
        %v4136 = vld [vmem:[#allocation7 + $0x208] sm:$0xff]
        %v4137 = vld [vmem:[#allocation7 + $0x210] sm:$0xff]
        %v4138 = vld [vmem:[#allocation7 + $0x218] sm:$0xff]
        %v4139 = vld [vmem:[#allocation7 + $0x220] sm:$0xff]
        %v4140 = vld [vmem:[#allocation7 + $0x228] sm:$0xff]
        %v4141 = vld [vmem:[#allocation7 + $0x230] sm:$0xff]
        %v4142 = vld [vmem:[#allocation7 + $0x238] sm:$0xff]
        %v4143 = vld [vmem:[#allocation7 + $0x240] sm:$0xff]
        %v4144 = vld [vmem:[#allocation7 + $0x248] sm:$0xff]
        %v4145 = vld [vmem:[#allocation7 + $0x250] sm:$0xff]
        %v4146 = vld [vmem:[#allocation7 + $0x258] sm:$0xff]
        %v4147 = vld [vmem:[#allocation7 + $0x260] sm:$0xff]
        %v4148 = vld [vmem:[#allocation7 + $0x268] sm:$0xff]
        %v4149 = vld [vmem:[#allocation7 + $0x270] sm:$0xff]
        %v4150 = vld [vmem:[#allocation7 + $0x278] sm:$0xff]
        %v4151 = vld [vmem:[#allocation7 + $0x280] sm:$0xff]
        %v4152 = vld [vmem:[#allocation7 + $0x288] sm:$0xff]
        %v4153 = vld [vmem:[#allocation7 + $0x290] sm:$0xff]
        %v4154 = vld [vmem:[#allocation7 + $0x298] sm:$0xff]
        %v4155 = vld [vmem:[#allocation7 + $0x2a0] sm:$0xff]
        %v4156 = vld [vmem:[#allocation7 + $0x2a8] sm:$0xff]
        %v4157 = vld [vmem:[#allocation7 + $0x2b0] sm:$0xff]
        %v4158 = vld [vmem:[#allocation7 + $0x2b8] sm:$0xff]
        %v4159 = vld [vmem:[#allocation7 + $0x2c0] sm:$0xff]
        %v4160 = vld [vmem:[#allocation7 + $0x2c8] sm:$0xff]
        %v4161 = vld [vmem:[#allocation7 + $0x2d0] sm:$0xff]
        %v4162 = vld [vmem:[#allocation7 + $0x2d8] sm:$0xff]
        %v4163 = vld [vmem:[#allocation7 + $0x2e0] sm:$0xff]
        %v4164 = vld [vmem:[#allocation7 + $0x2e8] sm:$0xff]
        %v4165 = vld [vmem:[#allocation7 + $0x2f0] sm:$0xff]
        %v4166 = vld [vmem:[#allocation7 + $0x2f8] sm:$0xff]
        %v4167 = vld [vmem:[#allocation7 + $0x300] sm:$0xff]
        %v4168 = vld [vmem:[#allocation7 + $0x308] sm:$0xff]
        %v4169 = vld [vmem:[#allocation7 + $0x310] sm:$0xff]
        %v4170 = vld [vmem:[#allocation7 + $0x318] sm:$0xff]
        %v4171 = vld [vmem:[#allocation7 + $0x320] sm:$0xff]
        %v4172 = vld [vmem:[#allocation7 + $0x328] sm:$0xff]
        %v4173 = vld [vmem:[#allocation7 + $0x330] sm:$0xff]
        %v4174 = vld [vmem:[#allocation7 + $0x338] sm:$0xff]
        %v4175 = vld [vmem:[#allocation7 + $0x340] sm:$0xff]
        %v4176 = vld [vmem:[#allocation7 + $0x348] sm:$0xff]
        %v4177 = vld [vmem:[#allocation7 + $0x350] sm:$0xff]
        %v4178 = vld [vmem:[#allocation7 + $0x358] sm:$0xff]
        %v4179 = vld [vmem:[#allocation7 + $0x360] sm:$0xff]
        %v4180 = vld [vmem:[#allocation7 + $0x368] sm:$0xff]
        %v4181 = vld [vmem:[#allocation7 + $0x370] sm:$0xff]
        %v4182 = vld [vmem:[#allocation7 + $0x378] sm:$0xff]
        %v4183 = vld [vmem:[#allocation7 + $0x380] sm:$0xff]
        %v4184 = vld [vmem:[#allocation7 + $0x388] sm:$0xff]
        %v4185 = vld [vmem:[#allocation7 + $0x390] sm:$0xff]
        %v4186 = vld [vmem:[#allocation7 + $0x398] sm:$0xff]
        %v4187 = vld [vmem:[#allocation7 + $0x3a0] sm:$0xff]
        %v4188 = vld [vmem:[#allocation7 + $0x3a8] sm:$0xff]
        %v4189 = vld [vmem:[#allocation7 + $0x3b0] sm:$0xff]
        %v4190 = vld [vmem:[#allocation7 + $0x3b8] sm:$0xff]
        %v4191 = vld [vmem:[#allocation7 + $0x3c0] sm:$0xff]
        %v4192 = vld [vmem:[#allocation7 + $0x3c8] sm:$0xff]
        %v4193 = vld [vmem:[#allocation7 + $0x3d0] sm:$0xff]
        %v4194 = vld [vmem:[#allocation7 + $0x3d8] sm:$0xff]
        %v4195 = vld [vmem:[#allocation7 + $0x3e0] sm:$0xff]
        %v4196 = vld [vmem:[#allocation7 + $0x3e8] sm:$0xff]
        %v4197 = vld [vmem:[#allocation7 + $0x3f0] sm:$0xff]
        %v4198 = vld [vmem:[#allocation7 + $0x3f8] sm:$0xff]
        %v4199 = vld [vmem:[#allocation7 + $0x400] sm:$0xff]
        %v4200 = vld [vmem:[#allocation7 + $0x408] sm:$0xff]
        %v4201 = vld [vmem:[#allocation7 + $0x410] sm:$0xff]
        %v4202 = vld [vmem:[#allocation7 + $0x418] sm:$0xff]
        %v4203 = vld [vmem:[#allocation7 + $0x420] sm:$0xff]
        %v4204 = vld [vmem:[#allocation7 + $0x428] sm:$0xff]
        %v4205 = vld [vmem:[#allocation7 + $0x430] sm:$0xff]
        %v4206 = vld [vmem:[#allocation7 + $0x438] sm:$0xff]
        %v4207 = vld [vmem:[#allocation7 + $0x440] sm:$0xff]
        %v4208 = vld [vmem:[#allocation7 + $0x448] sm:$0xff]
        %v4209 = vld [vmem:[#allocation7 + $0x450] sm:$0xff]
        %v4210 = vld [vmem:[#allocation7 + $0x458] sm:$0xff]
        %v4211 = vld [vmem:[#allocation7 + $0x460] sm:$0xff]
        %v4212 = vld [vmem:[#allocation7 + $0x468] sm:$0xff]
        %v4213 = vld [vmem:[#allocation7 + $0x470] sm:$0xff]
        %v4214 = vld [vmem:[#allocation7 + $0x478] sm:$0xff]
        %v4215 = vld [vmem:[#allocation7 + $0x480] sm:$0xff]
        %v4216 = vld [vmem:[#allocation7 + $0x488] sm:$0xff]
        %v4217 = vld [vmem:[#allocation7 + $0x490] sm:$0xff]
        %v4218 = vld [vmem:[#allocation7 + $0x498] sm:$0xff]
        %v4219 = vld [vmem:[#allocation7 + $0x4a0] sm:$0xff]
        %v4220 = vld [vmem:[#allocation7 + $0x4a8] sm:$0xff]
        %v4221 = vld [vmem:[#allocation7 + $0x4b0] sm:$0xff]
        %v4222 = vld [vmem:[#allocation7 + $0x4b8] sm:$0xff]
        %v4223 = vld [vmem:[#allocation7 + $0x4c0] sm:$0xff]
        %v4224 = vld [vmem:[#allocation7 + $0x4c8] sm:$0xff]
        %v4225 = vld [vmem:[#allocation7 + $0x4d0] sm:$0xff]
        %v4226 = vld [vmem:[#allocation7 + $0x4d8] sm:$0xff]
        %v4227 = vld [vmem:[#allocation7 + $0x4e0] sm:$0xff]
        %v4228 = vld [vmem:[#allocation7 + $0x4e8] sm:$0xff]
        %v4229 = vld [vmem:[#allocation7 + $0x4f0] sm:$0xff]
        %v4230 = vld [vmem:[#allocation7 + $0x4f8] sm:$0xff]
        %v4231 = vld [vmem:[#allocation7 + $0x500] sm:$0xff]
        %v4232 = vld [vmem:[#allocation7 + $0x508] sm:$0xff]
        %v4233 = vld [vmem:[#allocation7 + $0x510] sm:$0xff]
        %v4234 = vld [vmem:[#allocation7 + $0x518] sm:$0xff]
        %v4235 = vld [vmem:[#allocation7 + $0x520] sm:$0xff]
        %v4236 = vld [vmem:[#allocation7 + $0x528] sm:$0xff]
        %v4237 = vld [vmem:[#allocation7 + $0x530] sm:$0xff]
        %v4238 = vld [vmem:[#allocation7 + $0x538] sm:$0xff]
        %v4239 = vld [vmem:[#allocation7 + $0x540] sm:$0xff]
        %v4240 = vld [vmem:[#allocation7 + $0x548] sm:$0xff]
        %v4241 = vld [vmem:[#allocation7 + $0x550] sm:$0xff]
        %v4242 = vld [vmem:[#allocation7 + $0x558] sm:$0xff]
        %v4243 = vld [vmem:[#allocation7 + $0x560] sm:$0xff]
        %v4244 = vld [vmem:[#allocation7 + $0x568] sm:$0xff]
        %v4245 = vld [vmem:[#allocation7 + $0x570] sm:$0xff]
        %v4246 = vld [vmem:[#allocation7 + $0x578] sm:$0xff]
        %v4247 = vld [vmem:[#allocation7 + $0x580] sm:$0xff]
        %v4248 = vld [vmem:[#allocation7 + $0x588] sm:$0xff]
        %v4249 = vld [vmem:[#allocation7 + $0x590] sm:$0xff]
        %v4250 = vld [vmem:[#allocation7 + $0x598] sm:$0xff]
        %v4251 = vld [vmem:[#allocation7 + $0x5a0] sm:$0xff]
        %v4252 = vld [vmem:[#allocation7 + $0x5a8] sm:$0xff]
        %v4253 = vld [vmem:[#allocation7 + $0x5b0] sm:$0xff]
        %v4254 = vld [vmem:[#allocation7 + $0x5b8] sm:$0xff]
        %v4255 = vld [vmem:[#allocation7 + $0x5c0] sm:$0xff]
        %v4256 = vld [vmem:[#allocation7 + $0x5c8] sm:$0xff]
        %v4257 = vld [vmem:[#allocation7 + $0x5d0] sm:$0xff]
        %v4258 = vld [vmem:[#allocation7 + $0x5d8] sm:$0xff]
        %v4259 = vld [vmem:[#allocation7 + $0x5e0] sm:$0xff]
        %v4260 = vld [vmem:[#allocation7 + $0x5e8] sm:$0xff]
        %v4261 = vld [vmem:[#allocation7 + $0x5f0] sm:$0xff]
        %v4262 = vld [vmem:[#allocation7 + $0x5f8] sm:$0xff]
        %v4263 = vld [vmem:[#allocation7 + $0x600] sm:$0xff]
        %v4264 = vld [vmem:[#allocation7 + $0x608] sm:$0xff]
        %v4265 = vld [vmem:[#allocation7 + $0x610] sm:$0xff]
        %v4266 = vld [vmem:[#allocation7 + $0x618] sm:$0xff]
        %v4267 = vld [vmem:[#allocation7 + $0x620] sm:$0xff]
        %v4268 = vld [vmem:[#allocation7 + $0x628] sm:$0xff]
        %v4269 = vld [vmem:[#allocation7 + $0x630] sm:$0xff]
        %v4270 = vld [vmem:[#allocation7 + $0x638] sm:$0xff]
        %v4271 = vld [vmem:[#allocation7 + $0x640] sm:$0xff]
        %v4272 = vld [vmem:[#allocation7 + $0x648] sm:$0xff]
        %v4273 = vld [vmem:[#allocation7 + $0x650] sm:$0xff]
        %v4274 = vld [vmem:[#allocation7 + $0x658] sm:$0xff]
        %v4275 = vld [vmem:[#allocation7 + $0x660] sm:$0xff]
        %v4276 = vld [vmem:[#allocation7 + $0x668] sm:$0xff]
        %v4277 = vld [vmem:[#allocation7 + $0x670] sm:$0xff]
        %v4278 = vld [vmem:[#allocation7 + $0x678] sm:$0xff]
        %v4279 = vld [vmem:[#allocation7 + $0x680] sm:$0xff]
        %v4280 = vld [vmem:[#allocation7 + $0x688] sm:$0xff]
        %v4281 = vld [vmem:[#allocation7 + $0x690] sm:$0xff]
        %v4282 = vld [vmem:[#allocation7 + $0x698] sm:$0xff]
        %v4283 = vld [vmem:[#allocation7 + $0x6a0] sm:$0xff]
        %v4284 = vld [vmem:[#allocation7 + $0x6a8] sm:$0xff]
        %v4285 = vld [vmem:[#allocation7 + $0x6b0] sm:$0xff]
        %v4286 = vld [vmem:[#allocation7 + $0x6b8] sm:$0xff]
        %v4287 = vld [vmem:[#allocation7 + $0x6c0] sm:$0xff]
        %v4288 = vld [vmem:[#allocation7 + $0x6c8] sm:$0xff]
        %v4289 = vld [vmem:[#allocation7 + $0x6d0] sm:$0xff]
        %v4290 = vld [vmem:[#allocation7 + $0x6d8] sm:$0xff]
        %v4291 = vld [vmem:[#allocation7 + $0x6e0] sm:$0xff]
        %v4292 = vld [vmem:[#allocation7 + $0x6e8] sm:$0xff]
        %v4293 = vld [vmem:[#allocation7 + $0x6f0] sm:$0xff]
        %v4294 = vld [vmem:[#allocation7 + $0x6f8] sm:$0xff]
        %v4295 = vld [vmem:[#allocation7 + $0x700] sm:$0xff]
        %v4296 = vld [vmem:[#allocation7 + $0x708] sm:$0xff]
        %v4297 = vld [vmem:[#allocation7 + $0x710] sm:$0xff]
        %v4298 = vld [vmem:[#allocation7 + $0x718] sm:$0xff]
        %v4299 = vld [vmem:[#allocation7 + $0x720] sm:$0xff]
        %v4300 = vld [vmem:[#allocation7 + $0x728] sm:$0xff]
        %v4301 = vld [vmem:[#allocation7 + $0x730] sm:$0xff]
        %v4302 = vld [vmem:[#allocation7 + $0x738] sm:$0xff]
        %v4303 = vld [vmem:[#allocation7 + $0x740] sm:$0xff]
        %v4304 = vld [vmem:[#allocation7 + $0x748] sm:$0xff]
        %v4305 = vld [vmem:[#allocation7 + $0x750] sm:$0xff]
        %v4306 = vld [vmem:[#allocation7 + $0x758] sm:$0xff]
        %v4307 = vld [vmem:[#allocation7 + $0x760] sm:$0xff]
        %v4308 = vld [vmem:[#allocation7 + $0x768] sm:$0xff]
        %v4309 = vld [vmem:[#allocation7 + $0x770] sm:$0xff]
        %v4310 = vld [vmem:[#allocation7 + $0x778] sm:$0xff]
        %v4311 = vld [vmem:[#allocation7 + $0x780] sm:$0xff]
        %v4312 = vld [vmem:[#allocation7 + $0x788] sm:$0xff]
        %v4313 = vld [vmem:[#allocation7 + $0x790] sm:$0xff]
        %v4314 = vld [vmem:[#allocation7 + $0x798] sm:$0xff]
        %v4315 = vld [vmem:[#allocation7 + $0x7a0] sm:$0xff]
        %v4316 = vld [vmem:[#allocation7 + $0x7a8] sm:$0xff]
        %v4317 = vld [vmem:[#allocation7 + $0x7b0] sm:$0xff]
        %v4318 = vld [vmem:[#allocation7 + $0x7b8] sm:$0xff]
        %v4319 = vld [vmem:[#allocation7 + $0x7c0] sm:$0xff]
        %v4320 = vld [vmem:[#allocation7 + $0x7c8] sm:$0xff]
        %v4321 = vld [vmem:[#allocation7 + $0x7d0] sm:$0xff]
        %v4322 = vld [vmem:[#allocation7 + $0x7d8] sm:$0xff]
        %v4323 = vld [vmem:[#allocation7 + $0x7e0] sm:$0xff]
        %v4324 = vld [vmem:[#allocation7 + $0x7e8] sm:$0xff]
        %v4325 = vld [vmem:[#allocation7 + $0x7f0] sm:$0xff]
        %v4326 = vld [vmem:[#allocation7 + $0x7f8] sm:$0xff]
        %v4327 = vld [vmem:[%s19] sm:$0xff]
        %v4584 = vunpack.c.l.b16 %v4071
        %v4585 = vunpack.c.h.b16 %v4071
        %v4586 = vunpack.c.l.b16 %v4072
        %v4587 = vunpack.c.h.b16 %v4072
        %v4588 = vunpack.c.l.b16 %v4073
        %v4589 = vunpack.c.h.b16 %v4073
        %v4590 = vunpack.c.l.b16 %v4074
        %v4591 = vunpack.c.h.b16 %v4074
        %v4592 = vunpack.c.l.b16 %v4075
        %v4593 = vunpack.c.h.b16 %v4075
        %v4594 = vunpack.c.l.b16 %v4076
        %v4595 = vunpack.c.h.b16 %v4076
        %v4596 = vunpack.c.l.b16 %v4077
        %v4597 = vunpack.c.h.b16 %v4077
        %v4598 = vunpack.c.l.b16 %v4078
        %v4599 = vunpack.c.h.b16 %v4078
        %v4600 = vunpack.c.l.b16 %v4079
        %v4601 = vunpack.c.h.b16 %v4079
        %v4602 = vunpack.c.l.b16 %v4080
        %v4603 = vunpack.c.h.b16 %v4080
        %v4604 = vunpack.c.l.b16 %v4081
        %v4605 = vunpack.c.h.b16 %v4081
        %v4606 = vunpack.c.l.b16 %v4082
        %v4607 = vunpack.c.h.b16 %v4082
        %v4608 = vunpack.c.l.b16 %v4083
        %v4609 = vunpack.c.h.b16 %v4083
        %v4610 = vunpack.c.l.b16 %v4084
        %v4611 = vunpack.c.h.b16 %v4084
        %v4612 = vunpack.c.l.b16 %v4085
        %v4613 = vunpack.c.h.b16 %v4085
        %v4614 = vunpack.c.l.b16 %v4086
        %v4615 = vunpack.c.h.b16 %v4086
        %v4616 = vunpack.c.l.b16 %v4087
        %v4617 = vunpack.c.h.b16 %v4087
        %v4618 = vunpack.c.l.b16 %v4088
        %v4619 = vunpack.c.h.b16 %v4088
        %v4620 = vunpack.c.l.b16 %v4089
        %v4621 = vunpack.c.h.b16 %v4089
        %v4622 = vunpack.c.l.b16 %v4090
        %v4623 = vunpack.c.h.b16 %v4090
        %v4624 = vunpack.c.l.b16 %v4091
        %v4625 = vunpack.c.h.b16 %v4091
        %v4626 = vunpack.c.l.b16 %v4092
        %v4627 = vunpack.c.h.b16 %v4092
        %v4628 = vunpack.c.l.b16 %v4093
        %v4629 = vunpack.c.h.b16 %v4093
        %v4630 = vunpack.c.l.b16 %v4094
        %v4631 = vunpack.c.h.b16 %v4094
        %v4632 = vunpack.c.l.b16 %v4095
        %v4633 = vunpack.c.h.b16 %v4095
        %v4634 = vunpack.c.l.b16 %v4096
        %v4635 = vunpack.c.h.b16 %v4096
        %v4636 = vunpack.c.l.b16 %v4097
        %v4637 = vunpack.c.h.b16 %v4097
        %v4638 = vunpack.c.l.b16 %v4098
        %v4639 = vunpack.c.h.b16 %v4098
        %v4640 = vunpack.c.l.b16 %v4099
        %v4641 = vunpack.c.h.b16 %v4099
        %v4642 = vunpack.c.l.b16 %v4100
        %v4643 = vunpack.c.h.b16 %v4100
        %v4644 = vunpack.c.l.b16 %v4101
        %v4645 = vunpack.c.h.b16 %v4101
        %v4646 = vunpack.c.l.b16 %v4102
        %v4647 = vunpack.c.h.b16 %v4102
        %v4648 = vunpack.c.l.b16 %v4103
        %v4649 = vunpack.c.h.b16 %v4103
        %v4650 = vunpack.c.l.b16 %v4104
        %v4651 = vunpack.c.h.b16 %v4104
        %v4652 = vunpack.c.l.b16 %v4105
        %v4653 = vunpack.c.h.b16 %v4105
        %v4654 = vunpack.c.l.b16 %v4106
        %v4655 = vunpack.c.h.b16 %v4106
        %v4656 = vunpack.c.l.b16 %v4107
        %v4657 = vunpack.c.h.b16 %v4107
        %v4658 = vunpack.c.l.b16 %v4108
        %v4659 = vunpack.c.h.b16 %v4108
        %v4660 = vunpack.c.l.b16 %v4109
        %v4661 = vunpack.c.h.b16 %v4109
        %v4662 = vunpack.c.l.b16 %v4110
        %v4663 = vunpack.c.h.b16 %v4110
        %v4664 = vunpack.c.l.b16 %v4111
        %v4665 = vunpack.c.h.b16 %v4111
        %v4666 = vunpack.c.l.b16 %v4112
        %v4667 = vunpack.c.h.b16 %v4112
        %v4668 = vunpack.c.l.b16 %v4113
        %v4669 = vunpack.c.h.b16 %v4113
        %v4670 = vunpack.c.l.b16 %v4114
        %v4671 = vunpack.c.h.b16 %v4114
        %v4672 = vunpack.c.l.b16 %v4115
        %v4673 = vunpack.c.h.b16 %v4115
        %v4674 = vunpack.c.l.b16 %v4116
        %v4675 = vunpack.c.h.b16 %v4116
        %v4676 = vunpack.c.l.b16 %v4117
        %v4677 = vunpack.c.h.b16 %v4117
        %v4678 = vunpack.c.l.b16 %v4118
        %v4679 = vunpack.c.h.b16 %v4118
        %v4680 = vunpack.c.l.b16 %v4119
        %v4681 = vunpack.c.h.b16 %v4119
        %v4682 = vunpack.c.l.b16 %v4120
        %v4683 = vunpack.c.h.b16 %v4120
        %v4684 = vunpack.c.l.b16 %v4121
        %v4685 = vunpack.c.h.b16 %v4121
        %v4686 = vunpack.c.l.b16 %v4122
        %v4687 = vunpack.c.h.b16 %v4122
        %v4688 = vunpack.c.l.b16 %v4123
        %v4689 = vunpack.c.h.b16 %v4123
        %v4690 = vunpack.c.l.b16 %v4124
        %v4691 = vunpack.c.h.b16 %v4124
        %v4692 = vunpack.c.l.b16 %v4125
        %v4693 = vunpack.c.h.b16 %v4125
        %v4694 = vunpack.c.l.b16 %v4126
        %v4695 = vunpack.c.h.b16 %v4126
        %v4696 = vunpack.c.l.b16 %v4127
        %v4697 = vunpack.c.h.b16 %v4127
        %v4698 = vunpack.c.l.b16 %v4128
        %v4699 = vunpack.c.h.b16 %v4128
        %v4700 = vunpack.c.l.b16 %v4129
        %v4701 = vunpack.c.h.b16 %v4129
        %v4702 = vunpack.c.l.b16 %v4130
        %v4703 = vunpack.c.h.b16 %v4130
        %v4704 = vunpack.c.l.b16 %v4131
        %v4705 = vunpack.c.h.b16 %v4131
        %v4706 = vunpack.c.l.b16 %v4132
        %v4707 = vunpack.c.h.b16 %v4132
        %v4708 = vunpack.c.l.b16 %v4133
        %v4709 = vunpack.c.h.b16 %v4133
        %v4710 = vunpack.c.l.b16 %v4134
        %v4711 = vunpack.c.h.b16 %v4134
        %v4712 = vunpack.c.l.b16 %v4135
        %v4713 = vunpack.c.h.b16 %v4135
        %v4714 = vunpack.c.l.b16 %v4136
        %v4715 = vunpack.c.h.b16 %v4136
        %v4716 = vunpack.c.l.b16 %v4137
        %v4717 = vunpack.c.h.b16 %v4137
        %v4718 = vunpack.c.l.b16 %v4138
        %v4719 = vunpack.c.h.b16 %v4138
        %v4720 = vunpack.c.l.b16 %v4139
        %v4721 = vunpack.c.h.b16 %v4139
        %v4722 = vunpack.c.l.b16 %v4140
        %v4723 = vunpack.c.h.b16 %v4140
        %v4724 = vunpack.c.l.b16 %v4141
        %v4725 = vunpack.c.h.b16 %v4141
        %v4726 = vunpack.c.l.b16 %v4142
        %v4727 = vunpack.c.h.b16 %v4142
        %v4728 = vunpack.c.l.b16 %v4143
        %v4729 = vunpack.c.h.b16 %v4143
        %v4730 = vunpack.c.l.b16 %v4144
        %v4731 = vunpack.c.h.b16 %v4144
        %v4732 = vunpack.c.l.b16 %v4145
        %v4733 = vunpack.c.h.b16 %v4145
        %v4734 = vunpack.c.l.b16 %v4146
        %v4735 = vunpack.c.h.b16 %v4146
        %v4736 = vunpack.c.l.b16 %v4147
        %v4737 = vunpack.c.h.b16 %v4147
        %v4738 = vunpack.c.l.b16 %v4148
        %v4739 = vunpack.c.h.b16 %v4148
        %v4740 = vunpack.c.l.b16 %v4149
        %v4741 = vunpack.c.h.b16 %v4149
        %v4742 = vunpack.c.l.b16 %v4150
        %v4743 = vunpack.c.h.b16 %v4150
        %v4744 = vunpack.c.l.b16 %v4151
        %v4745 = vunpack.c.h.b16 %v4151
        %v4746 = vunpack.c.l.b16 %v4152
        %v4747 = vunpack.c.h.b16 %v4152
        %v4748 = vunpack.c.l.b16 %v4153
        %v4749 = vunpack.c.h.b16 %v4153
        %v4750 = vunpack.c.l.b16 %v4154
        %v4751 = vunpack.c.h.b16 %v4154
        %v4752 = vunpack.c.l.b16 %v4155
        %v4753 = vunpack.c.h.b16 %v4155
        %v4754 = vunpack.c.l.b16 %v4156
        %v4755 = vunpack.c.h.b16 %v4156
        %v4756 = vunpack.c.l.b16 %v4157
        %v4757 = vunpack.c.h.b16 %v4157
        %v4758 = vunpack.c.l.b16 %v4158
        %v4759 = vunpack.c.h.b16 %v4158
        %v4760 = vunpack.c.l.b16 %v4159
        %v4761 = vunpack.c.h.b16 %v4159
        %v4762 = vunpack.c.l.b16 %v4160
        %v4763 = vunpack.c.h.b16 %v4160
        %v4764 = vunpack.c.l.b16 %v4161
        %v4765 = vunpack.c.h.b16 %v4161
        %v4766 = vunpack.c.l.b16 %v4162
        %v4767 = vunpack.c.h.b16 %v4162
        %v4768 = vunpack.c.l.b16 %v4163
        %v4769 = vunpack.c.h.b16 %v4163
        %v4770 = vunpack.c.l.b16 %v4164
        %v4771 = vunpack.c.h.b16 %v4164
        %v4772 = vunpack.c.l.b16 %v4165
        %v4773 = vunpack.c.h.b16 %v4165
        %v4774 = vunpack.c.l.b16 %v4166
        %v4775 = vunpack.c.h.b16 %v4166
        %v4776 = vunpack.c.l.b16 %v4167
        %v4777 = vunpack.c.h.b16 %v4167
        %v4778 = vunpack.c.l.b16 %v4168
        %v4779 = vunpack.c.h.b16 %v4168
        %v4780 = vunpack.c.l.b16 %v4169
        %v4781 = vunpack.c.h.b16 %v4169
        %v4782 = vunpack.c.l.b16 %v4170
        %v4783 = vunpack.c.h.b16 %v4170
        %v4784 = vunpack.c.l.b16 %v4171
        %v4785 = vunpack.c.h.b16 %v4171
        %v4786 = vunpack.c.l.b16 %v4172
        %v4787 = vunpack.c.h.b16 %v4172
        %v4788 = vunpack.c.l.b16 %v4173
        %v4789 = vunpack.c.h.b16 %v4173
        %v4790 = vunpack.c.l.b16 %v4174
        %v4791 = vunpack.c.h.b16 %v4174
        %v4792 = vunpack.c.l.b16 %v4175
        %v4793 = vunpack.c.h.b16 %v4175
        %v4794 = vunpack.c.l.b16 %v4176
        %v4795 = vunpack.c.h.b16 %v4176
        %v4796 = vunpack.c.l.b16 %v4177
        %v4797 = vunpack.c.h.b16 %v4177
        %v4798 = vunpack.c.l.b16 %v4178
        %v4799 = vunpack.c.h.b16 %v4178
        %v4800 = vunpack.c.l.b16 %v4179
        %v4801 = vunpack.c.h.b16 %v4179
        %v4802 = vunpack.c.l.b16 %v4180
        %v4803 = vunpack.c.h.b16 %v4180
        %v4804 = vunpack.c.l.b16 %v4181
        %v4805 = vunpack.c.h.b16 %v4181
        %v4806 = vunpack.c.l.b16 %v4182
        %v4807 = vunpack.c.h.b16 %v4182
        %v4808 = vunpack.c.l.b16 %v4183
        %v4809 = vunpack.c.h.b16 %v4183
        %v4810 = vunpack.c.l.b16 %v4184
        %v4811 = vunpack.c.h.b16 %v4184
        %v4812 = vunpack.c.l.b16 %v4185
        %v4813 = vunpack.c.h.b16 %v4185
        %v4814 = vunpack.c.l.b16 %v4186
        %v4815 = vunpack.c.h.b16 %v4186
        %v4816 = vunpack.c.l.b16 %v4187
        %v4817 = vunpack.c.h.b16 %v4187
        %v4818 = vunpack.c.l.b16 %v4188
        %v4819 = vunpack.c.h.b16 %v4188
        %v4820 = vunpack.c.l.b16 %v4189
        %v4821 = vunpack.c.h.b16 %v4189
        %v4822 = vunpack.c.l.b16 %v4190
        %v4823 = vunpack.c.h.b16 %v4190
        %v4824 = vunpack.c.l.b16 %v4191
        %v4825 = vunpack.c.h.b16 %v4191
        %v4826 = vunpack.c.l.b16 %v4192
        %v4827 = vunpack.c.h.b16 %v4192
        %v4828 = vunpack.c.l.b16 %v4193
        %v4829 = vunpack.c.h.b16 %v4193
        %v4830 = vunpack.c.l.b16 %v4194
        %v4831 = vunpack.c.h.b16 %v4194
        %v4832 = vunpack.c.l.b16 %v4195
        %v4833 = vunpack.c.h.b16 %v4195
        %v4834 = vunpack.c.l.b16 %v4196
        %v4835 = vunpack.c.h.b16 %v4196
        %v4836 = vunpack.c.l.b16 %v4197
        %v4837 = vunpack.c.h.b16 %v4197
        %v4838 = vunpack.c.l.b16 %v4198
        %v4839 = vunpack.c.h.b16 %v4198
        %v4840 = vunpack.c.l.b16 %v4199
        %v4841 = vunpack.c.h.b16 %v4199
        %v4842 = vunpack.c.l.b16 %v4200
        %v4843 = vunpack.c.h.b16 %v4200
        %v4844 = vunpack.c.l.b16 %v4201
        %v4845 = vunpack.c.h.b16 %v4201
        %v4846 = vunpack.c.l.b16 %v4202
        %v4847 = vunpack.c.h.b16 %v4202
        %v4848 = vunpack.c.l.b16 %v4203
        %v4849 = vunpack.c.h.b16 %v4203
        %v4850 = vunpack.c.l.b16 %v4204
        %v4851 = vunpack.c.h.b16 %v4204
        %v4852 = vunpack.c.l.b16 %v4205
        %v4853 = vunpack.c.h.b16 %v4205
        %v4854 = vunpack.c.l.b16 %v4206
        %v4855 = vunpack.c.h.b16 %v4206
        %v4856 = vunpack.c.l.b16 %v4207
        %v4857 = vunpack.c.h.b16 %v4207
        %v4858 = vunpack.c.l.b16 %v4208
        %v4859 = vunpack.c.h.b16 %v4208
        %v4860 = vunpack.c.l.b16 %v4209
        %v4861 = vunpack.c.h.b16 %v4209
        %v4862 = vunpack.c.l.b16 %v4210
        %v4863 = vunpack.c.h.b16 %v4210
        %v4864 = vunpack.c.l.b16 %v4211
        %v4865 = vunpack.c.h.b16 %v4211
        %v4866 = vunpack.c.l.b16 %v4212
        %v4867 = vunpack.c.h.b16 %v4212
        %v4868 = vunpack.c.l.b16 %v4213
        %v4869 = vunpack.c.h.b16 %v4213
        %v4870 = vunpack.c.l.b16 %v4214
        %v4871 = vunpack.c.h.b16 %v4214
        %v4872 = vunpack.c.l.b16 %v4215
        %v4873 = vunpack.c.h.b16 %v4215
        %v4874 = vunpack.c.l.b16 %v4216
        %v4875 = vunpack.c.h.b16 %v4216
        %v4876 = vunpack.c.l.b16 %v4217
        %v4877 = vunpack.c.h.b16 %v4217
        %v4878 = vunpack.c.l.b16 %v4218
        %v4879 = vunpack.c.h.b16 %v4218
        %v4880 = vunpack.c.l.b16 %v4219
        %v4881 = vunpack.c.h.b16 %v4219
        %v4882 = vunpack.c.l.b16 %v4220
        %v4883 = vunpack.c.h.b16 %v4220
        %v4884 = vunpack.c.l.b16 %v4221
        %v4885 = vunpack.c.h.b16 %v4221
        %v4886 = vunpack.c.l.b16 %v4222
        %v4887 = vunpack.c.h.b16 %v4222
        %v4888 = vunpack.c.l.b16 %v4223
        %v4889 = vunpack.c.h.b16 %v4223
        %v4890 = vunpack.c.l.b16 %v4224
        %v4891 = vunpack.c.h.b16 %v4224
        %v4892 = vunpack.c.l.b16 %v4225
        %v4893 = vunpack.c.h.b16 %v4225
        %v4894 = vunpack.c.l.b16 %v4226
        %v4895 = vunpack.c.h.b16 %v4226
        %v4896 = vunpack.c.l.b16 %v4227
        %v4897 = vunpack.c.h.b16 %v4227
        %v4898 = vunpack.c.l.b16 %v4228
        %v4899 = vunpack.c.h.b16 %v4228
        %v4900 = vunpack.c.l.b16 %v4229
        %v4901 = vunpack.c.h.b16 %v4229
        %v4902 = vunpack.c.l.b16 %v4230
        %v4903 = vunpack.c.h.b16 %v4230
        %v4904 = vunpack.c.l.b16 %v4231
        %v4905 = vunpack.c.h.b16 %v4231
        %v4906 = vunpack.c.l.b16 %v4232
        %v4907 = vunpack.c.h.b16 %v4232
        %v4908 = vunpack.c.l.b16 %v4233
        %v4909 = vunpack.c.h.b16 %v4233
        %v4910 = vunpack.c.l.b16 %v4234
        %v4911 = vunpack.c.h.b16 %v4234
        %v4912 = vunpack.c.l.b16 %v4235
        %v4913 = vunpack.c.h.b16 %v4235
        %v4914 = vunpack.c.l.b16 %v4236
        %v4915 = vunpack.c.h.b16 %v4236
        %v4916 = vunpack.c.l.b16 %v4237
        %v4917 = vunpack.c.h.b16 %v4237
        %v4918 = vunpack.c.l.b16 %v4238
        %v4919 = vunpack.c.h.b16 %v4238
        %v4920 = vunpack.c.l.b16 %v4239
        %v4921 = vunpack.c.h.b16 %v4239
        %v4922 = vunpack.c.l.b16 %v4240
        %v4923 = vunpack.c.h.b16 %v4240
        %v4924 = vunpack.c.l.b16 %v4241
        %v4925 = vunpack.c.h.b16 %v4241
        %v4926 = vunpack.c.l.b16 %v4242
        %v4927 = vunpack.c.h.b16 %v4242
        %v4928 = vunpack.c.l.b16 %v4243
        %v4929 = vunpack.c.h.b16 %v4243
        %v4930 = vunpack.c.l.b16 %v4244
        %v4931 = vunpack.c.h.b16 %v4244
        %v4932 = vunpack.c.l.b16 %v4245
        %v4933 = vunpack.c.h.b16 %v4245
        %v4934 = vunpack.c.l.b16 %v4246
        %v4935 = vunpack.c.h.b16 %v4246
        %v4936 = vunpack.c.l.b16 %v4247
        %v4937 = vunpack.c.h.b16 %v4247
        %v4938 = vunpack.c.l.b16 %v4248
        %v4939 = vunpack.c.h.b16 %v4248
        %v4940 = vunpack.c.l.b16 %v4249
        %v4941 = vunpack.c.h.b16 %v4249
        %v4942 = vunpack.c.l.b16 %v4250
        %v4943 = vunpack.c.h.b16 %v4250
        %v4944 = vunpack.c.l.b16 %v4251
        %v4945 = vunpack.c.h.b16 %v4251
        %v4946 = vunpack.c.l.b16 %v4252
        %v4947 = vunpack.c.h.b16 %v4252
        %v4948 = vunpack.c.l.b16 %v4253
        %v4949 = vunpack.c.h.b16 %v4253
        %v4950 = vunpack.c.l.b16 %v4254
        %v4951 = vunpack.c.h.b16 %v4254
        %v4952 = vunpack.c.l.b16 %v4255
        %v4953 = vunpack.c.h.b16 %v4255
        %v4954 = vunpack.c.l.b16 %v4256
        %v4955 = vunpack.c.h.b16 %v4256
        %v4956 = vunpack.c.l.b16 %v4257
        %v4957 = vunpack.c.h.b16 %v4257
        %v4958 = vunpack.c.l.b16 %v4258
        %v4959 = vunpack.c.h.b16 %v4258
        %v4960 = vunpack.c.l.b16 %v4259
        %v4961 = vunpack.c.h.b16 %v4259
        %v4962 = vunpack.c.l.b16 %v4260
        %v4963 = vunpack.c.h.b16 %v4260
        %v4964 = vunpack.c.l.b16 %v4261
        %v4965 = vunpack.c.h.b16 %v4261
        %v4966 = vunpack.c.l.b16 %v4262
        %v4967 = vunpack.c.h.b16 %v4262
        %v4968 = vunpack.c.l.b16 %v4263
        %v4969 = vunpack.c.h.b16 %v4263
        %v4970 = vunpack.c.l.b16 %v4264
        %v4971 = vunpack.c.h.b16 %v4264
        %v4972 = vunpack.c.l.b16 %v4265
        %v4973 = vunpack.c.h.b16 %v4265
        %v4974 = vunpack.c.l.b16 %v4266
        %v4975 = vunpack.c.h.b16 %v4266
        %v4976 = vunpack.c.l.b16 %v4267
        %v4977 = vunpack.c.h.b16 %v4267
        %v4978 = vunpack.c.l.b16 %v4268
        %v4979 = vunpack.c.h.b16 %v4268
        %v4980 = vunpack.c.l.b16 %v4269
        %v4981 = vunpack.c.h.b16 %v4269
        %v4982 = vunpack.c.l.b16 %v4270
        %v4983 = vunpack.c.h.b16 %v4270
        %v4984 = vunpack.c.l.b16 %v4271
        %v4985 = vunpack.c.h.b16 %v4271
        %v4986 = vunpack.c.l.b16 %v4272
        %v4987 = vunpack.c.h.b16 %v4272
        %v4988 = vunpack.c.l.b16 %v4273
        %v4989 = vunpack.c.h.b16 %v4273
        %v4990 = vunpack.c.l.b16 %v4274
        %v4991 = vunpack.c.h.b16 %v4274
        %v4992 = vunpack.c.l.b16 %v4275
        %v4993 = vunpack.c.h.b16 %v4275
        %v4994 = vunpack.c.l.b16 %v4276
        %v4995 = vunpack.c.h.b16 %v4276
        %v4996 = vunpack.c.l.b16 %v4277
        %v4997 = vunpack.c.h.b16 %v4277
        %v4998 = vunpack.c.l.b16 %v4278
        %v4999 = vunpack.c.h.b16 %v4278
        %v5000 = vunpack.c.l.b16 %v4279
        %v5001 = vunpack.c.h.b16 %v4279
        %v5002 = vunpack.c.l.b16 %v4280
        %v5003 = vunpack.c.h.b16 %v4280
        %v5004 = vunpack.c.l.b16 %v4281
        %v5005 = vunpack.c.h.b16 %v4281
        %v5006 = vunpack.c.l.b16 %v4282
        %v5007 = vunpack.c.h.b16 %v4282
        %v5008 = vunpack.c.l.b16 %v4283
        %v5009 = vunpack.c.h.b16 %v4283
        %v5010 = vunpack.c.l.b16 %v4284
        %v5011 = vunpack.c.h.b16 %v4284
        %v5012 = vunpack.c.l.b16 %v4285
        %v5013 = vunpack.c.h.b16 %v4285
        %v5014 = vunpack.c.l.b16 %v4286
        %v5015 = vunpack.c.h.b16 %v4286
        %v5016 = vunpack.c.l.b16 %v4287
        %v5017 = vunpack.c.h.b16 %v4287
        %v5018 = vunpack.c.l.b16 %v4288
        %v5019 = vunpack.c.h.b16 %v4288
        %v5020 = vunpack.c.l.b16 %v4289
        %v5021 = vunpack.c.h.b16 %v4289
        %v5022 = vunpack.c.l.b16 %v4290
        %v5023 = vunpack.c.h.b16 %v4290
        %v5024 = vunpack.c.l.b16 %v4291
        %v5025 = vunpack.c.h.b16 %v4291
        %v5026 = vunpack.c.l.b16 %v4292
        %v5027 = vunpack.c.h.b16 %v4292
        %v5028 = vunpack.c.l.b16 %v4293
        %v5029 = vunpack.c.h.b16 %v4293
        %v5030 = vunpack.c.l.b16 %v4294
        %v5031 = vunpack.c.h.b16 %v4294
        %v5032 = vunpack.c.l.b16 %v4295
        %v5033 = vunpack.c.h.b16 %v4295
        %v5034 = vunpack.c.l.b16 %v4296
        %v5035 = vunpack.c.h.b16 %v4296
        %v5036 = vunpack.c.l.b16 %v4297
        %v5037 = vunpack.c.h.b16 %v4297
        %v5038 = vunpack.c.l.b16 %v4298
        %v5039 = vunpack.c.h.b16 %v4298
        %v5040 = vunpack.c.l.b16 %v4299
        %v5041 = vunpack.c.h.b16 %v4299
        %v5042 = vunpack.c.l.b16 %v4300
        %v5043 = vunpack.c.h.b16 %v4300
        %v5044 = vunpack.c.l.b16 %v4301
        %v5045 = vunpack.c.h.b16 %v4301
        %v5046 = vunpack.c.l.b16 %v4302
        %v5047 = vunpack.c.h.b16 %v4302
        %v5048 = vunpack.c.l.b16 %v4303
        %v5049 = vunpack.c.h.b16 %v4303
        %v5050 = vunpack.c.l.b16 %v4304
        %v5051 = vunpack.c.h.b16 %v4304
        %v5052 = vunpack.c.l.b16 %v4305
        %v5053 = vunpack.c.h.b16 %v4305
        %v5054 = vunpack.c.l.b16 %v4306
        %v5055 = vunpack.c.h.b16 %v4306
        %v5056 = vunpack.c.l.b16 %v4307
        %v5057 = vunpack.c.h.b16 %v4307
        %v5058 = vunpack.c.l.b16 %v4308
        %v5059 = vunpack.c.h.b16 %v4308
        %v5060 = vunpack.c.l.b16 %v4309
        %v5061 = vunpack.c.h.b16 %v4309
        %v5062 = vunpack.c.l.b16 %v4310
        %v5063 = vunpack.c.h.b16 %v4310
        %v5064 = vunpack.c.l.b16 %v4311
        %v5065 = vunpack.c.h.b16 %v4311
        %v5066 = vunpack.c.l.b16 %v4312
        %v5067 = vunpack.c.h.b16 %v4312
        %v5068 = vunpack.c.l.b16 %v4313
        %v5069 = vunpack.c.h.b16 %v4313
        %v5070 = vunpack.c.l.b16 %v4314
        %v5071 = vunpack.c.h.b16 %v4314
        %v5072 = vunpack.c.l.b16 %v4315
        %v5073 = vunpack.c.h.b16 %v4315
        %v5074 = vunpack.c.l.b16 %v4316
        %v5075 = vunpack.c.h.b16 %v4316
        %v5076 = vunpack.c.l.b16 %v4317
        %v5077 = vunpack.c.h.b16 %v4317
        %v5078 = vunpack.c.l.b16 %v4318
        %v5079 = vunpack.c.h.b16 %v4318
        %v5080 = vunpack.c.l.b16 %v4319
        %v5081 = vunpack.c.h.b16 %v4319
        %v5082 = vunpack.c.l.b16 %v4320
        %v5083 = vunpack.c.h.b16 %v4320
        %v5084 = vunpack.c.l.b16 %v4321
        %v5085 = vunpack.c.h.b16 %v4321
        %v5086 = vunpack.c.l.b16 %v4322
        %v5087 = vunpack.c.h.b16 %v4322
        %v5088 = vunpack.c.l.b16 %v4323
        %v5089 = vunpack.c.h.b16 %v4323
        %v5090 = vunpack.c.l.b16 %v4324
        %v5091 = vunpack.c.h.b16 %v4324
        %v5092 = vunpack.c.l.b16 %v4325
        %v5093 = vunpack.c.h.b16 %v4325
        %v5094 = vunpack.c.l.b16 %v4326
        %v5095 = vunpack.c.h.b16 %v4326
        %v5096 = vpack.c.b16 %v4592, %v4584
        %v5097 = vpack.c.b16 %v4593, %v4585
        %v5098 = vpack.c.b16 %v4594, %v4586
        %v5099 = vpack.c.b16 %v4595, %v4587
        %v5100 = vpack.c.b16 %v4596, %v4588
        %v5101 = vpack.c.b16 %v4597, %v4589
        %v5102 = vpack.c.b16 %v4598, %v4590
        %v5103 = vpack.c.b16 %v4599, %v4591
        %v5104 = vpack.c.b16 %v4608, %v4600
        %v5105 = vpack.c.b16 %v4609, %v4601
        %v5106 = vpack.c.b16 %v4610, %v4602
        %v5107 = vpack.c.b16 %v4611, %v4603
        %v5108 = vpack.c.b16 %v4612, %v4604
        %v5109 = vpack.c.b16 %v4613, %v4605
        %v5110 = vpack.c.b16 %v4614, %v4606
        %v5111 = vpack.c.b16 %v4615, %v4607
        %v5112 = vpack.c.b16 %v4624, %v4616
        %v5113 = vpack.c.b16 %v4625, %v4617
        %v5114 = vpack.c.b16 %v4626, %v4618
        %v5115 = vpack.c.b16 %v4627, %v4619
        %v5116 = vpack.c.b16 %v4628, %v4620
        %v5117 = vpack.c.b16 %v4629, %v4621
        %v5118 = vpack.c.b16 %v4630, %v4622
        %v5119 = vpack.c.b16 %v4631, %v4623
        %v5120 = vpack.c.b16 %v4640, %v4632
        %v5121 = vpack.c.b16 %v4641, %v4633
        %v5122 = vpack.c.b16 %v4642, %v4634
        %v5123 = vpack.c.b16 %v4643, %v4635
        %v5124 = vpack.c.b16 %v4644, %v4636
        %v5125 = vpack.c.b16 %v4645, %v4637
        %v5126 = vpack.c.b16 %v4646, %v4638
        %v5127 = vpack.c.b16 %v4647, %v4639
        %v5128 = vpack.c.b16 %v4656, %v4648
        %v5129 = vpack.c.b16 %v4657, %v4649
        %v5130 = vpack.c.b16 %v4658, %v4650
        %v5131 = vpack.c.b16 %v4659, %v4651
        %v5132 = vpack.c.b16 %v4660, %v4652
        %v5133 = vpack.c.b16 %v4661, %v4653
        %v5134 = vpack.c.b16 %v4662, %v4654
        %v5135 = vpack.c.b16 %v4663, %v4655
        %v5136 = vpack.c.b16 %v4672, %v4664
        %v5137 = vpack.c.b16 %v4673, %v4665
        %v5138 = vpack.c.b16 %v4674, %v4666
        %v5139 = vpack.c.b16 %v4675, %v4667
        %v5140 = vpack.c.b16 %v4676, %v4668
        %v5141 = vpack.c.b16 %v4677, %v4669
        %v5142 = vpack.c.b16 %v4678, %v4670
        %v5143 = vpack.c.b16 %v4679, %v4671
        %v5144 = vpack.c.b16 %v4688, %v4680
        %v5145 = vpack.c.b16 %v4689, %v4681
        %v5146 = vpack.c.b16 %v4690, %v4682
        %v5147 = vpack.c.b16 %v4691, %v4683
        %v5148 = vpack.c.b16 %v4692, %v4684
        %v5149 = vpack.c.b16 %v4693, %v4685
        %v5150 = vpack.c.b16 %v4694, %v4686
        %v5151 = vpack.c.b16 %v4695, %v4687
        %v5152 = vpack.c.b16 %v4704, %v4696
        %v5153 = vpack.c.b16 %v4705, %v4697
        %v5154 = vpack.c.b16 %v4706, %v4698
        %v5155 = vpack.c.b16 %v4707, %v4699
        %v5156 = vpack.c.b16 %v4708, %v4700
        %v5157 = vpack.c.b16 %v4709, %v4701
        %v5158 = vpack.c.b16 %v4710, %v4702
        %v5159 = vpack.c.b16 %v4711, %v4703
        %v5160 = vpack.c.b16 %v4720, %v4712
        %v5161 = vpack.c.b16 %v4721, %v4713
        %v5162 = vpack.c.b16 %v4722, %v4714
        %v5163 = vpack.c.b16 %v4723, %v4715
        %v5164 = vpack.c.b16 %v4724, %v4716
        %v5165 = vpack.c.b16 %v4725, %v4717
        %v5166 = vpack.c.b16 %v4726, %v4718
        %v5167 = vpack.c.b16 %v4727, %v4719
        %v5168 = vpack.c.b16 %v4736, %v4728
        %v5169 = vpack.c.b16 %v4737, %v4729
        %v5170 = vpack.c.b16 %v4738, %v4730
        %v5171 = vpack.c.b16 %v4739, %v4731
        %v5172 = vpack.c.b16 %v4740, %v4732
        %v5173 = vpack.c.b16 %v4741, %v4733
        %v5174 = vpack.c.b16 %v4742, %v4734
        %v5175 = vpack.c.b16 %v4743, %v4735
        %v5176 = vpack.c.b16 %v4752, %v4744
        %v5177 = vpack.c.b16 %v4753, %v4745
        %v5178 = vpack.c.b16 %v4754, %v4746
        %v5179 = vpack.c.b16 %v4755, %v4747
        %v5180 = vpack.c.b16 %v4756, %v4748
        %v5181 = vpack.c.b16 %v4757, %v4749
        %v5182 = vpack.c.b16 %v4758, %v4750
        %v5183 = vpack.c.b16 %v4759, %v4751
        %v5184 = vpack.c.b16 %v4768, %v4760
        %v5185 = vpack.c.b16 %v4769, %v4761
        %v5186 = vpack.c.b16 %v4770, %v4762
        %v5187 = vpack.c.b16 %v4771, %v4763
        %v5188 = vpack.c.b16 %v4772, %v4764
        %v5189 = vpack.c.b16 %v4773, %v4765
        %v5190 = vpack.c.b16 %v4774, %v4766
        %v5191 = vpack.c.b16 %v4775, %v4767
        %v5192 = vpack.c.b16 %v4784, %v4776
        %v5193 = vpack.c.b16 %v4785, %v4777
        %v5194 = vpack.c.b16 %v4786, %v4778
        %v5195 = vpack.c.b16 %v4787, %v4779
        %v5196 = vpack.c.b16 %v4788, %v4780
        %v5197 = vpack.c.b16 %v4789, %v4781
        %v5198 = vpack.c.b16 %v4790, %v4782
        %v5199 = vpack.c.b16 %v4791, %v4783
        %v5200 = vpack.c.b16 %v4800, %v4792
        %v5201 = vpack.c.b16 %v4801, %v4793
        %v5202 = vpack.c.b16 %v4802, %v4794
        %v5203 = vpack.c.b16 %v4803, %v4795
        %v5204 = vpack.c.b16 %v4804, %v4796
        %v5205 = vpack.c.b16 %v4805, %v4797
        %v5206 = vpack.c.b16 %v4806, %v4798
        %v5207 = vpack.c.b16 %v4807, %v4799
        %v5208 = vpack.c.b16 %v4816, %v4808
        %v5209 = vpack.c.b16 %v4817, %v4809
        %v5210 = vpack.c.b16 %v4818, %v4810
        %v5211 = vpack.c.b16 %v4819, %v4811
        %v5212 = vpack.c.b16 %v4820, %v4812
        %v5213 = vpack.c.b16 %v4821, %v4813
        %v5214 = vpack.c.b16 %v4822, %v4814
        %v5215 = vpack.c.b16 %v4823, %v4815
        %v5216 = vpack.c.b16 %v4832, %v4824
        %v5217 = vpack.c.b16 %v4833, %v4825
        %v5218 = vpack.c.b16 %v4834, %v4826
        %v5219 = vpack.c.b16 %v4835, %v4827
        %v5220 = vpack.c.b16 %v4836, %v4828
        %v5221 = vpack.c.b16 %v4837, %v4829
        %v5222 = vpack.c.b16 %v4838, %v4830
        %v5223 = vpack.c.b16 %v4839, %v4831
        %v5224 = vpack.c.b16 %v4848, %v4840
        %v5225 = vpack.c.b16 %v4849, %v4841
        %v5226 = vpack.c.b16 %v4850, %v4842
        %v5227 = vpack.c.b16 %v4851, %v4843
        %v5228 = vpack.c.b16 %v4852, %v4844
        %v5229 = vpack.c.b16 %v4853, %v4845
        %v5230 = vpack.c.b16 %v4854, %v4846
        %v5231 = vpack.c.b16 %v4855, %v4847
        %v5232 = vpack.c.b16 %v4864, %v4856
        %v5233 = vpack.c.b16 %v4865, %v4857
        %v5234 = vpack.c.b16 %v4866, %v4858
        %v5235 = vpack.c.b16 %v4867, %v4859
        %v5236 = vpack.c.b16 %v4868, %v4860
        %v5237 = vpack.c.b16 %v4869, %v4861
        %v5238 = vpack.c.b16 %v4870, %v4862
        %v5239 = vpack.c.b16 %v4871, %v4863
        %v5240 = vpack.c.b16 %v4880, %v4872
        %v5241 = vpack.c.b16 %v4881, %v4873
        %v5242 = vpack.c.b16 %v4882, %v4874
        %v5243 = vpack.c.b16 %v4883, %v4875
        %v5244 = vpack.c.b16 %v4884, %v4876
        %v5245 = vpack.c.b16 %v4885, %v4877
        %v5246 = vpack.c.b16 %v4886, %v4878
        %v5247 = vpack.c.b16 %v4887, %v4879
        %v5248 = vpack.c.b16 %v4896, %v4888
        %v5249 = vpack.c.b16 %v4897, %v4889
        %v5250 = vpack.c.b16 %v4898, %v4890
        %v5251 = vpack.c.b16 %v4899, %v4891
        %v5252 = vpack.c.b16 %v4900, %v4892
        %v5253 = vpack.c.b16 %v4901, %v4893
        %v5254 = vpack.c.b16 %v4902, %v4894
        %v5255 = vpack.c.b16 %v4903, %v4895
        %v5256 = vpack.c.b16 %v4912, %v4904
        %v5257 = vpack.c.b16 %v4913, %v4905
        %v5258 = vpack.c.b16 %v4914, %v4906
        %v5259 = vpack.c.b16 %v4915, %v4907
        %v5260 = vpack.c.b16 %v4916, %v4908
        %v5261 = vpack.c.b16 %v4917, %v4909
        %v5262 = vpack.c.b16 %v4918, %v4910
        %v5263 = vpack.c.b16 %v4919, %v4911
        %v5264 = vpack.c.b16 %v4928, %v4920
        %v5265 = vpack.c.b16 %v4929, %v4921
        %v5266 = vpack.c.b16 %v4930, %v4922
        %v5267 = vpack.c.b16 %v4931, %v4923
        %v5268 = vpack.c.b16 %v4932, %v4924
        %v5269 = vpack.c.b16 %v4933, %v4925
        %v5270 = vpack.c.b16 %v4934, %v4926
        %v5271 = vpack.c.b16 %v4935, %v4927
        %v5272 = vpack.c.b16 %v4944, %v4936
        %v5273 = vpack.c.b16 %v4945, %v4937
        %v5274 = vpack.c.b16 %v4946, %v4938
        %v5275 = vpack.c.b16 %v4947, %v4939
        %v5276 = vpack.c.b16 %v4948, %v4940
        %v5277 = vpack.c.b16 %v4949, %v4941
        %v5278 = vpack.c.b16 %v4950, %v4942
        %v5279 = vpack.c.b16 %v4951, %v4943
        %v5280 = vpack.c.b16 %v4960, %v4952
        %v5281 = vpack.c.b16 %v4961, %v4953
        %v5282 = vpack.c.b16 %v4962, %v4954
        %v5283 = vpack.c.b16 %v4963, %v4955
        %v5284 = vpack.c.b16 %v4964, %v4956
        %v5285 = vpack.c.b16 %v4965, %v4957
        %v5286 = vpack.c.b16 %v4966, %v4958
        %v5287 = vpack.c.b16 %v4967, %v4959
        %v5288 = vpack.c.b16 %v4976, %v4968
        %v5289 = vpack.c.b16 %v4977, %v4969
        %v5290 = vpack.c.b16 %v4978, %v4970
        %v5291 = vpack.c.b16 %v4979, %v4971
        %v5292 = vpack.c.b16 %v4980, %v4972
        %v5293 = vpack.c.b16 %v4981, %v4973
        %v5294 = vpack.c.b16 %v4982, %v4974
        %v5295 = vpack.c.b16 %v4983, %v4975
        %v5296 = vpack.c.b16 %v4992, %v4984
        %v5297 = vpack.c.b16 %v4993, %v4985
        %v5298 = vpack.c.b16 %v4994, %v4986
        %v5299 = vpack.c.b16 %v4995, %v4987
        %v5300 = vpack.c.b16 %v4996, %v4988
        %v5301 = vpack.c.b16 %v4997, %v4989
        %v5302 = vpack.c.b16 %v4998, %v4990
        %v5303 = vpack.c.b16 %v4999, %v4991
        %v5304 = vpack.c.b16 %v5008, %v5000
        %v5305 = vpack.c.b16 %v5009, %v5001
        %v5306 = vpack.c.b16 %v5010, %v5002
        %v5307 = vpack.c.b16 %v5011, %v5003
        %v5308 = vpack.c.b16 %v5012, %v5004
        %v5309 = vpack.c.b16 %v5013, %v5005
        %v5310 = vpack.c.b16 %v5014, %v5006
        %v5311 = vpack.c.b16 %v5015, %v5007
        %v5312 = vpack.c.b16 %v5024, %v5016
        %v5313 = vpack.c.b16 %v5025, %v5017
        %v5314 = vpack.c.b16 %v5026, %v5018
        %v5315 = vpack.c.b16 %v5027, %v5019
        %v5316 = vpack.c.b16 %v5028, %v5020
        %v5317 = vpack.c.b16 %v5029, %v5021
        %v5318 = vpack.c.b16 %v5030, %v5022
        %v5319 = vpack.c.b16 %v5031, %v5023
        %v5320 = vpack.c.b16 %v5040, %v5032
        %v5321 = vpack.c.b16 %v5041, %v5033
        %v5322 = vpack.c.b16 %v5042, %v5034
        %v5323 = vpack.c.b16 %v5043, %v5035
        %v5324 = vpack.c.b16 %v5044, %v5036
        %v5325 = vpack.c.b16 %v5045, %v5037
        %v5326 = vpack.c.b16 %v5046, %v5038
        %v5327 = vpack.c.b16 %v5047, %v5039
        %v5328 = vpack.c.b16 %v5056, %v5048
        %v5329 = vpack.c.b16 %v5057, %v5049
        %v5330 = vpack.c.b16 %v5058, %v5050
        %v5331 = vpack.c.b16 %v5059, %v5051
        %v5332 = vpack.c.b16 %v5060, %v5052
        %v5333 = vpack.c.b16 %v5061, %v5053
        %v5334 = vpack.c.b16 %v5062, %v5054
        %v5335 = vpack.c.b16 %v5063, %v5055
        %v5336 = vpack.c.b16 %v5072, %v5064
        %v5337 = vpack.c.b16 %v5073, %v5065
        %v5338 = vpack.c.b16 %v5074, %v5066
        %v5339 = vpack.c.b16 %v5075, %v5067
        %v5340 = vpack.c.b16 %v5076, %v5068
        %v5341 = vpack.c.b16 %v5077, %v5069
        %v5342 = vpack.c.b16 %v5078, %v5070
        %v5343 = vpack.c.b16 %v5079, %v5071
        %v5344 = vpack.c.b16 %v5088, %v5080
        %v5345 = vpack.c.b16 %v5089, %v5081
        %v5346 = vpack.c.b16 %v5090, %v5082
        %v5347 = vpack.c.b16 %v5091, %v5083
        %v5348 = vpack.c.b16 %v5092, %v5084
        %v5349 = vpack.c.b16 %v5093, %v5085
        %v5350 = vpack.c.b16 %v5094, %v5086
        %v5351 = vpack.c.b16 %v5095, %v5087
        %v5609 = vlaneseq
        %v5610 = vshrl.u32 %v5609, 7
        %v5611 = vsub.s32 0, %v5610
        %v5612 = vrot.slane %v4327, %v5611
        %v5613 = vlaneseq
        %v5614 = vshrl.u32 %v5613, 7
        %v5615 = vsub.s32 1, %v5614
        %v5616 = vrot.slane %v4327, %v5615
        %v5617 = vlaneseq
        %v5618 = vshrl.u32 %v5617, 7
        %v5619 = vsub.s32 2, %v5618
        %v5620 = vrot.slane %v4327, %v5619
        %v5621 = vlaneseq
        %v5622 = vshrl.u32 %v5621, 7
        %v5623 = vsub.s32 3, %v5622
        %v5624 = vrot.slane %v4327, %v5623
        %v5625 = vlaneseq
        %v5626 = vshrl.u32 %v5625, 7
        %v5627 = vsub.s32 4, %v5626
        %v5628 = vrot.slane %v4327, %v5627
        %v5629 = vlaneseq
        %v5630 = vshrl.u32 %v5629, 7
        %v5631 = vsub.s32 5, %v5630
        %v5632 = vrot.slane %v4327, %v5631
        %v5633 = vlaneseq
        %v5634 = vshrl.u32 %v5633, 7
        %v5635 = vsub.s32 6, %v5634
        %v5636 = vrot.slane %v4327, %v5635
        %v5637 = vlaneseq
        %v5638 = vshrl.u32 %v5637, 7
        %v5639 = vsub.s32 7, %v5638
        %v5640 = vrot.slane %v4327, %v5639
        %5649 = vmatprep.subr.bf16.mxu0 %v5097
        %5650 = vmatpush1.bf16.msra.mxu0 %v5096
        %5651 = vmatprep.subr.bf16.mxu0 %v5105
        %5652 = vmatpush1.bf16.msra.mxu0 %v5104
        %5653 = vmatprep.subr.bf16.mxu0 %v5113
        %5654 = vmatpush1.bf16.msra.mxu0 %v5112
        %5655 = vmatprep.subr.bf16.mxu0 %v5121
        %5656 = vmatpush1.bf16.msra.mxu0 %v5120
        %5657 = vmatprep.subr.bf16.mxu0 %v5129
        %5658 = vmatpush1.bf16.msra.mxu0 %v5128
        %5659 = vmatprep.subr.bf16.mxu0 %v5137
        %5660 = vmatpush1.bf16.msra.mxu0 %v5136
        %5661 = vmatprep.subr.bf16.mxu0 %v5145
        %5662 = vmatpush1.bf16.msra.mxu0 %v5144
        %5663 = vmatprep.subr.bf16.mxu0 %v5153
        %5664 = vmatpush1.bf16.msra.mxu0 %v5152
        %5665 = vmatprep.subr.bf16.mxu0 %v5161
        %5666 = vmatpush1.bf16.msra.mxu0 %v5160
        %5667 = vmatprep.subr.bf16.mxu0 %v5169
        %5668 = vmatpush1.bf16.msra.mxu0 %v5168
        %5669 = vmatprep.subr.bf16.mxu0 %v5177
        %5670 = vmatpush1.bf16.msra.mxu0 %v5176
        %5671 = vmatprep.subr.bf16.mxu0 %v5185
        %5672 = vmatpush1.bf16.msra.mxu0 %v5184
        %5673 = vmatprep.subr.bf16.mxu0 %v5193
        %5674 = vmatpush1.bf16.msra.mxu0 %v5192
        %5675 = vmatprep.subr.bf16.mxu0 %v5201
        %5676 = vmatpush1.bf16.msra.mxu0 %v5200
        %5677 = vmatprep.subr.bf16.mxu0 %v5209
        %5678 = vmatpush1.bf16.msra.mxu0 %v5208
        %5679 = vmatprep.subr.bf16.mxu0 %v5217
        %5680 = vmatpush1.bf16.msra.mxu0 %v5216
        %5681 = vmatprep.mubr.bf16.mxu0 %v4068
        %5682 = vmatmul.mubr.bf16.gmra.mrb[0].mxu0 %v4067
        %v5683 = vpop.f32.mrb[0].mxu0
        %v5684 = vadd.f32 %v5612, %v5683
        %v5685 = vpop.f32.mrb[0].mxu0
        %v5686 = vadd.f32 %v5616, %v5685
        %v5687 = vpop.f32.mrb[0].mxu0
        %v5688 = vpop.f32.mrb[0].mxu0
        %5689 = vdwg.mxu0
        %5690 = vmatprep.subr.bf16.mxu0 %v5225
        %5691 = vmatpush1.bf16.msra.mxu0 %v5224
        %5692 = vmatprep.subr.bf16.mxu0 %v5233
        %5693 = vmatpush1.bf16.msra.mxu0 %v5232
        %5694 = vmatprep.subr.bf16.mxu0 %v5241
        %5695 = vmatpush1.bf16.msra.mxu0 %v5240
        %5696 = vmatprep.subr.bf16.mxu0 %v5249
        %5697 = vmatpush1.bf16.msra.mxu0 %v5248
        %5698 = vmatprep.subr.bf16.mxu0 %v5257
        %5699 = vmatpush1.bf16.msra.mxu0 %v5256
        %5700 = vmatprep.subr.bf16.mxu0 %v5265
        %5701 = vmatpush1.bf16.msra.mxu0 %v5264
        %5702 = vmatprep.subr.bf16.mxu0 %v5273
        %5703 = vmatpush1.bf16.msra.mxu0 %v5272
        %5704 = vmatprep.subr.bf16.mxu0 %v5281
        %5705 = vmatpush1.bf16.msra.mxu0 %v5280
        %5706 = vmatprep.subr.bf16.mxu0 %v5289
        %5707 = vmatpush1.bf16.msra.mxu0 %v5288
        %5708 = vmatprep.subr.bf16.mxu0 %v5297
        %5709 = vmatpush1.bf16.msra.mxu0 %v5296
        %5710 = vmatprep.subr.bf16.mxu0 %v5305
        %5711 = vmatpush1.bf16.msra.mxu0 %v5304
        %5712 = vmatprep.subr.bf16.mxu0 %v5313
        %5713 = vmatpush1.bf16.msra.mxu0 %v5312
        %5714 = vmatprep.subr.bf16.mxu0 %v5321
        %5715 = vmatpush1.bf16.msra.mxu0 %v5320
        %5716 = vmatprep.subr.bf16.mxu0 %v5329
        %5717 = vmatpush1.bf16.msra.mxu0 %v5328
        %5718 = vmatprep.subr.bf16.mxu0 %v5337
        %5719 = vmatpush1.bf16.msra.mxu0 %v5336
        %5720 = vmatprep.subr.bf16.mxu0 %v5345
        %5721 = vmatpush1.bf16.msra.mxu0 %v5344
        %5722 = vmatprep.mubr.bf16.mxu0 %v4070
        %5723 = vmatmul.mubr.bf16.gmra.mrb[0].mxu0 %v4069
        %v5724 = vpop.f32.mrb[0].mxu0
        %v5725 = vadd.f32 %v5684, %v5724
        %v5726 = vpop.f32.mrb[0].mxu0
        %v5727 = vadd.f32 %v5686, %v5726
        %v5728 = vpop.f32.mrb[0].mxu0
        %v5729 = vpop.f32.mrb[0].mxu0
        %5730 = vdwg.mxu0
        %5731 = vmatprep.subr.bf16.mxu0 %v5099
        %5732 = vmatpush1.bf16.msra.mxu0 %v5098
        %5733 = vmatprep.subr.bf16.mxu0 %v5107
        %5734 = vmatpush1.bf16.msra.mxu0 %v5106
        %5735 = vmatprep.subr.bf16.mxu0 %v5115
        %5736 = vmatpush1.bf16.msra.mxu0 %v5114
        %5737 = vmatprep.subr.bf16.mxu0 %v5123
        %5738 = vmatpush1.bf16.msra.mxu0 %v5122
        %5739 = vmatprep.subr.bf16.mxu0 %v5131
        %5740 = vmatpush1.bf16.msra.mxu0 %v5130
        %5741 = vmatprep.subr.bf16.mxu0 %v5139
        %5742 = vmatpush1.bf16.msra.mxu0 %v5138
        %5743 = vmatprep.subr.bf16.mxu0 %v5147
        %5744 = vmatpush1.bf16.msra.mxu0 %v5146
        %5745 = vmatprep.subr.bf16.mxu0 %v5155
        %5746 = vmatpush1.bf16.msra.mxu0 %v5154
        %5747 = vmatprep.subr.bf16.mxu0 %v5163
        %5748 = vmatpush1.bf16.msra.mxu0 %v5162
        %5749 = vmatprep.subr.bf16.mxu0 %v5171
        %5750 = vmatpush1.bf16.msra.mxu0 %v5170
        %5751 = vmatprep.subr.bf16.mxu0 %v5179
        %5752 = vmatpush1.bf16.msra.mxu0 %v5178
        %5753 = vmatprep.subr.bf16.mxu0 %v5187
        %5754 = vmatpush1.bf16.msra.mxu0 %v5186
        %5755 = vmatprep.subr.bf16.mxu0 %v5195
        %5756 = vmatpush1.bf16.msra.mxu0 %v5194
        %5757 = vmatprep.subr.bf16.mxu0 %v5203
        %5758 = vmatpush1.bf16.msra.mxu0 %v5202
        %5759 = vmatprep.subr.bf16.mxu0 %v5211
        %5760 = vmatpush1.bf16.msra.mxu0 %v5210
        %5761 = vmatprep.subr.bf16.mxu0 %v5219
        %5762 = vmatpush1.bf16.msra.mxu0 %v5218
        %5763 = vmatprep.mubr.bf16.mxu0 %v4068
        %5764 = vmatmul.mubr.bf16.gmra.mrb[0].mxu0 %v4067
        %v5765 = vpop.f32.mrb[0].mxu0
        %v5766 = vadd.f32 %v5620, %v5765
        %v5767 = vpop.f32.mrb[0].mxu0
        %v5768 = vadd.f32 %v5624, %v5767
        %v5769 = vpop.f32.mrb[0].mxu0
        %v5770 = vpop.f32.mrb[0].mxu0
        %5771 = vdwg.mxu0
        %5772 = vmatprep.subr.bf16.mxu0 %v5227
        %5773 = vmatpush1.bf16.msra.mxu0 %v5226
        %5774 = vmatprep.subr.bf16.mxu0 %v5235
        %5775 = vmatpush1.bf16.msra.mxu0 %v5234
        %5776 = vmatprep.subr.bf16.mxu0 %v5243
        %5777 = vmatpush1.bf16.msra.mxu0 %v5242
        %5778 = vmatprep.subr.bf16.mxu0 %v5251
        %5779 = vmatpush1.bf16.msra.mxu0 %v5250
        %5780 = vmatprep.subr.bf16.mxu0 %v5259
        %5781 = vmatpush1.bf16.msra.mxu0 %v5258
        %5782 = vmatprep.subr.bf16.mxu0 %v5267
        %5783 = vmatpush1.bf16.msra.mxu0 %v5266
        %5784 = vmatprep.subr.bf16.mxu0 %v5275
        %5785 = vmatpush1.bf16.msra.mxu0 %v5274
        %5786 = vmatprep.subr.bf16.mxu0 %v5283
        %5787 = vmatpush1.bf16.msra.mxu0 %v5282
        %5788 = vmatprep.subr.bf16.mxu0 %v5291
        %5789 = vmatpush1.bf16.msra.mxu0 %v5290
        %5790 = vmatprep.subr.bf16.mxu0 %v5299
        %5791 = vmatpush1.bf16.msra.mxu0 %v5298
        %5792 = vmatprep.subr.bf16.mxu0 %v5307
        %5793 = vmatpush1.bf16.msra.mxu0 %v5306
        %5794 = vmatprep.subr.bf16.mxu0 %v5315
        %5795 = vmatpush1.bf16.msra.mxu0 %v5314
        %5796 = vmatprep.subr.bf16.mxu0 %v5323
        %5797 = vmatpush1.bf16.msra.mxu0 %v5322
        %5798 = vmatprep.subr.bf16.mxu0 %v5331
        %5799 = vmatpush1.bf16.msra.mxu0 %v5330
        %5800 = vmatprep.subr.bf16.mxu0 %v5339
        %5801 = vmatpush1.bf16.msra.mxu0 %v5338
        %5802 = vmatprep.subr.bf16.mxu0 %v5347
        %5803 = vmatpush1.bf16.msra.mxu0 %v5346
        %5804 = vmatprep.mubr.bf16.mxu0 %v4070
        %5805 = vmatmul.mubr.bf16.gmra.mrb[0].mxu0 %v4069
        %v5806 = vpop.f32.mrb[0].mxu0
        %v5807 = vadd.f32 %v5766, %v5806
        %v5808 = vpop.f32.mrb[0].mxu0
        %v5809 = vadd.f32 %v5768, %v5808
        %v5810 = vpop.f32.mrb[0].mxu0
        %v5811 = vpop.f32.mrb[0].mxu0
        %5812 = vdwg.mxu0
        %5813 = vmatprep.subr.bf16.mxu0 %v5101
        %5814 = vmatpush1.bf16.msra.mxu0 %v5100
        %5815 = vmatprep.subr.bf16.mxu0 %v5109
        %5816 = vmatpush1.bf16.msra.mxu0 %v5108
        %5817 = vmatprep.subr.bf16.mxu0 %v5117
        %5818 = vmatpush1.bf16.msra.mxu0 %v5116
        %5819 = vmatprep.subr.bf16.mxu0 %v5125
        %5820 = vmatpush1.bf16.msra.mxu0 %v5124
        %5821 = vmatprep.subr.bf16.mxu0 %v5133
        %5822 = vmatpush1.bf16.msra.mxu0 %v5132
        %5823 = vmatprep.subr.bf16.mxu0 %v5141
        %5824 = vmatpush1.bf16.msra.mxu0 %v5140
        %5825 = vmatprep.subr.bf16.mxu0 %v5149
        %5826 = vmatpush1.bf16.msra.mxu0 %v5148
        %5827 = vmatprep.subr.bf16.mxu0 %v5157
        %5828 = vmatpush1.bf16.msra.mxu0 %v5156
        %5829 = vmatprep.subr.bf16.mxu0 %v5165
        %5830 = vmatpush1.bf16.msra.mxu0 %v5164
        %5831 = vmatprep.subr.bf16.mxu0 %v5173
        %5832 = vmatpush1.bf16.msra.mxu0 %v5172
        %5833 = vmatprep.subr.bf16.mxu0 %v5181
        %5834 = vmatpush1.bf16.msra.mxu0 %v5180
        %5835 = vmatprep.subr.bf16.mxu0 %v5189
        %5836 = vmatpush1.bf16.msra.mxu0 %v5188
        %5837 = vmatprep.subr.bf16.mxu0 %v5197
        %5838 = vmatpush1.bf16.msra.mxu0 %v5196
        %5839 = vmatprep.subr.bf16.mxu0 %v5205
        %5840 = vmatpush1.bf16.msra.mxu0 %v5204
        %5841 = vmatprep.subr.bf16.mxu0 %v5213
        %5842 = vmatpush1.bf16.msra.mxu0 %v5212
        %5843 = vmatprep.subr.bf16.mxu0 %v5221
        %5844 = vmatpush1.bf16.msra.mxu0 %v5220
        %5845 = vmatprep.mubr.bf16.mxu0 %v4068
        %5846 = vmatmul.mubr.bf16.gmra.mrb[0].mxu0 %v4067
        %v5847 = vpop.f32.mrb[0].mxu0
        %v5848 = vadd.f32 %v5628, %v5847
        %v5849 = vpop.f32.mrb[0].mxu0
        %v5850 = vadd.f32 %v5632, %v5849
        %v5851 = vpop.f32.mrb[0].mxu0
        %v5852 = vpop.f32.mrb[0].mxu0
        %5853 = vdwg.mxu0
        %5854 = vmatprep.subr.bf16.mxu0 %v5229
        %5855 = vmatpush1.bf16.msra.mxu0 %v5228
        %5856 = vmatprep.subr.bf16.mxu0 %v5237
        %5857 = vmatpush1.bf16.msra.mxu0 %v5236
        %5858 = vmatprep.subr.bf16.mxu0 %v5245
        %5859 = vmatpush1.bf16.msra.mxu0 %v5244
        %5860 = vmatprep.subr.bf16.mxu0 %v5253
        %5861 = vmatpush1.bf16.msra.mxu0 %v5252
        %5862 = vmatprep.subr.bf16.mxu0 %v5261
        %5863 = vmatpush1.bf16.msra.mxu0 %v5260
        %5864 = vmatprep.subr.bf16.mxu0 %v5269
        %5865 = vmatpush1.bf16.msra.mxu0 %v5268
        %5866 = vmatprep.subr.bf16.mxu0 %v5277
        %5867 = vmatpush1.bf16.msra.mxu0 %v5276
        %5868 = vmatprep.subr.bf16.mxu0 %v5285
        %5869 = vmatpush1.bf16.msra.mxu0 %v5284
        %5870 = vmatprep.subr.bf16.mxu0 %v5293
        %5871 = vmatpush1.bf16.msra.mxu0 %v5292
        %5872 = vmatprep.subr.bf16.mxu0 %v5301
        %5873 = vmatpush1.bf16.msra.mxu0 %v5300
        %5874 = vmatprep.subr.bf16.mxu0 %v5309
        %5875 = vmatpush1.bf16.msra.mxu0 %v5308
        %5876 = vmatprep.subr.bf16.mxu0 %v5317
        %5877 = vmatpush1.bf16.msra.mxu0 %v5316
        %5878 = vmatprep.subr.bf16.mxu0 %v5325
        %5879 = vmatpush1.bf16.msra.mxu0 %v5324
        %5880 = vmatprep.subr.bf16.mxu0 %v5333
        %5881 = vmatpush1.bf16.msra.mxu0 %v5332
        %5882 = vmatprep.subr.bf16.mxu0 %v5341
        %5883 = vmatpush1.bf16.msra.mxu0 %v5340
        %5884 = vmatprep.subr.bf16.mxu0 %v5349
        %5885 = vmatpush1.bf16.msra.mxu0 %v5348
        %5886 = vmatprep.mubr.bf16.mxu0 %v4070
        %5887 = vmatmul.mubr.bf16.gmra.mrb[0].mxu0 %v4069
        %v5888 = vpop.f32.mrb[0].mxu0
        %v5889 = vadd.f32 %v5848, %v5888
        %v5890 = vpop.f32.mrb[0].mxu0
        %v5891 = vadd.f32 %v5850, %v5890
        %v5892 = vpop.f32.mrb[0].mxu0
        %v5893 = vpop.f32.mrb[0].mxu0
        %5894 = vdwg.mxu0
        %5895 = vmatprep.subr.bf16.mxu0 %v5103
        %5896 = vmatpush1.bf16.msra.mxu0 %v5102
        %5897 = vmatprep.subr.bf16.mxu0 %v5111
        %5898 = vmatpush1.bf16.msra.mxu0 %v5110
        %5899 = vmatprep.subr.bf16.mxu0 %v5119
        %5900 = vmatpush1.bf16.msra.mxu0 %v5118
        %5901 = vmatprep.subr.bf16.mxu0 %v5127
        %5902 = vmatpush1.bf16.msra.mxu0 %v5126
        %5903 = vmatprep.subr.bf16.mxu0 %v5135
        %5904 = vmatpush1.bf16.msra.mxu0 %v5134
        %5905 = vmatprep.subr.bf16.mxu0 %v5143
        %5906 = vmatpush1.bf16.msra.mxu0 %v5142
        %5907 = vmatprep.subr.bf16.mxu0 %v5151
        %5908 = vmatpush1.bf16.msra.mxu0 %v5150
        %5909 = vmatprep.subr.bf16.mxu0 %v5159
        %5910 = vmatpush1.bf16.msra.mxu0 %v5158
        %5911 = vmatprep.subr.bf16.mxu0 %v5167
        %5912 = vmatpush1.bf16.msra.mxu0 %v5166
        %5913 = vmatprep.subr.bf16.mxu0 %v5175
        %5914 = vmatpush1.bf16.msra.mxu0 %v5174
        %5915 = vmatprep.subr.bf16.mxu0 %v5183
        %5916 = vmatpush1.bf16.msra.mxu0 %v5182
        %5917 = vmatprep.subr.bf16.mxu0 %v5191
        %5918 = vmatpush1.bf16.msra.mxu0 %v5190
        %5919 = vmatprep.subr.bf16.mxu0 %v5199
        %5920 = vmatpush1.bf16.msra.mxu0 %v5198
        %5921 = vmatprep.subr.bf16.mxu0 %v5207
        %5922 = vmatpush1.bf16.msra.mxu0 %v5206
        %5923 = vmatprep.subr.bf16.mxu0 %v5215
        %5924 = vmatpush1.bf16.msra.mxu0 %v5214
        %5925 = vmatprep.subr.bf16.mxu0 %v5223
        %5926 = vmatpush1.bf16.msra.mxu0 %v5222
        %5927 = vmatprep.mubr.bf16.mxu0 %v4068
        %5928 = vmatmul.mubr.bf16.gmra.mrb[0].mxu0 %v4067
        %v5929 = vpop.f32.mrb[0].mxu0
        %v5930 = vadd.f32 %v5636, %v5929
        %v5931 = vpop.f32.mrb[0].mxu0
        %v5932 = vadd.f32 %v5640, %v5931
        %v5933 = vpop.f32.mrb[0].mxu0
        %v5934 = vpop.f32.mrb[0].mxu0
        %5935 = vdwg.mxu0
        %5936 = vmatprep.subr.bf16.mxu0 %v5231
        %5937 = vmatpush1.bf16.msra.mxu0 %v5230
        %5938 = vmatprep.subr.bf16.mxu0 %v5239
        %5939 = vmatpush1.bf16.msra.mxu0 %v5238
        %5940 = vmatprep.subr.bf16.mxu0 %v5247
        %5941 = vmatpush1.bf16.msra.mxu0 %v5246
        %5942 = vmatprep.subr.bf16.mxu0 %v5255
        %5943 = vmatpush1.bf16.msra.mxu0 %v5254
        %5944 = vmatprep.subr.bf16.mxu0 %v5263
        %5945 = vmatpush1.bf16.msra.mxu0 %v5262
        %5946 = vmatprep.subr.bf16.mxu0 %v5271
        %5947 = vmatpush1.bf16.msra.mxu0 %v5270
        %5948 = vmatprep.subr.bf16.mxu0 %v5279
        %5949 = vmatpush1.bf16.msra.mxu0 %v5278
        %5950 = vmatprep.subr.bf16.mxu0 %v5287
        %5951 = vmatpush1.bf16.msra.mxu0 %v5286
        %5952 = vmatprep.subr.bf16.mxu0 %v5295
        %5953 = vmatpush1.bf16.msra.mxu0 %v5294
        %5954 = vmatprep.subr.bf16.mxu0 %v5303
        %5955 = vmatpush1.bf16.msra.mxu0 %v5302
        %5956 = vmatprep.subr.bf16.mxu0 %v5311
        %5957 = vmatpush1.bf16.msra.mxu0 %v5310
        %5958 = vmatprep.subr.bf16.mxu0 %v5319
        %5959 = vmatpush1.bf16.msra.mxu0 %v5318
        %5960 = vmatprep.subr.bf16.mxu0 %v5327
        %5961 = vmatpush1.bf16.msra.mxu0 %v5326
        %5962 = vmatprep.subr.bf16.mxu0 %v5335
        %5963 = vmatpush1.bf16.msra.mxu0 %v5334
        %5964 = vmatprep.subr.bf16.mxu0 %v5343
        %5965 = vmatpush1.bf16.msra.mxu0 %v5342
        %5966 = vmatprep.subr.bf16.mxu0 %v5351
        %5967 = vmatpush1.bf16.msra.mxu0 %v5350
        %5968 = vmatprep.mubr.bf16.mxu0 %v4070
        %5969 = vmatmul.mubr.bf16.gmra.mrb[0].mxu0 %v4069
        %v5970 = vpop.f32.mrb[0].mxu0
        %v5971 = vadd.f32 %v5930, %v5970
        %v5972 = vpop.f32.mrb[0].mxu0
        %v5973 = vadd.f32 %v5932, %v5972
        %v5974 = vpop.f32.mrb[0].mxu0
        %v5975 = vpop.f32.mrb[0].mxu0
        %5976 = vdwg.mxu0
        %v5977 = vxor.u32 %v5725, 2147483648
        %v5978 = vxor.u32 %v5727, 2147483648
        %v5979 = vxor.u32 %v5807, 2147483648
        %v5980 = vxor.u32 %v5809, 2147483648
        %v5981 = vxor.u32 %v5889, 2147483648
        %v5982 = vxor.u32 %v5891, 2147483648
        %v5983 = vxor.u32 %v5971, 2147483648
        %v5984 = vxor.u32 %v5973, 2147483648
        %v5985 = vmul.f32 %v5977, 1.442695
        %v5986 = vpow.pop %v5985
        %v5987 = vmul.f32 %v5978, 1.442695
        %v5988 = vpow.pop %v5987
        %v5989 = vmul.f32 %v5979, 1.442695
        %v5990 = vpow.pop %v5989
        %v5991 = vmul.f32 %v5980, 1.442695
        %v5992 = vpow.pop %v5991
        %v5993 = vmul.f32 %v5981, 1.442695
        %v5994 = vpow.pop %v5993
        %v5995 = vmul.f32 %v5982, 1.442695
        %v5996 = vpow.pop %v5995
        %v5997 = vmul.f32 %v5983, 1.442695
        %v5998 = vpow.pop %v5997
        %v5999 = vmul.f32 %v5984, 1.442695
        %v6000 = vpow.pop %v5999
        %v6001 = vadd.f32 %v5986, 1.0
        %v6002 = vadd.f32 %v5988, 1.0
        %v6003 = vadd.f32 %v5990, 1.0
        %v6004 = vadd.f32 %v5992, 1.0
        %v6005 = vadd.f32 %v5994, 1.0
        %v6006 = vadd.f32 %v5996, 1.0
        %v6007 = vadd.f32 %v5998, 1.0
        %v6008 = vadd.f32 %v6000, 1.0
        %v6009 = vrcp.pop %v6001
        %v6010 = vmul.f32 1.0, %v6009
        %v6011 = vrcp.pop %v6002
        %v6012 = vmul.f32 1.0, %v6011
        %v6013 = vrcp.pop %v6003
        %v6014 = vmul.f32 1.0, %v6013
        %v6015 = vrcp.pop %v6004
        %v6016 = vmul.f32 1.0, %v6015
        %v6017 = vrcp.pop %v6005
        %v6018 = vmul.f32 1.0, %v6017
        %v6019 = vrcp.pop %v6006
        %v6020 = vmul.f32 1.0, %v6019
        %v6021 = vrcp.pop %v6007
        %v6022 = vmul.f32 1.0, %v6021
        %v6023 = vrcp.pop %v6008
        %v6024 = vmul.f32 1.0, %v6023
        %v6033 = vcombine.low %v6010, %v6012
        %v6034 = vcombine.low %v6014, %v6016
        %v6035 = vcombine.low %v6018, %v6020
        %v6036 = vcombine.low %v6022, %v6024
        %v6038 = vunpack.c.l.s4 1966171168
        %v6039 = vunpack.c.0.s8 %v6038
        %v6040 = vlaneseq
        %v6041 = vshrl.u32 %v6040, 7
        %v6042 = vsub.s32 %v6039, %v6041
        %v6043 = vrot.slane %v6033, %v6042
        %v6045 = vunpack.c.l.s4 1966171168
        %v6046 = vunpack.c.0.s8 %v6045
        %v6047 = vlaneseq
        %v6048 = vshrl.u32 %v6047, 7
        %v6049 = vsub.s32 %v6046, %v6048
        %v6050 = vrot.slane %v6034, %v6049
        %v6052 = vunpack.c.l.s4 1966171168
        %v6053 = vunpack.c.0.s8 %v6052
        %v6054 = vlaneseq
        %v6055 = vshrl.u32 %v6054, 7
        %v6056 = vsub.s32 %v6053, %v6055
        %v6057 = vrot.slane %v6035, %v6056
        %v6059 = vunpack.c.l.s4 1966171168
        %v6060 = vunpack.c.0.s8 %v6059
        %v6061 = vlaneseq
        %v6062 = vshrl.u32 %v6061, 7
        %v6063 = vsub.s32 %v6060, %v6062
        %v6064 = vrot.slane %v6036, %v6063
        %v6065 = vcombine.low %v6043, %v6050
        %v6066 = vcombine.low %v6057, %v6064
        %v6068 = vunpack.c.l.s4 1966171168
        %v6069 = vunpack.c.0.s8 %v6068
        %v6070 = vlaneseq
        %v6071 = vshrl.u32 %v6070, 7
        %v6072 = vsub.s32 %v6069, %v6071
        %v6073 = vrot.slane %v6065, %v6072
        %v6075 = vunpack.c.l.s4 1966171168
        %v6076 = vunpack.c.0.s8 %v6075
        %v6077 = vlaneseq
        %v6078 = vshrl.u32 %v6077, 7
        %v6079 = vsub.s32 %v6076, %v6078
        %v6080 = vrot.slane %v6066, %v6079
        %v6081 = vcombine.low %v6073, %v6080
        %6083 = vst [vmem:[%s730] sm:$0xff] %v6081
        %p6084 = scmp.lt.s32.totalorder %s36, 1
        %s6085 = scalar_select %p6084, %s36, 1
        %s6086 = smul.addr %s6085, 8
        %s6087 = scalar_lea.vmem %s20, %s6086
        %p6088 = scmp.lt.s32.totalorder %s36, 1
        %s6089 = scalar_select %p6088, %s36, 1
        %s6090 = scalar_lea.vmem %s21, %s6089
        // Predicated region
        $region117: #{vae_forward.1} parent=99 // pred_check
          %p6091 = pneg %p484
        $region118: #{vae_forward.1} parent=99 // pred_check_branch
          %6093 = sbr.rel (%p6091) target = $region120
        $region119: #{vae_forward.1} parent=99 // pred_region
          _
        $region120: #{vae_forward.1} parent=99 // pred_fallthru
          _
        // Predicated region
        $region121: #{vae_forward.1} parent=99 // pred_check
          %p6094 = pneg %p510
        $region122: #{vae_forward.1} parent=99 // pred_check_branch
          %6096 = sbr.rel (%p6094) target = $region124
        $region123: #{vae_forward.1} parent=99 // pred_region
          _
        $region124: #{vae_forward.1} parent=99 // pred_fallthru
          _
      $region100: #{vae_forward.1} parent=5 // pred_fallthru
        _
      %p6097 = scmp.le.s32.totalorder 2, %s31
      // Predicated region
      $region125: #{vae_forward.1} parent=5 // pred_check
        %p6098 = pneg %p6097
      $region126: #{vae_forward.1} parent=5 // pred_check_branch
        %6100 = sbr.rel (%p6098) target = $region128
      $region127: #{vae_forward.1} parent=5 // pred_region
        %s6101 = ssub.s32 %s31, 2
        // Predicated region
        $region129: #{vae_forward.1} parent=127 // pred_check
          %p6102 = pneg %p490
        $region130: #{vae_forward.1} parent=127 // pred_check_branch
          %6104 = sbr.rel (%p6102) target = $region132
        $region131: #{vae_forward.1} parent=127 // pred_region
          %p6105 = scmp.lt.s32.totalorder %s37, 1
          %s6106 = scalar_select %p6105, %s37, 1
          %s6107 = smul.addr %s6106, 8
          %s6108 = scalar_lea.vmem %s20, %s6107
        $region132: #{vae_forward.1} parent=127 // pred_fallthru
          _
        // Predicated region
        $region133: #{vae_forward.1} parent=127 // pred_check
          %p6109 = pneg %p516
        $region134: #{vae_forward.1} parent=127 // pred_check_branch
          %6111 = sbr.rel (%p6109) target = $region136
        $region135: #{vae_forward.1} parent=127 // pred_region
          %p6112 = scmp.lt.s32.totalorder %s37, 1
          %s6113 = scalar_select %p6112, %s37, 1
          %s6114 = scalar_lea.vmem %s21, %s6113
        $region136: #{vae_forward.1} parent=127 // pred_fallthru
          _
      $region128: #{vae_forward.1} parent=5 // pred_fallthru
        _
    $region6: #{vae_forward.1} parent=1 // loop_footer
      %s35 = sadd.s32 1, %s31
    $region7: #{vae_forward.1} parent=1 // loop_footer_branch
      %30 = sbr.rel target = $region3
    $region8: #{vae_forward.1} parent=1 // loop_exit
      _
    %6115 = vsyncpa [#allocation3], 1
    %s6116 = scalar_lea.sflag [#allocation3], 1
    %6117 = vsyncpa %s6116, 1
    %6118 = vsyncpa [#allocation5], 1
    %6119 = vsyncpa [#allocation8], 1

</llo_original>
